<compile_context>
chip_gen: v5e
topology: v5e:2x2
jax: 0.10.0
libtpu: 0.0.40
codegen_flags: <defaults>
</compile_context>

<pallas_src>
import jax
import jax.numpy as jnp
from jax import lax
from jax.experimental import pallas as pl
from jax.experimental.pallas import tpu as pltpu

C_IN = 512
C_OUT = 512
H = 7
W = 7
K = 3
WP = 8                 # W padded to a full sublane tile
WPAD = W + K           # 10 padded columns fed to the kernel (left pad 1, right pad 2)
M = H * WP             # 56 rows of the conv result (every H-row = one (8,128) tile)


def _num_cout_blocks():
    """2-way c_out split only on 2-TensorCore (v7x-class) chips, else 1."""
    try:
        kind = jax.devices()[0].device_kind.lower()
        if "v7" in kind:
            return 2
    except Exception:
        pass
    return 1


def make_kernel(shift):
    """Pallas kernel with the static roll direction baked into the row indices."""
    assert shift in (1, -1), "closed-form row mapping only valid for shift = +/-1"
    j0 = (1 - shift) // 2      # w1 column paired with roll by `shift`
    j1 = (1 + shift) // 2      # w1 column paired with roll by `2 * shift`

    def kernel(xp_ref, wf_ref, a_ref, o_ref):
        # xp_ref: (7, 10, 512) bf16  W-padded activation, (H, Wpad, C_in)
        # wf_ref: (1536, C_BLK) bf16 conv-weight block, rows ordered (k, c_in)
        # a_ref:  (2, C_BLK) f32     w1 transposed
        # o_ref:  (56, C_BLK) bf16
        n = o_ref.shape[1]
        xp = xp_ref[...]                                       # resident 72 KB buffer

        # 1-D conv along W as K accumulating MXU matmuls on shifted in-VMEM views.
        t4 = jnp.zeros((M, n), jnp.float32)
        for k in range(K):                                     # static loop
            lhs = xp[:, k:k + WP, :].reshape(M, C_IN)          # (56, 512) bf16
            rhs = wf_ref[k * C_IN:(k + 1) * C_IN, :]           # (512, C_BLK) bf16
            t4 = t4 + jnp.dot(lhs, rhs, preferred_element_type=jnp.float32)

        # Closed-form roll/merge/roll/sum epilogue (f32 on the VPU).
        a0 = a_ref[j0:j0 + 1, :]                               # (1, C_BLK)
        a1 = a_ref[j1:j1 + 1, :]
        for h in range(H):                                     # all slices 8-row aligned
            r0 = ((h - shift) % H) * WP
            r1 = ((h - 2 * shift) % H) * WP
            o_ref[h * WP:(h + 1) * WP, :] = (
                t4[r0:r0 + WP, :] * a0 + t4[r1:r1 + WP, :] * a1
            ).astype(o_ref.dtype)

    return kernel


def prepare_params(w1, w2):
    """One-time weight repack (hoisted out of the per-call path)."""
    # wf rows ordered (k, c_in): wf[k*512 + j, i] = w2[i, j, k]
    wf = jnp.transpose(w2, (2, 1, 0)).reshape(K * C_IN, C_OUT).astype(jnp.bfloat16)
    a = jnp.transpose(w1, (1, 0)).astype(jnp.float32)             # (2, 512)
    return jax.block_until_ready(wf), jax.block_until_ready(a)


def make_forward(shift, n_blocks=None):
    """Returns a jitted forward(x, wf, a) with the static shift baked in."""
    if n_blocks is None:
        n_blocks = _num_cout_blocks()
    c_blk = C_OUT // n_blocks

    bytes_accessed = (H * WPAD * C_IN * 2          # activation (bf16)
                      + K * C_IN * C_OUT * 2       # conv weight (bf16)
                      + 2 * C_OUT * 4              # scales (f32)
                      + M * C_OUT * 2)             # output (bf16)

    grid_call = pl.pallas_call(
        make_kernel(shift),
        out_shape=jax.ShapeDtypeStruct((M, C_OUT), jnp.bfloat16),
        grid=(n_blocks,),
        in_specs=[
            pl.BlockSpec((H, WPAD, C_IN), lambda i: (0, 0, 0)),   # resident activation
            pl.BlockSpec((K * C_IN, c_blk), lambda i: (0, i)),    # weight block
            pl.BlockSpec((2, c_blk), lambda i: (0, i)),           # scale block
        ],
        out_specs=pl.BlockSpec((M, c_blk), lambda i: (0, i)),
        compiler_params=pltpu.CompilerParams(
            dimension_semantics=("parallel",)),
        cost_estimate=pl.CostEstimate(
            flops=2 * M * (K * C_IN) * C_OUT,
            transcendentals=0,
            bytes_accessed=bytes_accessed),
    )

    @jax.jit
    def forward(x, wf, a):
        # Tiny per-call glue: NCHW -> (H, Wpad, C) bf16; no im2col materialization.
        x_hwc = jnp.transpose(x[0], (1, 2, 0)).astype(jnp.bfloat16)   # (7, 7, 512)
        x_pad = jnp.pad(x_hwc, ((0, 0), (1, 2), (0, 0)))              # (7, 10, 512)

        y56 = grid_call(x_pad, wf, a)                                 # (56, 512) bf16
        y = y56.reshape(H, WP, C_OUT)[:, :W, :]                       # drop pad column
        return jnp.transpose(y, (2, 0, 1))[None].astype(jnp.float32)  # (1, 512, 7, 7)

    return forward


def reference_forward(x, w1, w2, shift):
    """Literal jnp translation of the PyTorch forward (for verification only)."""
    t3 = x.reshape(1, 3584, 7, 1)
    t3p = jnp.pad(t3, ((0, 0), (0, 0), (1, 1), (0, 0)))
    cols = jnp.stack([t3p[:, :, k:k + 7, 0] for k in range(3)], axis=2)  # (1,3584,3,7)
    t3u = cols.reshape(1, 512, 7, 3, 7)
    t4 = jnp.einsum('ljnkm,ijk->linm', t3u, w2, precision=lax.Precision.HIGHEST)
    t5 = jnp.einsum('kiml,ij->kimjl', t4, w1, precision=lax.Precision.HIGHEST)
    t6 = jnp.roll(t5, shift, axis=2)
    t6 = t6.reshape(1, 512, 14, 7)
    t6 = jnp.roll(t6, shift, axis=2)
    t6 = t6.reshape(1, 512, 7, 2, 7)
    return jnp.sum(t6, axis=3)


if __name__ == "__main__":
    key = jax.random.PRNGKey(0)
    k1, k2, kx = jax.random.split(key, 3)
    w1 = jax.random.normal(k1, (512, 2), dtype=jnp.float32)        # weights[0]
    w2 = jax.random.normal(k2, (512, 512, 3), dtype=jnp.float32)   # weights[1]
    x = jax.random.normal(kx, (1, 512, 7, 7), dtype=jnp.float32)   # input

    wf, a = prepare_params(w1, w2)

    # The module draws shift_direction in {+1, -1} at init; verify both.
    for shift in (1, -1):
        fwd = make_forward(shift)
        y = jax.block_until_ready(fwd(x, wf, a))
        y_ref = jax.block_until_ready(reference_forward(x, w1, w2, shift))
        assert y.shape == (1, 512, 7, 7), y.shape
        if not jnp.allclose(y, y_ref, rtol=5e-2, atol=2.0):
            max_err = float(jnp.max(jnp.abs(y - y_ref)))
            raise AssertionError(
                f"Pallas kernel mismatch vs reference (shift={shift}), "
                f"max abs err = {max_err}")

    print("KERNEL_OK")
</pallas_src>

<mosaic_0001>
module attributes {stable_mosaic.version = 11 : i64} {
  func.func @kernel(%arg0: i32, %arg1: memref<7x10x512xbf16, #tpu.memory_space<vmem>>, %arg2: memref<1536x512xbf16, #tpu.memory_space<vmem>>, %arg3: memref<2x512xf32, #tpu.memory_space<vmem>>, %arg4: memref<56x512xbf16, #tpu.memory_space<vmem>>) attributes {dimension_semantics = [#tpu.dimension_semantics<parallel>], iteration_bounds = array<i64: 1>, scalar_prefetch = 0 : i64, scratch_operands = 0 : i64, tpu.core_type = #tpu.core_type<tc>, window_params = [{pipeline_mode = #tpu.pipeline_mode<synchronous>, transform_indices = @transform_0, window_bounds = array<i64: 7, 10, 512>}, {transform_indices = @transform_1, window_bounds = array<i64: 1536, 512>}, {transform_indices = @transform_2, window_bounds = array<i64: 2, 512>}, {transform_indices = @transform_3, window_bounds = array<i64: 56, 512>}]} {
    %c0 = arith.constant 0 : index
    %c0_0 = arith.constant 0 : index
    %c0_1 = arith.constant 0 : index
    %0 = vector.load %arg1[%c0, %c0_0, %c0_1] : memref<7x10x512xbf16, #tpu.memory_space<vmem>>, vector<7x10x512xbf16>
    %cst = arith.constant 0.000000e+00 : f32
    %1 = vector.broadcast %cst : f32 to vector<56x512xf32>
    %2 = vector.extract_strided_slice %0 {offsets = [0, 0, 0], sizes = [7, 8, 512], strides = [1, 1, 1]} : vector<7x10x512xbf16> to vector<7x8x512xbf16>
    %3 = vector.shape_cast %2 : vector<7x8x512xbf16> to vector<56x512xbf16>
    %c0_2 = arith.constant 0 : index
    %c0_3 = arith.constant 0 : index
    %4 = vector.load %arg2[%c0_2, %c0_3] : memref<1536x512xbf16, #tpu.memory_space<vmem>>, vector<512x512xbf16>
    %cst_4 = arith.constant dense<0.000000e+00> : vector<56x512xf32>
    %5 = tpu.matmul %3, %4, %cst_4 {dimension_numbers = #tpu.dot_dimension_numbers<[1], [0], [0], [1], [0, 0, 1, 1], [], []>} : vector<56x512xbf16>, vector<512x512xbf16>, vector<56x512xf32> -> vector<56x512xf32>
    %6 = arith.addf %1, %5 : vector<56x512xf32>
    %7 = vector.extract_strided_slice %0 {offsets = [0, 1, 0], sizes = [7, 8, 512], strides = [1, 1, 1]} : vector<7x10x512xbf16> to vector<7x8x512xbf16>
    %8 = vector.shape_cast %7 : vector<7x8x512xbf16> to vector<56x512xbf16>
    %c512 = arith.constant 512 : index
    %c0_5 = arith.constant 0 : index
    %9 = vector.load %arg2[%c512, %c0_5] : memref<1536x512xbf16, #tpu.memory_space<vmem>>, vector<512x512xbf16>
    %cst_6 = arith.constant dense<0.000000e+00> : vector<56x512xf32>
    %10 = tpu.matmul %8, %9, %cst_6 {dimension_numbers = #tpu.dot_dimension_numbers<[1], [0], [0], [1], [0, 0, 1, 1], [], []>} : vector<56x512xbf16>, vector<512x512xbf16>, vector<56x512xf32> -> vector<56x512xf32>
    %11 = arith.addf %6, %10 : vector<56x512xf32>
    %12 = vector.extract_strided_slice %0 {offsets = [0, 2, 0], sizes = [7, 8, 512], strides = [1, 1, 1]} : vector<7x10x512xbf16> to vector<7x8x512xbf16>
    %13 = vector.shape_cast %12 : vector<7x8x512xbf16> to vector<56x512xbf16>
    %c1024 = arith.constant 1024 : index
    %c0_7 = arith.constant 0 : index
    %14 = vector.load %arg2[%c1024, %c0_7] : memref<1536x512xbf16, #tpu.memory_space<vmem>>, vector<512x512xbf16>
    %cst_8 = arith.constant dense<0.000000e+00> : vector<56x512xf32>
    %15 = tpu.matmul %13, %14, %cst_8 {dimension_numbers = #tpu.dot_dimension_numbers<[1], [0], [0], [1], [0, 0, 1, 1], [], []>} : vector<56x512xbf16>, vector<512x512xbf16>, vector<56x512xf32> -> vector<56x512xf32>
    %16 = arith.addf %11, %15 : vector<56x512xf32>
    %c0_9 = arith.constant 0 : index
    %c0_10 = arith.constant 0 : index
    %17 = vector.load %arg3[%c0_9, %c0_10] : memref<2x512xf32, #tpu.memory_space<vmem>>, vector<1x512xf32>
    %c1 = arith.constant 1 : index
    %c0_11 = arith.constant 0 : index
    %18 = vector.load %arg3[%c1, %c0_11] : memref<2x512xf32, #tpu.memory_space<vmem>>, vector<1x512xf32>
    %19 = vector.extract_strided_slice %16 {offsets = [48, 0], sizes = [8, 512], strides = [1, 1]} : vector<56x512xf32> to vector<8x512xf32>
    %20 = vector.broadcast %17 : vector<1x512xf32> to vector<8x512xf32>
    %21 = arith.mulf %19, %20 : vector<8x512xf32>
    %22 = vector.extract_strided_slice %16 {offsets = [40, 0], sizes = [8, 512], strides = [1, 1]} : vector<56x512xf32> to vector<8x512xf32>
    %23 = vector.broadcast %18 : vector<1x512xf32> to vector<8x512xf32>
    %24 = arith.mulf %22, %23 : vector<8x512xf32>
    %25 = arith.addf %21, %24 : vector<8x512xf32>
    %26 = arith.truncf %25 : vector<8x512xf32> to vector<8x512xbf16>
    %c0_12 = arith.constant 0 : index
    %c0_13 = arith.constant 0 : index
    %27 = vector.load %arg4[%c0_12, %c0_13] : memref<56x512xbf16, #tpu.memory_space<vmem>>, vector<8x512xbf16>
    tpu.vector_store %arg4[%c0_12, %c0_13], %26 {strides = array<i32>} : memref<56x512xbf16, #tpu.memory_space<vmem>>, vector<8x512xbf16>,
    %28 = vector.extract_strided_slice %16 {offsets = [0, 0], sizes = [8, 512], strides = [1, 1]} : vector<56x512xf32> to vector<8x512xf32>
    %29 = vector.broadcast %17 : vector<1x512xf32> to vector<8x512xf32>
    %30 = arith.mulf %28, %29 : vector<8x512xf32>
    %31 = vector.extract_strided_slice %16 {offsets = [48, 0], sizes = [8, 512], strides = [1, 1]} : vector<56x512xf32> to vector<8x512xf32>
    %32 = vector.broadcast %18 : vector<1x512xf32> to vector<8x512xf32>
    %33 = arith.mulf %31, %32 : vector<8x512xf32>
    %34 = arith.addf %30, %33 : vector<8x512xf32>
    %35 = arith.truncf %34 : vector<8x512xf32> to vector<8x512xbf16>
    %c8 = arith.constant 8 : index
    %c0_14 = arith.constant 0 : index
    %36 = vector.load %arg4[%c8, %c0_14] : memref<56x512xbf16, #tpu.memory_space<vmem>>, vector<8x512xbf16>
    tpu.vector_store %arg4[%c8, %c0_14], %35 {strides = array<i32>} : memref<56x512xbf16, #tpu.memory_space<vmem>>, vector<8x512xbf16>,
    %37 = vector.extract_strided_slice %16 {offsets = [8, 0], sizes = [8, 512], strides = [1, 1]} : vector<56x512xf32> to vector<8x512xf32>
    %38 = vector.broadcast %17 : vector<1x512xf32> to vector<8x512xf32>
    %39 = arith.mulf %37, %38 : vector<8x512xf32>
    %40 = vector.extract_strided_slice %16 {offsets = [0, 0], sizes = [8, 512], strides = [1, 1]} : vector<56x512xf32> to vector<8x512xf32>
    %41 = vector.broadcast %18 : vector<1x512xf32> to vector<8x512xf32>
    %42 = arith.mulf %40, %41 : vector<8x512xf32>
    %43 = arith.addf %39, %42 : vector<8x512xf32>
    %44 = arith.truncf %43 : vector<8x512xf32> to vector<8x512xbf16>
    %c16 = arith.constant 16 : index
    %c0_15 = arith.constant 0 : index
    %45 = vector.load %arg4[%c16, %c0_15] : memref<56x512xbf16, #tpu.memory_space<vmem>>, vector<8x512xbf16>
    tpu.vector_store %arg4[%c16, %c0_15], %44 {strides = array<i32>} : memref<56x512xbf16, #tpu.memory_space<vmem>>, vector<8x512xbf16>,
    %46 = vector.extract_strided_slice %16 {offsets = [16, 0], sizes = [8, 512], strides = [1, 1]} : vector<56x512xf32> to vector<8x512xf32>
    %47 = vector.broadcast %17 : vector<1x512xf32> to vector<8x512xf32>
    %48 = arith.mulf %46, %47 : vector<8x512xf32>
    %49 = vector.extract_strided_slice %16 {offsets = [8, 0], sizes = [8, 512], strides = [1, 1]} : vector<56x512xf32> to vector<8x512xf32>
    %50 = vector.broadcast %18 : vector<1x512xf32> to vector<8x512xf32>
    %51 = arith.mulf %49, %50 : vector<8x512xf32>
    %52 = arith.addf %48, %51 : vector<8x512xf32>
    %53 = arith.truncf %52 : vector<8x512xf32> to vector<8x512xbf16>
    %c24 = arith.constant 24 : index
    %c0_16 = arith.constant 0 : index
    %54 = vector.load %arg4[%c24, %c0_16] : memref<56x512xbf16, #tpu.memory_space<vmem>>, vector<8x512xbf16>
    tpu.vector_store %arg4[%c24, %c0_16], %53 {strides = array<i32>} : memref<56x512xbf16, #tpu.memory_space<vmem>>, vector<8x512xbf16>,
    %55 = vector.extract_strided_slice %16 {offsets = [24, 0], sizes = [8, 512], strides = [1, 1]} : vector<56x512xf32> to vector<8x512xf32>
    %56 = vector.broadcast %17 : vector<1x512xf32> to vector<8x512xf32>
    %57 = arith.mulf %55, %56 : vector<8x512xf32>
    %58 = vector.extract_strided_slice %16 {offsets = [16, 0], sizes = [8, 512], strides = [1, 1]} : vector<56x512xf32> to vector<8x512xf32>
    %59 = vector.broadcast %18 : vector<1x512xf32> to vector<8x512xf32>
    %60 = arith.mulf %58, %59 : vector<8x512xf32>
    %61 = arith.addf %57, %60 : vector<8x512xf32>
    %62 = arith.truncf %61 : vector<8x512xf32> to vector<8x512xbf16>
    %c32 = arith.constant 32 : index
    %c0_17 = arith.constant 0 : index
    %63 = vector.load %arg4[%c32, %c0_17] : memref<56x512xbf16, #tpu.memory_space<vmem>>, vector<8x512xbf16>
    tpu.vector_store %arg4[%c32, %c0_17], %62 {strides = array<i32>} : memref<56x512xbf16, #tpu.memory_space<vmem>>, vector<8x512xbf16>,
    %64 = vector.extract_strided_slice %16 {offsets = [32, 0], sizes = [8, 512], strides = [1, 1]} : vector<56x512xf32> to vector<8x512xf32>
    %65 = vector.broadcast %17 : vector<1x512xf32> to vector<8x512xf32>
    %66 = arith.mulf %64, %65 : vector<8x512xf32>
    %67 = vector.extract_strided_slice %16 {offsets = [24, 0], sizes = [8, 512], strides = [1, 1]} : vector<56x512xf32> to vector<8x512xf32>
    %68 = vector.broadcast %18 : vector<1x512xf32> to vector<8x512xf32>
    %69 = arith.mulf %67, %68 : vector<8x512xf32>
    %70 = arith.addf %66, %69 : vector<8x512xf32>
    %71 = arith.truncf %70 : vector<8x512xf32> to vector<8x512xbf16>
    %c40 = arith.constant 40 : index
    %c0_18 = arith.constant 0 : index
    %72 = vector.load %arg4[%c40, %c0_18] : memref<56x512xbf16, #tpu.memory_space<vmem>>, vector<8x512xbf16>
    tpu.vector_store %arg4[%c40, %c0_18], %71 {strides = array<i32>} : memref<56x512xbf16, #tpu.memory_space<vmem>>, vector<8x512xbf16>,
    %73 = vector.extract_strided_slice %16 {offsets = [40, 0], sizes = [8, 512], strides = [1, 1]} : vector<56x512xf32> to vector<8x512xf32>
    %74 = vector.broadcast %17 : vector<1x512xf32> to vector<8x512xf32>
    %75 = arith.mulf %73, %74 : vector<8x512xf32>
    %76 = vector.extract_strided_slice %16 {offsets = [32, 0], sizes = [8, 512], strides = [1, 1]} : vector<56x512xf32> to vector<8x512xf32>
    %77 = vector.broadcast %18 : vector<1x512xf32> to vector<8x512xf32>
    %78 = arith.mulf %76, %77 : vector<8x512xf32>
    %79 = arith.addf %75, %78 : vector<8x512xf32>
    %80 = arith.truncf %79 : vector<8x512xf32> to vector<8x512xbf16>
    %c48 = arith.constant 48 : index
    %c0_19 = arith.constant 0 : index
    %81 = vector.load %arg4[%c48, %c0_19] : memref<56x512xbf16, #tpu.memory_space<vmem>>, vector<8x512xbf16>
    tpu.vector_store %arg4[%c48, %c0_19], %80 {strides = array<i32>} : memref<56x512xbf16, #tpu.memory_space<vmem>>, vector<8x512xbf16>,
    return
  }
  func.func @transform_0(%arg0: i32) -> (i32, i32, i32) {
    %c0_i32 = arith.constant 0 : i32
    %c0_i32_0 = arith.constant 0 : i32
    %c0_i32_1 = arith.constant 0 : i32
    %c0_i32_2 = arith.constant 0 : i32
    return %c0_i32, %c0_i32_0, %c0_i32_1 : i32, i32, i32
  }
  func.func @transform_1(%arg0: i32) -> (i32, i32) {
    %c0_i32 = arith.constant 0 : i32
    %c0_i32_0 = arith.constant 0 : i32
    return %c0_i32, %arg0 : i32, i32
  }
  func.func @transform_2(%arg0: i32) -> (i32, i32) {
    %c0_i32 = arith.constant 0 : i32
    %c0_i32_0 = arith.constant 0 : i32
    return %c0_i32, %arg0 : i32, i32
  }
  func.func @transform_3(%arg0: i32) -> (i32, i32) {
    %c0_i32 = arith.constant 0 : i32
    %c0_i32_0 = arith.constant 0 : i32
    return %c0_i32, %arg0 : i32, i32
  }
}

</mosaic_0001>

<llo_original>
// kernel: forward.1
$region0: #{forward.1}
  #allocation0 [shape = 'u32[]', space=smem, size = 0x4, offset = 0x4, fixed_abs, tag = 'smem constant byte address 0x4 - core index']
  #allocation1 [shape = 'u32[72,128]{1,0:T(1,128)}', space=vmem, size = 0x9000, scoped, tag = 'internal scratch']
  %s0 = inlined_call_operand.vmem [shape: bf16[7,10,512], index: 0, kind: input, shape index: {}]
  %s1 = inlined_call_operand.hbm [shape: bf16[1536,512], index: 1, kind: input, shape index: {}]
  %s2 = inlined_call_operand.hbm [shape: f32[2,512], index: 2, kind: input, shape index: {}]
  %s3 = inlined_call_operand.vmem [shape: bf16[56,512], index: 3, kind: output, shape index: {}]
  %s4 = sld [smem:[#allocation0]]
  $region30: #{forward.1} parent=0
    _
  %s6 = ssub.s32 1, %s4
  %s7 = scalar_select 0, %s6, %s4
  $region1: #{forward.1} parent=0
    #allocation2 [shape = 'u8[1572864]{0}', space=vmem, size = 0x180000, scoped, tag = 'input window, operand 1, single buffered']
    #allocation3 [shape = 's32[1]{0}', space=sflag, size = 0x4, scoped, tag = 'scoped memory for forward.1']
    #allocation4 [shape = 'u8[4096]{0}', space=vmem, size = 0x1000, scoped, tag = 'input window, operand 2, single buffered']
    #allocation5 [shape = 's32[1]{0}', space=sflag, size = 0x4, scoped, tag = 'scoped memory for forward.1']
    %8 = vsyncpa [#allocation3], 0
    %9 = vsyncpa [#allocation5], 0
    // Predicated region
    $region2: #{forward.1} parent=1 // pred_check
      _
    $region3: #{forward.1} parent=1 // pred_check_branch
      %11 = sbr.rel (0) target = $region5
    $region4: #{forward.1} parent=1 // pred_region
      _
    $region5: #{forward.1} parent=1 // pred_fallthru
      _
    // Predicated region
    $region6: #{forward.1} parent=1 // pred_check
      _
    $region7: #{forward.1} parent=1 // pred_check_branch
      %13 = sbr.rel (0) target = $region9
    $region8: #{forward.1} parent=1 // pred_region
      %15 = vsyncadd [#allocation3], 0
      %s16 = sshll.u32 %s1, 4
      %s17 = int_to_ptr.hbm [resolvable:$true] %s16
      %s18 = sshll.u32 [#allocation2], 4
      %s19 = int_to_ptr.vmem [resolvable:$true] %s18
      %24 = dma.hbm_to_vmem [thread:$0]  %s17, 49152, %s19, [#allocation3], 256, 256, 16
    $region9: #{forward.1} parent=1 // pred_fallthru
      _
    // Predicated region
    $region10: #{forward.1} parent=1 // pred_check
      _
    $region11: #{forward.1} parent=1 // pred_check_branch
      %26 = sbr.rel (0) target = $region13
    $region12: #{forward.1} parent=1 // pred_region
      %28 = vsyncadd [#allocation5], 0
      %s30 = sshll.u32 %s2, 4
      %s31 = int_to_ptr.hbm [resolvable:$true] %s30
      %s32 = sshll.u32 [#allocation4], 4
      %s33 = int_to_ptr.vmem [resolvable:$true] %s32
      %35 = dma.hbm_to_vmem [thread:$0]  %s31, 128, %s33, [#allocation5]
    $region13: #{forward.1} parent=1 // pred_fallthru
      _
    // Predicated region
    $region14: #{forward.1} parent=1 // pred_check
      _
    $region15: #{forward.1} parent=1 // pred_check_branch
      %37 = sbr.rel (0) target = $region17
    $region16: #{forward.1} parent=1 // pred_region
      %39 = dma.done [#allocation3], 49152
    $region17: #{forward.1} parent=1 // pred_fallthru
      _
    // Predicated region
    $region18: #{forward.1} parent=1 // pred_check
      _
    $region19: #{forward.1} parent=1 // pred_check_branch
      %41 = sbr.rel (0) target = $region21
    $region20: #{forward.1} parent=1 // pred_region
      %43 = dma.done [#allocation5], 128
    $region21: #{forward.1} parent=1 // pred_fallthru
      _
    %v44 = vld [vmem:[%s0] sm:$0xff]
    %v45 = vld [vmem:[%s0 + $0x8] sm:$0xff]
    %v46 = vld [vmem:[%s0 + $0x10] sm:$0x11]
    %v47 = vld [vmem:[%s0 + $0x18] sm:$0x11]
    %v48 = vld [vmem:[%s0 + $0x20] sm:$0xff]
    %v49 = vld [vmem:[%s0 + $0x28] sm:$0xff]
    %v50 = vld [vmem:[%s0 + $0x30] sm:$0x11]
    %v51 = vld [vmem:[%s0 + $0x38] sm:$0x11]
    %v52 = vld [vmem:[%s0 + $0x40] sm:$0xff]
    %v53 = vld [vmem:[%s0 + $0x48] sm:$0xff]
    %v54 = vld [vmem:[%s0 + $0x50] sm:$0x11]
    %v55 = vld [vmem:[%s0 + $0x58] sm:$0x11]
    %v56 = vld [vmem:[%s0 + $0x60] sm:$0xff]
    %v57 = vld [vmem:[%s0 + $0x68] sm:$0xff]
    %v58 = vld [vmem:[%s0 + $0x70] sm:$0x11]
    %v59 = vld [vmem:[%s0 + $0x78] sm:$0x11]
    %v60 = vld [vmem:[%s0 + $0x80] sm:$0xff]
    %v61 = vld [vmem:[%s0 + $0x88] sm:$0xff]
    %v62 = vld [vmem:[%s0 + $0x90] sm:$0x11]
    %v63 = vld [vmem:[%s0 + $0x98] sm:$0x11]
    %v64 = vld [vmem:[%s0 + $0xa0] sm:$0xff]
    %v65 = vld [vmem:[%s0 + $0xa8] sm:$0xff]
    %v66 = vld [vmem:[%s0 + $0xb0] sm:$0x11]
    %v67 = vld [vmem:[%s0 + $0xb8] sm:$0x11]
    %v68 = vld [vmem:[%s0 + $0xc0] sm:$0xff]
    %v69 = vld [vmem:[%s0 + $0xc8] sm:$0xff]
    %v70 = vld [vmem:[%s0 + $0xd0] sm:$0x11]
    %v71 = vld [vmem:[%s0 + $0xd8] sm:$0x11]
    %v72 = vld [vmem:[#allocation2] sm:$0xff]
    %v73 = vld [vmem:[#allocation2 + $0x8] sm:$0xff]
    %v74 = vld [vmem:[#allocation2 + $0x10] sm:$0xff]
    %v75 = vld [vmem:[#allocation2 + $0x18] sm:$0xff]
    %v76 = vld [vmem:[#allocation2 + $0x20] sm:$0xff]
    %v77 = vld [vmem:[#allocation2 + $0x28] sm:$0xff]
    %v78 = vld [vmem:[#allocation2 + $0x30] sm:$0xff]
    %v79 = vld [vmem:[#allocation2 + $0x38] sm:$0xff]
    %v80 = vld [vmem:[#allocation2 + $0x40] sm:$0xff]
    %v81 = vld [vmem:[#allocation2 + $0x48] sm:$0xff]
    %v82 = vld [vmem:[#allocation2 + $0x50] sm:$0xff]
    %v83 = vld [vmem:[#allocation2 + $0x58] sm:$0xff]
    %v84 = vld [vmem:[#allocation2 + $0x60] sm:$0xff]
    %v85 = vld [vmem:[#allocation2 + $0x68] sm:$0xff]
    %v86 = vld [vmem:[#allocation2 + $0x70] sm:$0xff]
    %v87 = vld [vmem:[#allocation2 + $0x78] sm:$0xff]
    %v88 = vld [vmem:[#allocation2 + $0x80] sm:$0xff]
    %v89 = vld [vmem:[#allocation2 + $0x88] sm:$0xff]
    %v90 = vld [vmem:[#allocation2 + $0x90] sm:$0xff]
    %v91 = vld [vmem:[#allocation2 + $0x98] sm:$0xff]
    %v92 = vld [vmem:[#allocation2 + $0xa0] sm:$0xff]
    %v93 = vld [vmem:[#allocation2 + $0xa8] sm:$0xff]
    %v94 = vld [vmem:[#allocation2 + $0xb0] sm:$0xff]
    %v95 = vld [vmem:[#allocation2 + $0xb8] sm:$0xff]
    %v96 = vld [vmem:[#allocation2 + $0xc0] sm:$0xff]
    %v97 = vld [vmem:[#allocation2 + $0xc8] sm:$0xff]
    %v98 = vld [vmem:[#allocation2 + $0xd0] sm:$0xff]
    %v99 = vld [vmem:[#allocation2 + $0xd8] sm:$0xff]
    %v100 = vld [vmem:[#allocation2 + $0xe0] sm:$0xff]
    %v101 = vld [vmem:[#allocation2 + $0xe8] sm:$0xff]
    %v102 = vld [vmem:[#allocation2 + $0xf0] sm:$0xff]
    %v103 = vld [vmem:[#allocation2 + $0xf8] sm:$0xff]
    %v104 = vld [vmem:[#allocation2 + $0x100] sm:$0xff]
    %v105 = vld [vmem:[#allocation2 + $0x108] sm:$0xff]
    %v106 = vld [vmem:[#allocation2 + $0x110] sm:$0xff]
    %v107 = vld [vmem:[#allocation2 + $0x118] sm:$0xff]
    %v108 = vld [vmem:[#allocation2 + $0x120] sm:$0xff]
    %v109 = vld [vmem:[#allocation2 + $0x128] sm:$0xff]
    %v110 = vld [vmem:[#allocation2 + $0x130] sm:$0xff]
    %v111 = vld [vmem:[#allocation2 + $0x138] sm:$0xff]
    %v112 = vld [vmem:[#allocation2 + $0x140] sm:$0xff]
    %v113 = vld [vmem:[#allocation2 + $0x148] sm:$0xff]
    %v114 = vld [vmem:[#allocation2 + $0x150] sm:$0xff]
    %v115 = vld [vmem:[#allocation2 + $0x158] sm:$0xff]
    %v116 = vld [vmem:[#allocation2 + $0x160] sm:$0xff]
    %v117 = vld [vmem:[#allocation2 + $0x168] sm:$0xff]
    %v118 = vld [vmem:[#allocation2 + $0x170] sm:$0xff]
    %v119 = vld [vmem:[#allocation2 + $0x178] sm:$0xff]
    %v120 = vld [vmem:[#allocation2 + $0x180] sm:$0xff]
    %v121 = vld [vmem:[#allocation2 + $0x188] sm:$0xff]
    %v122 = vld [vmem:[#allocation2 + $0x190] sm:$0xff]
    %v123 = vld [vmem:[#allocation2 + $0x198] sm:$0xff]
    %v124 = vld [vmem:[#allocation2 + $0x1a0] sm:$0xff]
    %v125 = vld [vmem:[#allocation2 + $0x1a8] sm:$0xff]
    %v126 = vld [vmem:[#allocation2 + $0x1b0] sm:$0xff]
    %v127 = vld [vmem:[#allocation2 + $0x1b8] sm:$0xff]
    %v128 = vld [vmem:[#allocation2 + $0x1c0] sm:$0xff]
    %v129 = vld [vmem:[#allocation2 + $0x1c8] sm:$0xff]
    %v130 = vld [vmem:[#allocation2 + $0x1d0] sm:$0xff]
    %v131 = vld [vmem:[#allocation2 + $0x1d8] sm:$0xff]
    %v132 = vld [vmem:[#allocation2 + $0x1e0] sm:$0xff]
    %v133 = vld [vmem:[#allocation2 + $0x1e8] sm:$0xff]
    %v134 = vld [vmem:[#allocation2 + $0x1f0] sm:$0xff]
    %v135 = vld [vmem:[#allocation2 + $0x1f8] sm:$0xff]
    %v136 = vld [vmem:[#allocation2 + $0x200] sm:$0xff]
    %v137 = vld [vmem:[#allocation2 + $0x208] sm:$0xff]
    %v138 = vld [vmem:[#allocation2 + $0x210] sm:$0xff]
    %v139 = vld [vmem:[#allocation2 + $0x218] sm:$0xff]
    %v140 = vld [vmem:[#allocation2 + $0x220] sm:$0xff]
    %v141 = vld [vmem:[#allocation2 + $0x228] sm:$0xff]
    %v142 = vld [vmem:[#allocation2 + $0x230] sm:$0xff]
    %v143 = vld [vmem:[#allocation2 + $0x238] sm:$0xff]
    %v144 = vld [vmem:[#allocation2 + $0x240] sm:$0xff]
    %v145 = vld [vmem:[#allocation2 + $0x248] sm:$0xff]
    %v146 = vld [vmem:[#allocation2 + $0x250] sm:$0xff]
    %v147 = vld [vmem:[#allocation2 + $0x258] sm:$0xff]
    %v148 = vld [vmem:[#allocation2 + $0x260] sm:$0xff]
    %v149 = vld [vmem:[#allocation2 + $0x268] sm:$0xff]
    %v150 = vld [vmem:[#allocation2 + $0x270] sm:$0xff]
    %v151 = vld [vmem:[#allocation2 + $0x278] sm:$0xff]
    %v152 = vld [vmem:[#allocation2 + $0x280] sm:$0xff]
    %v153 = vld [vmem:[#allocation2 + $0x288] sm:$0xff]
    %v154 = vld [vmem:[#allocation2 + $0x290] sm:$0xff]
    %v155 = vld [vmem:[#allocation2 + $0x298] sm:$0xff]
    %v156 = vld [vmem:[#allocation2 + $0x2a0] sm:$0xff]
    %v157 = vld [vmem:[#allocation2 + $0x2a8] sm:$0xff]
    %v158 = vld [vmem:[#allocation2 + $0x2b0] sm:$0xff]
    %v159 = vld [vmem:[#allocation2 + $0x2b8] sm:$0xff]
    %v160 = vld [vmem:[#allocation2 + $0x2c0] sm:$0xff]
    %v161 = vld [vmem:[#allocation2 + $0x2c8] sm:$0xff]
    %v162 = vld [vmem:[#allocation2 + $0x2d0] sm:$0xff]
    %v163 = vld [vmem:[#allocation2 + $0x2d8] sm:$0xff]
    %v164 = vld [vmem:[#allocation2 + $0x2e0] sm:$0xff]
    %v165 = vld [vmem:[#allocation2 + $0x2e8] sm:$0xff]
    %v166 = vld [vmem:[#allocation2 + $0x2f0] sm:$0xff]
    %v167 = vld [vmem:[#allocation2 + $0x2f8] sm:$0xff]
    %v168 = vld [vmem:[#allocation2 + $0x300] sm:$0xff]
    %v169 = vld [vmem:[#allocation2 + $0x308] sm:$0xff]
    %v170 = vld [vmem:[#allocation2 + $0x310] sm:$0xff]
    %v171 = vld [vmem:[#allocation2 + $0x318] sm:$0xff]
    %v172 = vld [vmem:[#allocation2 + $0x320] sm:$0xff]
    %v173 = vld [vmem:[#allocation2 + $0x328] sm:$0xff]
    %v174 = vld [vmem:[#allocation2 + $0x330] sm:$0xff]
    %v175 = vld [vmem:[#allocation2 + $0x338] sm:$0xff]
    %v176 = vld [vmem:[#allocation2 + $0x340] sm:$0xff]
    %v177 = vld [vmem:[#allocation2 + $0x348] sm:$0xff]
    %v178 = vld [vmem:[#allocation2 + $0x350] sm:$0xff]
    %v179 = vld [vmem:[#allocation2 + $0x358] sm:$0xff]
    %v180 = vld [vmem:[#allocation2 + $0x360] sm:$0xff]
    %v181 = vld [vmem:[#allocation2 + $0x368] sm:$0xff]
    %v182 = vld [vmem:[#allocation2 + $0x370] sm:$0xff]
    %v183 = vld [vmem:[#allocation2 + $0x378] sm:$0xff]
    %v184 = vld [vmem:[#allocation2 + $0x380] sm:$0xff]
    %v185 = vld [vmem:[#allocation2 + $0x388] sm:$0xff]
    %v186 = vld [vmem:[#allocation2 + $0x390] sm:$0xff]
    %v187 = vld [vmem:[#allocation2 + $0x398] sm:$0xff]
    %v188 = vld [vmem:[#allocation2 + $0x3a0] sm:$0xff]
    %v189 = vld [vmem:[#allocation2 + $0x3a8] sm:$0xff]
    %v190 = vld [vmem:[#allocation2 + $0x3b0] sm:$0xff]
    %v191 = vld [vmem:[#allocation2 + $0x3b8] sm:$0xff]
    %v192 = vld [vmem:[#allocation2 + $0x3c0] sm:$0xff]
    %v193 = vld [vmem:[#allocation2 + $0x3c8] sm:$0xff]
    %v194 = vld [vmem:[#allocation2 + $0x3d0] sm:$0xff]
    %v195 = vld [vmem:[#allocation2 + $0x3d8] sm:$0xff]
    %v196 = vld [vmem:[#allocation2 + $0x3e0] sm:$0xff]
    %v197 = vld [vmem:[#allocation2 + $0x3e8] sm:$0xff]
    %v198 = vld [vmem:[#allocation2 + $0x3f0] sm:$0xff]
    %v199 = vld [vmem:[#allocation2 + $0x3f8] sm:$0xff]
    %vm200 = vsmask.f32 3328
    %vm201 = vsmask.f32 7440
    %vm202 = vmor %vm200, %vm201
    %v204 = vshrl.u32 %v44, 16
    %v206 = vrot.slane %v204, 4
    %v207 = vshll.u32 %v44, 16
    %v209 = vrot.slane %v207, 5
    %v210 = vor.u32 %v206, %v209
    %v211 = vrot.slane %v210, 4
    %v213 = vshll.u32 %v46, 16
    %v215 = vrot.slane %v213, 5
    %v216 = vsel %vm202, %v211, %v215
    %v218 = vshrl.u32 %v45, 16
    %v220 = vrot.slane %v218, 4
    %v221 = vshll.u32 %v45, 16
    %v223 = vrot.slane %v221, 5
    %v224 = vor.u32 %v220, %v223
    %v225 = vrot.slane %v224, 4
    %v227 = vshll.u32 %v47, 16
    %v229 = vrot.slane %v227, 5
    %v230 = vsel %vm202, %v225, %v229
    %v232 = vshrl.u32 %v48, 16
    %v234 = vrot.slane %v232, 4
    %v235 = vshll.u32 %v48, 16
    %v237 = vrot.slane %v235, 5
    %v238 = vor.u32 %v234, %v237
    %v239 = vrot.slane %v238, 4
    %v241 = vshll.u32 %v50, 16
    %v243 = vrot.slane %v241, 5
    %v244 = vsel %vm202, %v239, %v243
    %v246 = vshrl.u32 %v49, 16
    %v248 = vrot.slane %v246, 4
    %v249 = vshll.u32 %v49, 16
    %v251 = vrot.slane %v249, 5
    %v252 = vor.u32 %v248, %v251
    %v253 = vrot.slane %v252, 4
    %v255 = vshll.u32 %v51, 16
    %v257 = vrot.slane %v255, 5
    %v258 = vsel %vm202, %v253, %v257
    %v260 = vshrl.u32 %v52, 16
    %v262 = vrot.slane %v260, 4
    %v263 = vshll.u32 %v52, 16
    %v265 = vrot.slane %v263, 5
    %v266 = vor.u32 %v262, %v265
    %v267 = vrot.slane %v266, 4
    %v269 = vshll.u32 %v54, 16
    %v271 = vrot.slane %v269, 5
    %v272 = vsel %vm202, %v267, %v271
    %v274 = vshrl.u32 %v53, 16
    %v276 = vrot.slane %v274, 4
    %v277 = vshll.u32 %v53, 16
    %v279 = vrot.slane %v277, 5
    %v280 = vor.u32 %v276, %v279
    %v281 = vrot.slane %v280, 4
    %v283 = vshll.u32 %v55, 16
    %v285 = vrot.slane %v283, 5
    %v286 = vsel %vm202, %v281, %v285
    %v288 = vshrl.u32 %v56, 16
    %v290 = vrot.slane %v288, 4
    %v291 = vshll.u32 %v56, 16
    %v293 = vrot.slane %v291, 5
    %v294 = vor.u32 %v290, %v293
    %v295 = vrot.slane %v294, 4
    %v297 = vshll.u32 %v58, 16
    %v299 = vrot.slane %v297, 5
    %v300 = vsel %vm202, %v295, %v299
    %v302 = vshrl.u32 %v57, 16
    %v304 = vrot.slane %v302, 4
    %v305 = vshll.u32 %v57, 16
    %v307 = vrot.slane %v305, 5
    %v308 = vor.u32 %v304, %v307
    %v309 = vrot.slane %v308, 4
    %v311 = vshll.u32 %v59, 16
    %v313 = vrot.slane %v311, 5
    %v314 = vsel %vm202, %v309, %v313
    %v316 = vshrl.u32 %v60, 16
    %v318 = vrot.slane %v316, 4
    %v319 = vshll.u32 %v60, 16
    %v321 = vrot.slane %v319, 5
    %v322 = vor.u32 %v318, %v321
    %v323 = vrot.slane %v322, 4
    %v325 = vshll.u32 %v62, 16
    %v327 = vrot.slane %v325, 5
    %v328 = vsel %vm202, %v323, %v327
    %v330 = vshrl.u32 %v61, 16
    %v332 = vrot.slane %v330, 4
    %v333 = vshll.u32 %v61, 16
    %v335 = vrot.slane %v333, 5
    %v336 = vor.u32 %v332, %v335
    %v337 = vrot.slane %v336, 4
    %v339 = vshll.u32 %v63, 16
    %v341 = vrot.slane %v339, 5
    %v342 = vsel %vm202, %v337, %v341
    %v344 = vshrl.u32 %v64, 16
    %v346 = vrot.slane %v344, 4
    %v347 = vshll.u32 %v64, 16
    %v349 = vrot.slane %v347, 5
    %v350 = vor.u32 %v346, %v349
    %v351 = vrot.slane %v350, 4
    %v353 = vshll.u32 %v66, 16
    %v355 = vrot.slane %v353, 5
    %v356 = vsel %vm202, %v351, %v355
    %v358 = vshrl.u32 %v65, 16
    %v360 = vrot.slane %v358, 4
    %v361 = vshll.u32 %v65, 16
    %v363 = vrot.slane %v361, 5
    %v364 = vor.u32 %v360, %v363
    %v365 = vrot.slane %v364, 4
    %v367 = vshll.u32 %v67, 16
    %v369 = vrot.slane %v367, 5
    %v370 = vsel %vm202, %v365, %v369
    %v372 = vshrl.u32 %v68, 16
    %v374 = vrot.slane %v372, 4
    %v375 = vshll.u32 %v68, 16
    %v377 = vrot.slane %v375, 5
    %v378 = vor.u32 %v374, %v377
    %v379 = vrot.slane %v378, 4
    %v381 = vshll.u32 %v70, 16
    %v383 = vrot.slane %v381, 5
    %v384 = vsel %vm202, %v379, %v383
    %v386 = vshrl.u32 %v69, 16
    %v388 = vrot.slane %v386, 4
    %v389 = vshll.u32 %v69, 16
    %v391 = vrot.slane %v389, 5
    %v392 = vor.u32 %v388, %v391
    %v393 = vrot.slane %v392, 4
    %v395 = vshll.u32 %v71, 16
    %v397 = vrot.slane %v395, 5
    %v398 = vsel %vm202, %v393, %v397
    %v399 = vld [vmem:[#allocation2 + $0x400] sm:$0xff]
    %v400 = vld [vmem:[#allocation2 + $0x408] sm:$0xff]
    %v401 = vld [vmem:[#allocation2 + $0x410] sm:$0xff]
    %v402 = vld [vmem:[#allocation2 + $0x418] sm:$0xff]
    %v403 = vld [vmem:[#allocation2 + $0x420] sm:$0xff]
    %v404 = vld [vmem:[#allocation2 + $0x428] sm:$0xff]
    %v405 = vld [vmem:[#allocation2 + $0x430] sm:$0xff]
    %v406 = vld [vmem:[#allocation2 + $0x438] sm:$0xff]
    %v407 = vld [vmem:[#allocation2 + $0x440] sm:$0xff]
    %v408 = vld [vmem:[#allocation2 + $0x448] sm:$0xff]
    %v409 = vld [vmem:[#allocation2 + $0x450] sm:$0xff]
    %v410 = vld [vmem:[#allocation2 + $0x458] sm:$0xff]
    %v411 = vld [vmem:[#allocation2 + $0x460] sm:$0xff]
    %v412 = vld [vmem:[#allocation2 + $0x468] sm:$0xff]
    %v413 = vld [vmem:[#allocation2 + $0x470] sm:$0xff]
    %v414 = vld [vmem:[#allocation2 + $0x478] sm:$0xff]
    %v415 = vld [vmem:[#allocation2 + $0x480] sm:$0xff]
    %v416 = vld [vmem:[#allocation2 + $0x488] sm:$0xff]
    %v417 = vld [vmem:[#allocation2 + $0x490] sm:$0xff]
    %v418 = vld [vmem:[#allocation2 + $0x498] sm:$0xff]
    %v419 = vld [vmem:[#allocation2 + $0x4a0] sm:$0xff]
    %v420 = vld [vmem:[#allocation2 + $0x4a8] sm:$0xff]
    %v421 = vld [vmem:[#allocation2 + $0x4b0] sm:$0xff]
    %v422 = vld [vmem:[#allocation2 + $0x4b8] sm:$0xff]
    %v423 = vld [vmem:[#allocation2 + $0x4c0] sm:$0xff]
    %v424 = vld [vmem:[#allocation2 + $0x4c8] sm:$0xff]
    %v425 = vld [vmem:[#allocation2 + $0x4d0] sm:$0xff]
    %v426 = vld [vmem:[#allocation2 + $0x4d8] sm:$0xff]
    %v427 = vld [vmem:[#allocation2 + $0x4e0] sm:$0xff]
    %v428 = vld [vmem:[#allocation2 + $0x4e8] sm:$0xff]
    %v429 = vld [vmem:[#allocation2 + $0x4f0] sm:$0xff]
    %v430 = vld [vmem:[#allocation2 + $0x4f8] sm:$0xff]
    %v431 = vld [vmem:[#allocation2 + $0x500] sm:$0xff]
    %v432 = vld [vmem:[#allocation2 + $0x508] sm:$0xff]
    %v433 = vld [vmem:[#allocation2 + $0x510] sm:$0xff]
    %v434 = vld [vmem:[#allocation2 + $0x518] sm:$0xff]
    %v435 = vld [vmem:[#allocation2 + $0x520] sm:$0xff]
    %v436 = vld [vmem:[#allocation2 + $0x528] sm:$0xff]
    %v437 = vld [vmem:[#allocation2 + $0x530] sm:$0xff]
    %v438 = vld [vmem:[#allocation2 + $0x538] sm:$0xff]
    %v439 = vld [vmem:[#allocation2 + $0x540] sm:$0xff]
    %v440 = vld [vmem:[#allocation2 + $0x548] sm:$0xff]
    %v441 = vld [vmem:[#allocation2 + $0x550] sm:$0xff]
    %v442 = vld [vmem:[#allocation2 + $0x558] sm:$0xff]
    %v443 = vld [vmem:[#allocation2 + $0x560] sm:$0xff]
    %v444 = vld [vmem:[#allocation2 + $0x568] sm:$0xff]
    %v445 = vld [vmem:[#allocation2 + $0x570] sm:$0xff]
    %v446 = vld [vmem:[#allocation2 + $0x578] sm:$0xff]
    %v447 = vld [vmem:[#allocation2 + $0x580] sm:$0xff]
    %v448 = vld [vmem:[#allocation2 + $0x588] sm:$0xff]
    %v449 = vld [vmem:[#allocation2 + $0x590] sm:$0xff]
    %v450 = vld [vmem:[#allocation2 + $0x598] sm:$0xff]
    %v451 = vld [vmem:[#allocation2 + $0x5a0] sm:$0xff]
    %v452 = vld [vmem:[#allocation2 + $0x5a8] sm:$0xff]
    %v453 = vld [vmem:[#allocation2 + $0x5b0] sm:$0xff]
    %v454 = vld [vmem:[#allocation2 + $0x5b8] sm:$0xff]
    %v455 = vld [vmem:[#allocation2 + $0x5c0] sm:$0xff]
    %v456 = vld [vmem:[#allocation2 + $0x5c8] sm:$0xff]
    %v457 = vld [vmem:[#allocation2 + $0x5d0] sm:$0xff]
    %v458 = vld [vmem:[#allocation2 + $0x5d8] sm:$0xff]
    %v459 = vld [vmem:[#allocation2 + $0x5e0] sm:$0xff]
    %v460 = vld [vmem:[#allocation2 + $0x5e8] sm:$0xff]
    %v461 = vld [vmem:[#allocation2 + $0x5f0] sm:$0xff]
    %v462 = vld [vmem:[#allocation2 + $0x5f8] sm:$0xff]
    %v463 = vld [vmem:[#allocation2 + $0x600] sm:$0xff]
    %v464 = vld [vmem:[#allocation2 + $0x608] sm:$0xff]
    %v465 = vld [vmem:[#allocation2 + $0x610] sm:$0xff]
    %v466 = vld [vmem:[#allocation2 + $0x618] sm:$0xff]
    %v467 = vld [vmem:[#allocation2 + $0x620] sm:$0xff]
    %v468 = vld [vmem:[#allocation2 + $0x628] sm:$0xff]
    %v469 = vld [vmem:[#allocation2 + $0x630] sm:$0xff]
    %v470 = vld [vmem:[#allocation2 + $0x638] sm:$0xff]
    %v471 = vld [vmem:[#allocation2 + $0x640] sm:$0xff]
    %v472 = vld [vmem:[#allocation2 + $0x648] sm:$0xff]
    %v473 = vld [vmem:[#allocation2 + $0x650] sm:$0xff]
    %v474 = vld [vmem:[#allocation2 + $0x658] sm:$0xff]
    %v475 = vld [vmem:[#allocation2 + $0x660] sm:$0xff]
    %v476 = vld [vmem:[#allocation2 + $0x668] sm:$0xff]
    %v477 = vld [vmem:[#allocation2 + $0x670] sm:$0xff]
    %v478 = vld [vmem:[#allocation2 + $0x678] sm:$0xff]
    %v479 = vld [vmem:[#allocation2 + $0x680] sm:$0xff]
    %v480 = vld [vmem:[#allocation2 + $0x688] sm:$0xff]
    %v481 = vld [vmem:[#allocation2 + $0x690] sm:$0xff]
    %v482 = vld [vmem:[#allocation2 + $0x698] sm:$0xff]
    %v483 = vld [vmem:[#allocation2 + $0x6a0] sm:$0xff]
    %v484 = vld [vmem:[#allocation2 + $0x6a8] sm:$0xff]
    %v485 = vld [vmem:[#allocation2 + $0x6b0] sm:$0xff]
    %v486 = vld [vmem:[#allocation2 + $0x6b8] sm:$0xff]
    %v487 = vld [vmem:[#allocation2 + $0x6c0] sm:$0xff]
    %v488 = vld [vmem:[#allocation2 + $0x6c8] sm:$0xff]
    %v489 = vld [vmem:[#allocation2 + $0x6d0] sm:$0xff]
    %v490 = vld [vmem:[#allocation2 + $0x6d8] sm:$0xff]
    %v491 = vld [vmem:[#allocation2 + $0x6e0] sm:$0xff]
    %v492 = vld [vmem:[#allocation2 + $0x6e8] sm:$0xff]
    %v493 = vld [vmem:[#allocation2 + $0x6f0] sm:$0xff]
    %v494 = vld [vmem:[#allocation2 + $0x6f8] sm:$0xff]
    %v495 = vld [vmem:[#allocation2 + $0x700] sm:$0xff]
    %v496 = vld [vmem:[#allocation2 + $0x708] sm:$0xff]
    %v497 = vld [vmem:[#allocation2 + $0x710] sm:$0xff]
    %v498 = vld [vmem:[#allocation2 + $0x718] sm:$0xff]
    %v499 = vld [vmem:[#allocation2 + $0x720] sm:$0xff]
    %v500 = vld [vmem:[#allocation2 + $0x728] sm:$0xff]
    %v501 = vld [vmem:[#allocation2 + $0x730] sm:$0xff]
    %v502 = vld [vmem:[#allocation2 + $0x738] sm:$0xff]
    %v503 = vld [vmem:[#allocation2 + $0x740] sm:$0xff]
    %v504 = vld [vmem:[#allocation2 + $0x748] sm:$0xff]
    %v505 = vld [vmem:[#allocation2 + $0x750] sm:$0xff]
    %v506 = vld [vmem:[#allocation2 + $0x758] sm:$0xff]
    %v507 = vld [vmem:[#allocation2 + $0x760] sm:$0xff]
    %v508 = vld [vmem:[#allocation2 + $0x768] sm:$0xff]
    %v509 = vld [vmem:[#allocation2 + $0x770] sm:$0xff]
    %v510 = vld [vmem:[#allocation2 + $0x778] sm:$0xff]
    %v511 = vld [vmem:[#allocation2 + $0x780] sm:$0xff]
    %v512 = vld [vmem:[#allocation2 + $0x788] sm:$0xff]
    %v513 = vld [vmem:[#allocation2 + $0x790] sm:$0xff]
    %v514 = vld [vmem:[#allocation2 + $0x798] sm:$0xff]
    %v515 = vld [vmem:[#allocation2 + $0x7a0] sm:$0xff]
    %v516 = vld [vmem:[#allocation2 + $0x7a8] sm:$0xff]
    %v517 = vld [vmem:[#allocation2 + $0x7b0] sm:$0xff]
    %v518 = vld [vmem:[#allocation2 + $0x7b8] sm:$0xff]
    %v519 = vld [vmem:[#allocation2 + $0x7c0] sm:$0xff]
    %v520 = vld [vmem:[#allocation2 + $0x7c8] sm:$0xff]
    %v521 = vld [vmem:[#allocation2 + $0x7d0] sm:$0xff]
    %v522 = vld [vmem:[#allocation2 + $0x7d8] sm:$0xff]
    %v523 = vld [vmem:[#allocation2 + $0x7e0] sm:$0xff]
    %v524 = vld [vmem:[#allocation2 + $0x7e8] sm:$0xff]
    %v525 = vld [vmem:[#allocation2 + $0x7f0] sm:$0xff]
    %v526 = vld [vmem:[#allocation2 + $0x7f8] sm:$0xff]
    %v527 = vunpack.c.l.b16 %v216
    %v528 = vunpack.c.h.b16 %v216
    %v529 = vunpack.c.l.b16 %v230
    %v530 = vunpack.c.h.b16 %v230
    %v531 = vunpack.c.l.b16 %v244
    %v532 = vunpack.c.h.b16 %v244
    %v533 = vunpack.c.l.b16 %v258
    %v534 = vunpack.c.h.b16 %v258
    %v535 = vunpack.c.l.b16 %v272
    %v536 = vunpack.c.h.b16 %v272
    %v537 = vunpack.c.l.b16 %v286
    %v538 = vunpack.c.h.b16 %v286
    %v539 = vunpack.c.l.b16 %v300
    %v540 = vunpack.c.h.b16 %v300
    %v541 = vunpack.c.l.b16 %v314
    %v542 = vunpack.c.h.b16 %v314
    %v543 = vunpack.c.l.b16 %v328
    %v544 = vunpack.c.h.b16 %v328
    %v545 = vunpack.c.l.b16 %v342
    %v546 = vunpack.c.h.b16 %v342
    %v547 = vunpack.c.l.b16 %v356
    %v548 = vunpack.c.h.b16 %v356
    %v549 = vunpack.c.l.b16 %v370
    %v550 = vunpack.c.h.b16 %v370
    %v551 = vunpack.c.l.b16 %v384
    %v552 = vunpack.c.h.b16 %v384
    %v553 = vunpack.c.l.b16 %v398
    %v554 = vunpack.c.h.b16 %v398
    %v555 = vpack.c.b16 %v531, %v527
    %v556 = vpack.c.b16 %v532, %v528
    %v557 = vpack.c.b16 %v533, %v529
    %v558 = vpack.c.b16 %v534, %v530
    %v559 = vpack.c.b16 %v539, %v535
    %v560 = vpack.c.b16 %v540, %v536
    %v561 = vpack.c.b16 %v541, %v537
    %v562 = vpack.c.b16 %v542, %v538
    %v563 = vpack.c.b16 %v547, %v543
    %v564 = vpack.c.b16 %v548, %v544
    %v565 = vpack.c.b16 %v549, %v545
    %v566 = vpack.c.b16 %v550, %v546
    %v567 = vpack.c.b16 %v551, %v551
    %v568 = vpack.c.b16 %v552, %v552
    %v569 = vpack.c.b16 %v553, %v553
    %v570 = vpack.c.b16 %v554, %v554
    %v715 = vunpack.c.l.b16 %v399
    %v716 = vunpack.c.h.b16 %v399
    %v717 = vunpack.c.l.b16 %v400
    %v718 = vunpack.c.h.b16 %v400
    %v719 = vunpack.c.l.b16 %v401
    %v720 = vunpack.c.h.b16 %v401
    %v721 = vunpack.c.l.b16 %v402
    %v722 = vunpack.c.h.b16 %v402
    %v723 = vunpack.c.l.b16 %v403
    %v724 = vunpack.c.h.b16 %v403
    %v725 = vunpack.c.l.b16 %v404
    %v726 = vunpack.c.h.b16 %v404
    %v727 = vunpack.c.l.b16 %v405
    %v728 = vunpack.c.h.b16 %v405
    %v729 = vunpack.c.l.b16 %v406
    %v730 = vunpack.c.h.b16 %v406
    %v731 = vunpack.c.l.b16 %v407
    %v732 = vunpack.c.h.b16 %v407
    %v733 = vunpack.c.l.b16 %v408
    %v734 = vunpack.c.h.b16 %v408
    %v735 = vunpack.c.l.b16 %v409
    %v736 = vunpack.c.h.b16 %v409
    %v737 = vunpack.c.l.b16 %v410
    %v738 = vunpack.c.h.b16 %v410
    %v739 = vunpack.c.l.b16 %v411
    %v740 = vunpack.c.h.b16 %v411
    %v741 = vunpack.c.l.b16 %v412
    %v742 = vunpack.c.h.b16 %v412
    %v743 = vunpack.c.l.b16 %v413
    %v744 = vunpack.c.h.b16 %v413
    %v745 = vunpack.c.l.b16 %v414
    %v746 = vunpack.c.h.b16 %v414
    %v747 = vunpack.c.l.b16 %v415
    %v748 = vunpack.c.h.b16 %v415
    %v749 = vunpack.c.l.b16 %v416
    %v750 = vunpack.c.h.b16 %v416
    %v751 = vunpack.c.l.b16 %v417
    %v752 = vunpack.c.h.b16 %v417
    %v753 = vunpack.c.l.b16 %v418
    %v754 = vunpack.c.h.b16 %v418
    %v755 = vunpack.c.l.b16 %v419
    %v756 = vunpack.c.h.b16 %v419
    %v757 = vunpack.c.l.b16 %v420
    %v758 = vunpack.c.h.b16 %v420
    %v759 = vunpack.c.l.b16 %v421
    %v760 = vunpack.c.h.b16 %v421
    %v761 = vunpack.c.l.b16 %v422
    %v762 = vunpack.c.h.b16 %v422
    %v763 = vunpack.c.l.b16 %v423
    %v764 = vunpack.c.h.b16 %v423
    %v765 = vunpack.c.l.b16 %v424
    %v766 = vunpack.c.h.b16 %v424
    %v767 = vunpack.c.l.b16 %v425
    %v768 = vunpack.c.h.b16 %v425
    %v769 = vunpack.c.l.b16 %v426
    %v770 = vunpack.c.h.b16 %v426
    %v771 = vunpack.c.l.b16 %v427
    %v772 = vunpack.c.h.b16 %v427
    %v773 = vunpack.c.l.b16 %v428
    %v774 = vunpack.c.h.b16 %v428
    %v775 = vunpack.c.l.b16 %v429
    %v776 = vunpack.c.h.b16 %v429
    %v777 = vunpack.c.l.b16 %v430
    %v778 = vunpack.c.h.b16 %v430
    %v779 = vunpack.c.l.b16 %v431
    %v780 = vunpack.c.h.b16 %v431
    %v781 = vunpack.c.l.b16 %v432
    %v782 = vunpack.c.h.b16 %v432
    %v783 = vunpack.c.l.b16 %v433
    %v784 = vunpack.c.h.b16 %v433
    %v785 = vunpack.c.l.b16 %v434
    %v786 = vunpack.c.h.b16 %v434
    %v787 = vunpack.c.l.b16 %v435
    %v788 = vunpack.c.h.b16 %v435
    %v789 = vunpack.c.l.b16 %v436
    %v790 = vunpack.c.h.b16 %v436
    %v791 = vunpack.c.l.b16 %v437
    %v792 = vunpack.c.h.b16 %v437
    %v793 = vunpack.c.l.b16 %v438
    %v794 = vunpack.c.h.b16 %v438
    %v795 = vunpack.c.l.b16 %v439
    %v796 = vunpack.c.h.b16 %v439
    %v797 = vunpack.c.l.b16 %v440
    %v798 = vunpack.c.h.b16 %v440
    %v799 = vunpack.c.l.b16 %v441
    %v800 = vunpack.c.h.b16 %v441
    %v801 = vunpack.c.l.b16 %v442
    %v802 = vunpack.c.h.b16 %v442
    %v803 = vunpack.c.l.b16 %v443
    %v804 = vunpack.c.h.b16 %v443
    %v805 = vunpack.c.l.b16 %v444
    %v806 = vunpack.c.h.b16 %v444
    %v807 = vunpack.c.l.b16 %v445
    %v808 = vunpack.c.h.b16 %v445
    %v809 = vunpack.c.l.b16 %v446
    %v810 = vunpack.c.h.b16 %v446
    %v811 = vunpack.c.l.b16 %v447
    %v812 = vunpack.c.h.b16 %v447
    %v813 = vunpack.c.l.b16 %v448
    %v814 = vunpack.c.h.b16 %v448
    %v815 = vunpack.c.l.b16 %v449
    %v816 = vunpack.c.h.b16 %v449
    %v817 = vunpack.c.l.b16 %v450
    %v818 = vunpack.c.h.b16 %v450
    %v819 = vunpack.c.l.b16 %v451
    %v820 = vunpack.c.h.b16 %v451
    %v821 = vunpack.c.l.b16 %v452
    %v822 = vunpack.c.h.b16 %v452
    %v823 = vunpack.c.l.b16 %v453
    %v824 = vunpack.c.h.b16 %v453
    %v825 = vunpack.c.l.b16 %v454
    %v826 = vunpack.c.h.b16 %v454
    %v827 = vunpack.c.l.b16 %v455
    %v828 = vunpack.c.h.b16 %v455
    %v829 = vunpack.c.l.b16 %v456
    %v830 = vunpack.c.h.b16 %v456
    %v831 = vunpack.c.l.b16 %v457
    %v832 = vunpack.c.h.b16 %v457
    %v833 = vunpack.c.l.b16 %v458
    %v834 = vunpack.c.h.b16 %v458
    %v835 = vunpack.c.l.b16 %v459
    %v836 = vunpack.c.h.b16 %v459
    %v837 = vunpack.c.l.b16 %v460
    %v838 = vunpack.c.h.b16 %v460
    %v839 = vunpack.c.l.b16 %v461
    %v840 = vunpack.c.h.b16 %v461
    %v841 = vunpack.c.l.b16 %v462
    %v842 = vunpack.c.h.b16 %v462
    %v843 = vunpack.c.l.b16 %v463
    %v844 = vunpack.c.h.b16 %v463
    %v845 = vunpack.c.l.b16 %v464
    %v846 = vunpack.c.h.b16 %v464
    %v847 = vunpack.c.l.b16 %v465
    %v848 = vunpack.c.h.b16 %v465
    %v849 = vunpack.c.l.b16 %v466
    %v850 = vunpack.c.h.b16 %v466
    %v851 = vunpack.c.l.b16 %v467
    %v852 = vunpack.c.h.b16 %v467
    %v853 = vunpack.c.l.b16 %v468
    %v854 = vunpack.c.h.b16 %v468
    %v855 = vunpack.c.l.b16 %v469
    %v856 = vunpack.c.h.b16 %v469
    %v857 = vunpack.c.l.b16 %v470
    %v858 = vunpack.c.h.b16 %v470
    %v859 = vunpack.c.l.b16 %v471
    %v860 = vunpack.c.h.b16 %v471
    %v861 = vunpack.c.l.b16 %v472
    %v862 = vunpack.c.h.b16 %v472
    %v863 = vunpack.c.l.b16 %v473
    %v864 = vunpack.c.h.b16 %v473
    %v865 = vunpack.c.l.b16 %v474
    %v866 = vunpack.c.h.b16 %v474
    %v867 = vunpack.c.l.b16 %v475
    %v868 = vunpack.c.h.b16 %v475
    %v869 = vunpack.c.l.b16 %v476
    %v870 = vunpack.c.h.b16 %v476
    %v871 = vunpack.c.l.b16 %v477
    %v872 = vunpack.c.h.b16 %v477
    %v873 = vunpack.c.l.b16 %v478
    %v874 = vunpack.c.h.b16 %v478
    %v875 = vunpack.c.l.b16 %v479
    %v876 = vunpack.c.h.b16 %v479
    %v877 = vunpack.c.l.b16 %v480
    %v878 = vunpack.c.h.b16 %v480
    %v879 = vunpack.c.l.b16 %v481
    %v880 = vunpack.c.h.b16 %v481
    %v881 = vunpack.c.l.b16 %v482
    %v882 = vunpack.c.h.b16 %v482
    %v883 = vunpack.c.l.b16 %v483
    %v884 = vunpack.c.h.b16 %v483
    %v885 = vunpack.c.l.b16 %v484
    %v886 = vunpack.c.h.b16 %v484
    %v887 = vunpack.c.l.b16 %v485
    %v888 = vunpack.c.h.b16 %v485
    %v889 = vunpack.c.l.b16 %v486
    %v890 = vunpack.c.h.b16 %v486
    %v891 = vunpack.c.l.b16 %v487
    %v892 = vunpack.c.h.b16 %v487
    %v893 = vunpack.c.l.b16 %v488
    %v894 = vunpack.c.h.b16 %v488
    %v895 = vunpack.c.l.b16 %v489
    %v896 = vunpack.c.h.b16 %v489
    %v897 = vunpack.c.l.b16 %v490
    %v898 = vunpack.c.h.b16 %v490
    %v899 = vunpack.c.l.b16 %v491
    %v900 = vunpack.c.h.b16 %v491
    %v901 = vunpack.c.l.b16 %v492
    %v902 = vunpack.c.h.b16 %v492
    %v903 = vunpack.c.l.b16 %v493
    %v904 = vunpack.c.h.b16 %v493
    %v905 = vunpack.c.l.b16 %v494
    %v906 = vunpack.c.h.b16 %v494
    %v907 = vunpack.c.l.b16 %v495
    %v908 = vunpack.c.h.b16 %v495
    %v909 = vunpack.c.l.b16 %v496
    %v910 = vunpack.c.h.b16 %v496
    %v911 = vunpack.c.l.b16 %v497
    %v912 = vunpack.c.h.b16 %v497
    %v913 = vunpack.c.l.b16 %v498
    %v914 = vunpack.c.h.b16 %v498
    %v915 = vunpack.c.l.b16 %v499
    %v916 = vunpack.c.h.b16 %v499
    %v917 = vunpack.c.l.b16 %v500
    %v918 = vunpack.c.h.b16 %v500
    %v919 = vunpack.c.l.b16 %v501
    %v920 = vunpack.c.h.b16 %v501
    %v921 = vunpack.c.l.b16 %v502
    %v922 = vunpack.c.h.b16 %v502
    %v923 = vunpack.c.l.b16 %v503
    %v924 = vunpack.c.h.b16 %v503
    %v925 = vunpack.c.l.b16 %v504
    %v926 = vunpack.c.h.b16 %v504
    %v927 = vunpack.c.l.b16 %v505
    %v928 = vunpack.c.h.b16 %v505
    %v929 = vunpack.c.l.b16 %v506
    %v930 = vunpack.c.h.b16 %v506
    %v931 = vunpack.c.l.b16 %v507
    %v932 = vunpack.c.h.b16 %v507
    %v933 = vunpack.c.l.b16 %v508
    %v934 = vunpack.c.h.b16 %v508
    %v935 = vunpack.c.l.b16 %v509
    %v936 = vunpack.c.h.b16 %v509
    %v937 = vunpack.c.l.b16 %v510
    %v938 = vunpack.c.h.b16 %v510
    %v939 = vunpack.c.l.b16 %v511
    %v940 = vunpack.c.h.b16 %v511
    %v941 = vunpack.c.l.b16 %v512
    %v942 = vunpack.c.h.b16 %v512
    %v943 = vunpack.c.l.b16 %v513
    %v944 = vunpack.c.h.b16 %v513
    %v945 = vunpack.c.l.b16 %v514
    %v946 = vunpack.c.h.b16 %v514
    %v947 = vunpack.c.l.b16 %v515
    %v948 = vunpack.c.h.b16 %v515
    %v949 = vunpack.c.l.b16 %v516
    %v950 = vunpack.c.h.b16 %v516
    %v951 = vunpack.c.l.b16 %v517
    %v952 = vunpack.c.h.b16 %v517
    %v953 = vunpack.c.l.b16 %v518
    %v954 = vunpack.c.h.b16 %v518
    %v955 = vunpack.c.l.b16 %v519
    %v956 = vunpack.c.h.b16 %v519
    %v957 = vunpack.c.l.b16 %v520
    %v958 = vunpack.c.h.b16 %v520
    %v959 = vunpack.c.l.b16 %v521
    %v960 = vunpack.c.h.b16 %v521
    %v961 = vunpack.c.l.b16 %v522
    %v962 = vunpack.c.h.b16 %v522
    %v963 = vunpack.c.l.b16 %v523
    %v964 = vunpack.c.h.b16 %v523
    %v965 = vunpack.c.l.b16 %v524
    %v966 = vunpack.c.h.b16 %v524
    %v967 = vunpack.c.l.b16 %v525
    %v968 = vunpack.c.h.b16 %v525
    %v969 = vunpack.c.l.b16 %v526
    %v970 = vunpack.c.h.b16 %v526
    %v971 = vpack.c.b16 %v719, %v715
    %v972 = vpack.c.b16 %v720, %v716
    %v973 = vpack.c.b16 %v721, %v717
    %v974 = vpack.c.b16 %v722, %v718
    %v975 = vpack.c.b16 %v727, %v723
    %v976 = vpack.c.b16 %v728, %v724
    %v977 = vpack.c.b16 %v729, %v725
    %v978 = vpack.c.b16 %v730, %v726
    %v979 = vpack.c.b16 %v735, %v731
    %v980 = vpack.c.b16 %v736, %v732
    %v981 = vpack.c.b16 %v737, %v733
    %v982 = vpack.c.b16 %v738, %v734
    %v983 = vpack.c.b16 %v743, %v739
    %v984 = vpack.c.b16 %v744, %v740
    %v985 = vpack.c.b16 %v745, %v741
    %v986 = vpack.c.b16 %v746, %v742
    %v987 = vpack.c.b16 %v751, %v747
    %v988 = vpack.c.b16 %v752, %v748
    %v989 = vpack.c.b16 %v753, %v749
    %v990 = vpack.c.b16 %v754, %v750
    %v991 = vpack.c.b16 %v759, %v755
    %v992 = vpack.c.b16 %v760, %v756
    %v993 = vpack.c.b16 %v761, %v757
    %v994 = vpack.c.b16 %v762, %v758
    %v995 = vpack.c.b16 %v767, %v763
    %v996 = vpack.c.b16 %v768, %v764
    %v997 = vpack.c.b16 %v769, %v765
    %v998 = vpack.c.b16 %v770, %v766
    %v999 = vpack.c.b16 %v775, %v771
    %v1000 = vpack.c.b16 %v776, %v772
    %v1001 = vpack.c.b16 %v777, %v773
    %v1002 = vpack.c.b16 %v778, %v774
    %v1003 = vpack.c.b16 %v783, %v779
    %v1004 = vpack.c.b16 %v784, %v780
    %v1005 = vpack.c.b16 %v785, %v781
    %v1006 = vpack.c.b16 %v786, %v782
    %v1007 = vpack.c.b16 %v791, %v787
    %v1008 = vpack.c.b16 %v792, %v788
    %v1009 = vpack.c.b16 %v793, %v789
    %v1010 = vpack.c.b16 %v794, %v790
    %v1011 = vpack.c.b16 %v799, %v795
    %v1012 = vpack.c.b16 %v800, %v796
    %v1013 = vpack.c.b16 %v801, %v797
    %v1014 = vpack.c.b16 %v802, %v798
    %v1015 = vpack.c.b16 %v807, %v803
    %v1016 = vpack.c.b16 %v808, %v804
    %v1017 = vpack.c.b16 %v809, %v805
    %v1018 = vpack.c.b16 %v810, %v806
    %v1019 = vpack.c.b16 %v815, %v811
    %v1020 = vpack.c.b16 %v816, %v812
    %v1021 = vpack.c.b16 %v817, %v813
    %v1022 = vpack.c.b16 %v818, %v814
    %v1023 = vpack.c.b16 %v823, %v819
    %v1024 = vpack.c.b16 %v824, %v820
    %v1025 = vpack.c.b16 %v825, %v821
    %v1026 = vpack.c.b16 %v826, %v822
    %v1027 = vpack.c.b16 %v831, %v827
    %v1028 = vpack.c.b16 %v832, %v828
    %v1029 = vpack.c.b16 %v833, %v829
    %v1030 = vpack.c.b16 %v834, %v830
    %v1031 = vpack.c.b16 %v839, %v835
    %v1032 = vpack.c.b16 %v840, %v836
    %v1033 = vpack.c.b16 %v841, %v837
    %v1034 = vpack.c.b16 %v842, %v838
    %v1035 = vpack.c.b16 %v847, %v843
    %v1036 = vpack.c.b16 %v848, %v844
    %v1037 = vpack.c.b16 %v849, %v845
    %v1038 = vpack.c.b16 %v850, %v846
    %v1039 = vpack.c.b16 %v855, %v851
    %v1040 = vpack.c.b16 %v856, %v852
    %v1041 = vpack.c.b16 %v857, %v853
    %v1042 = vpack.c.b16 %v858, %v854
    %v1043 = vpack.c.b16 %v863, %v859
    %v1044 = vpack.c.b16 %v864, %v860
    %v1045 = vpack.c.b16 %v865, %v861
    %v1046 = vpack.c.b16 %v866, %v862
    %v1047 = vpack.c.b16 %v871, %v867
    %v1048 = vpack.c.b16 %v872, %v868
    %v1049 = vpack.c.b16 %v873, %v869
    %v1050 = vpack.c.b16 %v874, %v870
    %v1051 = vpack.c.b16 %v879, %v875
    %v1052 = vpack.c.b16 %v880, %v876
    %v1053 = vpack.c.b16 %v881, %v877
    %v1054 = vpack.c.b16 %v882, %v878
    %v1055 = vpack.c.b16 %v887, %v883
    %v1056 = vpack.c.b16 %v888, %v884
    %v1057 = vpack.c.b16 %v889, %v885
    %v1058 = vpack.c.b16 %v890, %v886
    %v1059 = vpack.c.b16 %v895, %v891
    %v1060 = vpack.c.b16 %v896, %v892
    %v1061 = vpack.c.b16 %v897, %v893
    %v1062 = vpack.c.b16 %v898, %v894
    %v1063 = vpack.c.b16 %v903, %v899
    %v1064 = vpack.c.b16 %v904, %v900
    %v1065 = vpack.c.b16 %v905, %v901
    %v1066 = vpack.c.b16 %v906, %v902
    %v1067 = vpack.c.b16 %v911, %v907
    %v1068 = vpack.c.b16 %v912, %v908
    %v1069 = vpack.c.b16 %v913, %v909
    %v1070 = vpack.c.b16 %v914, %v910
    %v1071 = vpack.c.b16 %v919, %v915
    %v1072 = vpack.c.b16 %v920, %v916
    %v1073 = vpack.c.b16 %v921, %v917
    %v1074 = vpack.c.b16 %v922, %v918
    %v1075 = vpack.c.b16 %v927, %v923
    %v1076 = vpack.c.b16 %v928, %v924
    %v1077 = vpack.c.b16 %v929, %v925
    %v1078 = vpack.c.b16 %v930, %v926
    %v1079 = vpack.c.b16 %v935, %v931
    %v1080 = vpack.c.b16 %v936, %v932
    %v1081 = vpack.c.b16 %v937, %v933
    %v1082 = vpack.c.b16 %v938, %v934
    %v1083 = vpack.c.b16 %v943, %v939
    %v1084 = vpack.c.b16 %v944, %v940
    %v1085 = vpack.c.b16 %v945, %v941
    %v1086 = vpack.c.b16 %v946, %v942
    %v1087 = vpack.c.b16 %v951, %v947
    %v1088 = vpack.c.b16 %v952, %v948
    %v1089 = vpack.c.b16 %v953, %v949
    %v1090 = vpack.c.b16 %v954, %v950
    %v1091 = vpack.c.b16 %v959, %v955
    %v1092 = vpack.c.b16 %v960, %v956
    %v1093 = vpack.c.b16 %v961, %v957
    %v1094 = vpack.c.b16 %v962, %v958
    %v1095 = vpack.c.b16 %v967, %v963
    %v1096 = vpack.c.b16 %v968, %v964
    %v1097 = vpack.c.b16 %v969, %v965
    %v1098 = vpack.c.b16 %v970, %v966
    %1227 = vmatpush.bf16.msra.mxu0 %v999
    %1228 = vmatpush.bf16.msra.mxu0 %v995
    %1229 = vmatpush.bf16.msra.mxu0 %v991
    %1230 = vmatpush.bf16.msra.mxu0 %v987
    %1231 = vmatpush.bf16.msra.mxu0 %v983
    %1232 = vmatpush.bf16.msra.mxu0 %v979
    %1233 = vmatpush.bf16.msra.mxu0 %v975
    %1234 = vmatpush.bf16.msra.mxu0 %v971
    %1235 = vmatmul.bf16.gmra.mxu0 %v555
    %v1236 = vpop.f32.mrf.mxu0
    %v1237 = vadd.f32 0.0, %v1236
    %v1238 = vpop.f32.mrf.mxu0
    %v1239 = vadd.f32 0.0, %v1238
    %1240 = vmatmul.bf16.gmra.mxu0 %v559
    %v1241 = vpop.f32.mrf.mxu0
    %v1242 = vadd.f32 0.0, %v1241
    %v1243 = vpop.f32.mrf.mxu0
    %v1244 = vadd.f32 0.0, %v1243
    %1245 = vmatmul.bf16.gmra.mxu0 %v563
    %v1246 = vpop.f32.mrf.mxu0
    %v1247 = vadd.f32 0.0, %v1246
    %v1248 = vpop.f32.mrf.mxu0
    %v1249 = vadd.f32 0.0, %v1248
    %1250 = vmatmul.bf16.gmra.mxu0 %v567
    %v1251 = vpop.f32.mrf.mxu0
    %v1252 = vadd.f32 0.0, %v1251
    %v1253 = vpop.f32.mrf.mxu0
    %1254 = vdwg.mxu0
    %1255 = vmatpush.bf16.msra.mxu0 %v1031
    %1256 = vmatpush.bf16.msra.mxu0 %v1027
    %1257 = vmatpush.bf16.msra.mxu0 %v1023
    %1258 = vmatpush.bf16.msra.mxu0 %v1019
    %1259 = vmatpush.bf16.msra.mxu0 %v1015
    %1260 = vmatpush.bf16.msra.mxu0 %v1011
    %1261 = vmatpush.bf16.msra.mxu0 %v1007
    %1262 = vmatpush.bf16.msra.mxu0 %v1003
    %1263 = vmatmul.bf16.gmra.mxu0 %v556
    %v1264 = vpop.f32.mrf.mxu0
    %v1265 = vadd.f32 %v1237, %v1264
    %v1266 = vpop.f32.mrf.mxu0
    %v1267 = vadd.f32 %v1239, %v1266
    %1268 = vmatmul.bf16.gmra.mxu0 %v560
    %v1269 = vpop.f32.mrf.mxu0
    %v1270 = vadd.f32 %v1242, %v1269
    %v1271 = vpop.f32.mrf.mxu0
    %v1272 = vadd.f32 %v1244, %v1271
    %1273 = vmatmul.bf16.gmra.mxu0 %v564
    %v1274 = vpop.f32.mrf.mxu0
    %v1275 = vadd.f32 %v1247, %v1274
    %v1276 = vpop.f32.mrf.mxu0
    %v1277 = vadd.f32 %v1249, %v1276
    %1278 = vmatmul.bf16.gmra.mxu0 %v568
    %v1279 = vpop.f32.mrf.mxu0
    %v1280 = vadd.f32 %v1252, %v1279
    %v1281 = vpop.f32.mrf.mxu0
    %1282 = vdwg.mxu0
    %1283 = vmatpush.bf16.msra.mxu0 %v1063
    %1284 = vmatpush.bf16.msra.mxu0 %v1059
    %1285 = vmatpush.bf16.msra.mxu0 %v1055
    %1286 = vmatpush.bf16.msra.mxu0 %v1051
    %1287 = vmatpush.bf16.msra.mxu0 %v1047
    %1288 = vmatpush.bf16.msra.mxu0 %v1043
    %1289 = vmatpush.bf16.msra.mxu0 %v1039
    %1290 = vmatpush.bf16.msra.mxu0 %v1035
    %1291 = vmatmul.bf16.gmra.mxu0 %v557
    %v1292 = vpop.f32.mrf.mxu0
    %v1293 = vadd.f32 %v1265, %v1292
    %v1294 = vpop.f32.mrf.mxu0
    %v1295 = vadd.f32 %v1267, %v1294
    %1296 = vmatmul.bf16.gmra.mxu0 %v561
    %v1297 = vpop.f32.mrf.mxu0
    %v1298 = vadd.f32 %v1270, %v1297
    %v1299 = vpop.f32.mrf.mxu0
    %v1300 = vadd.f32 %v1272, %v1299
    %1301 = vmatmul.bf16.gmra.mxu0 %v565
    %v1302 = vpop.f32.mrf.mxu0
    %v1303 = vadd.f32 %v1275, %v1302
    %v1304 = vpop.f32.mrf.mxu0
    %v1305 = vadd.f32 %v1277, %v1304
    %1306 = vmatmul.bf16.gmra.mxu0 %v569
    %v1307 = vpop.f32.mrf.mxu0
    %v1308 = vadd.f32 %v1280, %v1307
    %v1309 = vpop.f32.mrf.mxu0
    %1310 = vdwg.mxu0
    %1311 = vmatpush.bf16.msra.mxu0 %v1095
    %1312 = vmatpush.bf16.msra.mxu0 %v1091
    %1313 = vmatpush.bf16.msra.mxu0 %v1087
    %1314 = vmatpush.bf16.msra.mxu0 %v1083
    %1315 = vmatpush.bf16.msra.mxu0 %v1079
    %1316 = vmatpush.bf16.msra.mxu0 %v1075
    %1317 = vmatpush.bf16.msra.mxu0 %v1071
    %1318 = vmatpush.bf16.msra.mxu0 %v1067
    %1319 = vmatmul.bf16.gmra.mxu0 %v558
    %v1320 = vpop.f32.mrf.mxu0
    %v1321 = vadd.f32 %v1293, %v1320
    %v1322 = vpop.f32.mrf.mxu0
    %v1323 = vadd.f32 %v1295, %v1322
    %1324 = vmatmul.bf16.gmra.mxu0 %v562
    %v1325 = vpop.f32.mrf.mxu0
    %v1326 = vadd.f32 %v1298, %v1325
    %v1327 = vpop.f32.mrf.mxu0
    %v1328 = vadd.f32 %v1300, %v1327
    %1329 = vmatmul.bf16.gmra.mxu0 %v566
    %v1330 = vpop.f32.mrf.mxu0
    %v1331 = vadd.f32 %v1303, %v1330
    %v1332 = vpop.f32.mrf.mxu0
    %v1333 = vadd.f32 %v1305, %v1332
    %1334 = vmatmul.bf16.gmra.mxu0 %v570
    %v1335 = vpop.f32.mrf.mxu0
    %v1336 = vadd.f32 %v1308, %v1335
    %v1337 = vpop.f32.mrf.mxu0
    %1338 = vdwg.mxu0
    %1339 = vmatpush.bf16.msra.mxu0 %v1000
    %1340 = vmatpush.bf16.msra.mxu0 %v996
    %1341 = vmatpush.bf16.msra.mxu0 %v992
    %1342 = vmatpush.bf16.msra.mxu0 %v988
    %1343 = vmatpush.bf16.msra.mxu0 %v984
    %1344 = vmatpush.bf16.msra.mxu0 %v980
    %1345 = vmatpush.bf16.msra.mxu0 %v976
    %1346 = vmatpush.bf16.msra.mxu0 %v972
    %1347 = vmatmul.bf16.gmra.mxu0 %v555
    %v1348 = vpop.f32.mrf.mxu0
    %v1349 = vadd.f32 0.0, %v1348
    %v1350 = vpop.f32.mrf.mxu0
    %v1351 = vadd.f32 0.0, %v1350
    %1352 = vmatmul.bf16.gmra.mxu0 %v559
    %v1353 = vpop.f32.mrf.mxu0
    %v1354 = vadd.f32 0.0, %v1353
    %v1355 = vpop.f32.mrf.mxu0
    %v1356 = vadd.f32 0.0, %v1355
    %1357 = vmatmul.bf16.gmra.mxu0 %v563
    %v1358 = vpop.f32.mrf.mxu0
    %v1359 = vadd.f32 0.0, %v1358
    %v1360 = vpop.f32.mrf.mxu0
    %v1361 = vadd.f32 0.0, %v1360
    %1362 = vmatmul.bf16.gmra.mxu0 %v567
    %v1363 = vpop.f32.mrf.mxu0
    %v1364 = vadd.f32 0.0, %v1363
    %v1365 = vpop.f32.mrf.mxu0
    %1366 = vdwg.mxu0
    %1367 = vmatpush.bf16.msra.mxu0 %v1032
    %1368 = vmatpush.bf16.msra.mxu0 %v1028
    %1369 = vmatpush.bf16.msra.mxu0 %v1024
    %1370 = vmatpush.bf16.msra.mxu0 %v1020
    %1371 = vmatpush.bf16.msra.mxu0 %v1016
    %1372 = vmatpush.bf16.msra.mxu0 %v1012
    %1373 = vmatpush.bf16.msra.mxu0 %v1008
    %1374 = vmatpush.bf16.msra.mxu0 %v1004
    %1375 = vmatmul.bf16.gmra.mxu0 %v556
    %v1376 = vpop.f32.mrf.mxu0
    %v1377 = vadd.f32 %v1349, %v1376
    %v1378 = vpop.f32.mrf.mxu0
    %v1379 = vadd.f32 %v1351, %v1378
    %1380 = vmatmul.bf16.gmra.mxu0 %v560
    %v1381 = vpop.f32.mrf.mxu0
    %v1382 = vadd.f32 %v1354, %v1381
    %v1383 = vpop.f32.mrf.mxu0
    %v1384 = vadd.f32 %v1356, %v1383
    %1385 = vmatmul.bf16.gmra.mxu0 %v564
    %v1386 = vpop.f32.mrf.mxu0
    %v1387 = vadd.f32 %v1359, %v1386
    %v1388 = vpop.f32.mrf.mxu0
    %v1389 = vadd.f32 %v1361, %v1388
    %1390 = vmatmul.bf16.gmra.mxu0 %v568
    %v1391 = vpop.f32.mrf.mxu0
    %v1392 = vadd.f32 %v1364, %v1391
    %v1393 = vpop.f32.mrf.mxu0
    %1394 = vdwg.mxu0
    %1395 = vmatpush.bf16.msra.mxu0 %v1064
    %1396 = vmatpush.bf16.msra.mxu0 %v1060
    %1397 = vmatpush.bf16.msra.mxu0 %v1056
    %1398 = vmatpush.bf16.msra.mxu0 %v1052
    %1399 = vmatpush.bf16.msra.mxu0 %v1048
    %1400 = vmatpush.bf16.msra.mxu0 %v1044
    %1401 = vmatpush.bf16.msra.mxu0 %v1040
    %1402 = vmatpush.bf16.msra.mxu0 %v1036
    %1403 = vmatmul.bf16.gmra.mxu0 %v557
    %v1404 = vpop.f32.mrf.mxu0
    %v1405 = vadd.f32 %v1377, %v1404
    %v1406 = vpop.f32.mrf.mxu0
    %v1407 = vadd.f32 %v1379, %v1406
    %1408 = vmatmul.bf16.gmra.mxu0 %v561
    %v1409 = vpop.f32.mrf.mxu0
    %v1410 = vadd.f32 %v1382, %v1409
    %v1411 = vpop.f32.mrf.mxu0
    %v1412 = vadd.f32 %v1384, %v1411
    %1413 = vmatmul.bf16.gmra.mxu0 %v565
    %v1414 = vpop.f32.mrf.mxu0
    %v1415 = vadd.f32 %v1387, %v1414
    %v1416 = vpop.f32.mrf.mxu0
    %v1417 = vadd.f32 %v1389, %v1416
    %1418 = vmatmul.bf16.gmra.mxu0 %v569
    %v1419 = vpop.f32.mrf.mxu0
    %v1420 = vadd.f32 %v1392, %v1419
    %v1421 = vpop.f32.mrf.mxu0
    %1422 = vdwg.mxu0
    %1423 = vmatpush.bf16.msra.mxu0 %v1096
    %1424 = vmatpush.bf16.msra.mxu0 %v1092
    %1425 = vmatpush.bf16.msra.mxu0 %v1088
    %1426 = vmatpush.bf16.msra.mxu0 %v1084
    %1427 = vmatpush.bf16.msra.mxu0 %v1080
    %1428 = vmatpush.bf16.msra.mxu0 %v1076
    %1429 = vmatpush.bf16.msra.mxu0 %v1072
    %1430 = vmatpush.bf16.msra.mxu0 %v1068
    %1431 = vmatmul.bf16.gmra.mxu0 %v558
    %v1432 = vpop.f32.mrf.mxu0
    %v1433 = vadd.f32 %v1405, %v1432
    %v1434 = vpop.f32.mrf.mxu0
    %v1435 = vadd.f32 %v1407, %v1434
    %1436 = vmatmul.bf16.gmra.mxu0 %v562
    %v1437 = vpop.f32.mrf.mxu0
    %v1438 = vadd.f32 %v1410, %v1437
    %v1439 = vpop.f32.mrf.mxu0
    %v1440 = vadd.f32 %v1412, %v1439
    %1441 = vmatmul.bf16.gmra.mxu0 %v566
    %v1442 = vpop.f32.mrf.mxu0
    %v1443 = vadd.f32 %v1415, %v1442
    %v1444 = vpop.f32.mrf.mxu0
    %v1445 = vadd.f32 %v1417, %v1444
    %1446 = vmatmul.bf16.gmra.mxu0 %v570
    %v1447 = vpop.f32.mrf.mxu0
    %v1448 = vadd.f32 %v1420, %v1447
    %v1449 = vpop.f32.mrf.mxu0
    %1450 = vdwg.mxu0
    %1451 = vmatpush.bf16.msra.mxu0 %v1001
    %1452 = vmatpush.bf16.msra.mxu0 %v997
    %1453 = vmatpush.bf16.msra.mxu0 %v993
    %1454 = vmatpush.bf16.msra.mxu0 %v989
    %1455 = vmatpush.bf16.msra.mxu0 %v985
    %1456 = vmatpush.bf16.msra.mxu0 %v981
    %1457 = vmatpush.bf16.msra.mxu0 %v977
    %1458 = vmatpush.bf16.msra.mxu0 %v973
    %1459 = vmatmul.bf16.gmra.mxu0 %v555
    %v1460 = vpop.f32.mrf.mxu0
    %v1461 = vadd.f32 0.0, %v1460
    %v1462 = vpop.f32.mrf.mxu0
    %v1463 = vadd.f32 0.0, %v1462
    %1464 = vmatmul.bf16.gmra.mxu0 %v559
    %v1465 = vpop.f32.mrf.mxu0
    %v1466 = vadd.f32 0.0, %v1465
    %v1467 = vpop.f32.mrf.mxu0
    %v1468 = vadd.f32 0.0, %v1467
    %1469 = vmatmul.bf16.gmra.mxu0 %v563
    %v1470 = vpop.f32.mrf.mxu0
    %v1471 = vadd.f32 0.0, %v1470
    %v1472 = vpop.f32.mrf.mxu0
    %v1473 = vadd.f32 0.0, %v1472
    %1474 = vmatmul.bf16.gmra.mxu0 %v567
    %v1475 = vpop.f32.mrf.mxu0
    %v1476 = vadd.f32 0.0, %v1475
    %v1477 = vpop.f32.mrf.mxu0
    %1478 = vdwg.mxu0
    %1479 = vmatpush.bf16.msra.mxu0 %v1033
    %1480 = vmatpush.bf16.msra.mxu0 %v1029
    %1481 = vmatpush.bf16.msra.mxu0 %v1025
    %1482 = vmatpush.bf16.msra.mxu0 %v1021
    %1483 = vmatpush.bf16.msra.mxu0 %v1017
    %1484 = vmatpush.bf16.msra.mxu0 %v1013
    %1485 = vmatpush.bf16.msra.mxu0 %v1009
    %1486 = vmatpush.bf16.msra.mxu0 %v1005
    %1487 = vmatmul.bf16.gmra.mxu0 %v556
    %v1488 = vpop.f32.mrf.mxu0
    %v1489 = vadd.f32 %v1461, %v1488
    %v1490 = vpop.f32.mrf.mxu0
    %v1491 = vadd.f32 %v1463, %v1490
    %1492 = vmatmul.bf16.gmra.mxu0 %v560
    %v1493 = vpop.f32.mrf.mxu0
    %v1494 = vadd.f32 %v1466, %v1493
    %v1495 = vpop.f32.mrf.mxu0
    %v1496 = vadd.f32 %v1468, %v1495
    %1497 = vmatmul.bf16.gmra.mxu0 %v564
    %v1498 = vpop.f32.mrf.mxu0
    %v1499 = vadd.f32 %v1471, %v1498
    %v1500 = vpop.f32.mrf.mxu0
    %v1501 = vadd.f32 %v1473, %v1500
    %1502 = vmatmul.bf16.gmra.mxu0 %v568
    %v1503 = vpop.f32.mrf.mxu0
    %v1504 = vadd.f32 %v1476, %v1503
    %v1505 = vpop.f32.mrf.mxu0
    %1506 = vdwg.mxu0
    %1507 = vmatpush.bf16.msra.mxu0 %v1065
    %1508 = vmatpush.bf16.msra.mxu0 %v1061
    %1509 = vmatpush.bf16.msra.mxu0 %v1057
    %1510 = vmatpush.bf16.msra.mxu0 %v1053
    %1511 = vmatpush.bf16.msra.mxu0 %v1049
    %1512 = vmatpush.bf16.msra.mxu0 %v1045
    %1513 = vmatpush.bf16.msra.mxu0 %v1041
    %1514 = vmatpush.bf16.msra.mxu0 %v1037
    %1515 = vmatmul.bf16.gmra.mxu0 %v557
    %v1516 = vpop.f32.mrf.mxu0
    %v1517 = vadd.f32 %v1489, %v1516
    %v1518 = vpop.f32.mrf.mxu0
    %v1519 = vadd.f32 %v1491, %v1518
    %1520 = vmatmul.bf16.gmra.mxu0 %v561
    %v1521 = vpop.f32.mrf.mxu0
    %v1522 = vadd.f32 %v1494, %v1521
    %v1523 = vpop.f32.mrf.mxu0
    %v1524 = vadd.f32 %v1496, %v1523
    %1525 = vmatmul.bf16.gmra.mxu0 %v565
    %v1526 = vpop.f32.mrf.mxu0
    %v1527 = vadd.f32 %v1499, %v1526
    %v1528 = vpop.f32.mrf.mxu0
    %v1529 = vadd.f32 %v1501, %v1528
    %1530 = vmatmul.bf16.gmra.mxu0 %v569
    %v1531 = vpop.f32.mrf.mxu0
    %v1532 = vadd.f32 %v1504, %v1531
    %v1533 = vpop.f32.mrf.mxu0
    %1534 = vdwg.mxu0
    %1535 = vmatpush.bf16.msra.mxu0 %v1097
    %1536 = vmatpush.bf16.msra.mxu0 %v1093
    %1537 = vmatpush.bf16.msra.mxu0 %v1089
    %1538 = vmatpush.bf16.msra.mxu0 %v1085
    %1539 = vmatpush.bf16.msra.mxu0 %v1081
    %1540 = vmatpush.bf16.msra.mxu0 %v1077
    %1541 = vmatpush.bf16.msra.mxu0 %v1073
    %1542 = vmatpush.bf16.msra.mxu0 %v1069
    %1543 = vmatmul.bf16.gmra.mxu0 %v558
    %v1544 = vpop.f32.mrf.mxu0
    %v1545 = vadd.f32 %v1517, %v1544
    %v1546 = vpop.f32.mrf.mxu0
    %v1547 = vadd.f32 %v1519, %v1546
    %1548 = vmatmul.bf16.gmra.mxu0 %v562
    %v1549 = vpop.f32.mrf.mxu0
    %v1550 = vadd.f32 %v1522, %v1549
    %v1551 = vpop.f32.mrf.mxu0
    %v1552 = vadd.f32 %v1524, %v1551
    %1553 = vmatmul.bf16.gmra.mxu0 %v566
    %v1554 = vpop.f32.mrf.mxu0
    %v1555 = vadd.f32 %v1527, %v1554
    %v1556 = vpop.f32.mrf.mxu0
    %v1557 = vadd.f32 %v1529, %v1556
    %1558 = vmatmul.bf16.gmra.mxu0 %v570
    %v1559 = vpop.f32.mrf.mxu0
    %v1560 = vadd.f32 %v1532, %v1559
    %v1561 = vpop.f32.mrf.mxu0
    %1562 = vdwg.mxu0
    %1563 = vmatpush.bf16.msra.mxu0 %v1002
    %1564 = vmatpush.bf16.msra.mxu0 %v998
    %1565 = vmatpush.bf16.msra.mxu0 %v994
    %1566 = vmatpush.bf16.msra.mxu0 %v990
    %1567 = vmatpush.bf16.msra.mxu0 %v986
    %1568 = vmatpush.bf16.msra.mxu0 %v982
    %1569 = vmatpush.bf16.msra.mxu0 %v978
    %1570 = vmatpush.bf16.msra.mxu0 %v974
    %1571 = vmatmul.bf16.gmra.mxu0 %v555
    %v1572 = vpop.f32.mrf.mxu0
    %v1573 = vadd.f32 0.0, %v1572
    %v1574 = vpop.f32.mrf.mxu0
    %v1575 = vadd.f32 0.0, %v1574
    %1576 = vmatmul.bf16.gmra.mxu0 %v559
    %v1577 = vpop.f32.mrf.mxu0
    %v1578 = vadd.f32 0.0, %v1577
    %v1579 = vpop.f32.mrf.mxu0
    %v1580 = vadd.f32 0.0, %v1579
    %1581 = vmatmul.bf16.gmra.mxu0 %v563
    %v1582 = vpop.f32.mrf.mxu0
    %v1583 = vadd.f32 0.0, %v1582
    %v1584 = vpop.f32.mrf.mxu0
    %v1585 = vadd.f32 0.0, %v1584
    %1586 = vmatmul.bf16.gmra.mxu0 %v567
    %v1587 = vpop.f32.mrf.mxu0
    %v1588 = vadd.f32 0.0, %v1587
    %v1589 = vpop.f32.mrf.mxu0
    %1590 = vdwg.mxu0
    %1591 = vmatpush.bf16.msra.mxu0 %v1034
    %1592 = vmatpush.bf16.msra.mxu0 %v1030
    %1593 = vmatpush.bf16.msra.mxu0 %v1026
    %1594 = vmatpush.bf16.msra.mxu0 %v1022
    %1595 = vmatpush.bf16.msra.mxu0 %v1018
    %1596 = vmatpush.bf16.msra.mxu0 %v1014
    %1597 = vmatpush.bf16.msra.mxu0 %v1010
    %1598 = vmatpush.bf16.msra.mxu0 %v1006
    %1599 = vmatmul.bf16.gmra.mxu0 %v556
    %v1600 = vpop.f32.mrf.mxu0
    %v1601 = vadd.f32 %v1573, %v1600
    %v1602 = vpop.f32.mrf.mxu0
    %v1603 = vadd.f32 %v1575, %v1602
    %1604 = vmatmul.bf16.gmra.mxu0 %v560
    %v1605 = vpop.f32.mrf.mxu0
    %v1606 = vadd.f32 %v1578, %v1605
    %v1607 = vpop.f32.mrf.mxu0
    %v1608 = vadd.f32 %v1580, %v1607
    %1609 = vmatmul.bf16.gmra.mxu0 %v564
    %v1610 = vpop.f32.mrf.mxu0
    %v1611 = vadd.f32 %v1583, %v1610
    %v1612 = vpop.f32.mrf.mxu0
    %v1613 = vadd.f32 %v1585, %v1612
    %1614 = vmatmul.bf16.gmra.mxu0 %v568
    %v1615 = vpop.f32.mrf.mxu0
    %v1616 = vadd.f32 %v1588, %v1615
    %v1617 = vpop.f32.mrf.mxu0
    %1618 = vdwg.mxu0
    %1619 = vmatpush.bf16.msra.mxu0 %v1066
    %1620 = vmatpush.bf16.msra.mxu0 %v1062
    %1621 = vmatpush.bf16.msra.mxu0 %v1058
    %1622 = vmatpush.bf16.msra.mxu0 %v1054
    %1623 = vmatpush.bf16.msra.mxu0 %v1050
    %1624 = vmatpush.bf16.msra.mxu0 %v1046
    %1625 = vmatpush.bf16.msra.mxu0 %v1042
    %1626 = vmatpush.bf16.msra.mxu0 %v1038
    %1627 = vmatmul.bf16.gmra.mxu0 %v557
    %v1628 = vpop.f32.mrf.mxu0
    %v1629 = vadd.f32 %v1601, %v1628
    %v1630 = vpop.f32.mrf.mxu0
    %v1631 = vadd.f32 %v1603, %v1630
    %1632 = vmatmul.bf16.gmra.mxu0 %v561
    %v1633 = vpop.f32.mrf.mxu0
    %v1634 = vadd.f32 %v1606, %v1633
    %v1635 = vpop.f32.mrf.mxu0
    %v1636 = vadd.f32 %v1608, %v1635
    %1637 = vmatmul.bf16.gmra.mxu0 %v565
    %v1638 = vpop.f32.mrf.mxu0
    %v1639 = vadd.f32 %v1611, %v1638
    %v1640 = vpop.f32.mrf.mxu0
    %v1641 = vadd.f32 %v1613, %v1640
    %1642 = vmatmul.bf16.gmra.mxu0 %v569
    %v1643 = vpop.f32.mrf.mxu0
    %v1644 = vadd.f32 %v1616, %v1643
    %v1645 = vpop.f32.mrf.mxu0
    %1646 = vdwg.mxu0
    %1647 = vmatpush.bf16.msra.mxu0 %v1098
    %1648 = vmatpush.bf16.msra.mxu0 %v1094
    %1649 = vmatpush.bf16.msra.mxu0 %v1090
    %1650 = vmatpush.bf16.msra.mxu0 %v1086
    %1651 = vmatpush.bf16.msra.mxu0 %v1082
    %1652 = vmatpush.bf16.msra.mxu0 %v1078
    %1653 = vmatpush.bf16.msra.mxu0 %v1074
    %1654 = vmatpush.bf16.msra.mxu0 %v1070
    %1655 = vmatmul.bf16.gmra.mxu0 %v558
    %v1656 = vpop.f32.mrf.mxu0
    %v1657 = vadd.f32 %v1629, %v1656
    %v1658 = vpop.f32.mrf.mxu0
    %v1659 = vadd.f32 %v1631, %v1658
    %1660 = vmatmul.bf16.gmra.mxu0 %v562
    %v1661 = vpop.f32.mrf.mxu0
    %v1662 = vadd.f32 %v1634, %v1661
    %v1663 = vpop.f32.mrf.mxu0
    %v1664 = vadd.f32 %v1636, %v1663
    %1665 = vmatmul.bf16.gmra.mxu0 %v566
    %v1666 = vpop.f32.mrf.mxu0
    %v1667 = vadd.f32 %v1639, %v1666
    %v1668 = vpop.f32.mrf.mxu0
    %v1669 = vadd.f32 %v1641, %v1668
    %1670 = vmatmul.bf16.gmra.mxu0 %v570
    %v1671 = vpop.f32.mrf.mxu0
    %v1672 = vadd.f32 %v1644, %v1671
    %v1673 = vpop.f32.mrf.mxu0
    %1674 = vdwg.mxu0
    %v1689 = vunpack.c.l.b16 %v44
    %v1690 = vunpack.c.h.b16 %v44
    %v1691 = vunpack.c.l.b16 %v45
    %v1692 = vunpack.c.h.b16 %v45
    %v1693 = vunpack.c.l.b16 %v48
    %v1694 = vunpack.c.h.b16 %v48
    %v1695 = vunpack.c.l.b16 %v49
    %v1696 = vunpack.c.h.b16 %v49
    %v1697 = vunpack.c.l.b16 %v52
    %v1698 = vunpack.c.h.b16 %v52
    %v1699 = vunpack.c.l.b16 %v53
    %v1700 = vunpack.c.h.b16 %v53
    %v1701 = vunpack.c.l.b16 %v56
    %v1702 = vunpack.c.h.b16 %v56
    %v1703 = vunpack.c.l.b16 %v57
    %v1704 = vunpack.c.h.b16 %v57
    %v1705 = vunpack.c.l.b16 %v60
    %v1706 = vunpack.c.h.b16 %v60
    %v1707 = vunpack.c.l.b16 %v61
    %v1708 = vunpack.c.h.b16 %v61
    %v1709 = vunpack.c.l.b16 %v64
    %v1710 = vunpack.c.h.b16 %v64
    %v1711 = vunpack.c.l.b16 %v65
    %v1712 = vunpack.c.h.b16 %v65
    %v1713 = vunpack.c.l.b16 %v68
    %v1714 = vunpack.c.h.b16 %v68
    %v1715 = vunpack.c.l.b16 %v69
    %v1716 = vunpack.c.h.b16 %v69
    %v1717 = vpack.c.b16 %v1693, %v1689
    %v1718 = vpack.c.b16 %v1694, %v1690
    %v1719 = vpack.c.b16 %v1695, %v1691
    %v1720 = vpack.c.b16 %v1696, %v1692
    %v1721 = vpack.c.b16 %v1701, %v1697
    %v1722 = vpack.c.b16 %v1702, %v1698
    %v1723 = vpack.c.b16 %v1703, %v1699
    %v1724 = vpack.c.b16 %v1704, %v1700
    %v1725 = vpack.c.b16 %v1709, %v1705
    %v1726 = vpack.c.b16 %v1710, %v1706
    %v1727 = vpack.c.b16 %v1711, %v1707
    %v1728 = vpack.c.b16 %v1712, %v1708
    %v1729 = vpack.c.b16 %v1713, %v1713
    %v1730 = vpack.c.b16 %v1714, %v1714
    %v1731 = vpack.c.b16 %v1715, %v1715
    %v1732 = vpack.c.b16 %v1716, %v1716
    %v1877 = vunpack.c.l.b16 %v72
    %v1878 = vunpack.c.h.b16 %v72
    %v1879 = vunpack.c.l.b16 %v73
    %v1880 = vunpack.c.h.b16 %v73
    %v1881 = vunpack.c.l.b16 %v74
    %v1882 = vunpack.c.h.b16 %v74
    %v1883 = vunpack.c.l.b16 %v75
    %v1884 = vunpack.c.h.b16 %v75
    %v1885 = vunpack.c.l.b16 %v76
    %v1886 = vunpack.c.h.b16 %v76
    %v1887 = vunpack.c.l.b16 %v77
    %v1888 = vunpack.c.h.b16 %v77
    %v1889 = vunpack.c.l.b16 %v78
    %v1890 = vunpack.c.h.b16 %v78
    %v1891 = vunpack.c.l.b16 %v79
    %v1892 = vunpack.c.h.b16 %v79
    %v1893 = vunpack.c.l.b16 %v80
    %v1894 = vunpack.c.h.b16 %v80
    %v1895 = vunpack.c.l.b16 %v81
    %v1896 = vunpack.c.h.b16 %v81
    %v1897 = vunpack.c.l.b16 %v82
    %v1898 = vunpack.c.h.b16 %v82
    %v1899 = vunpack.c.l.b16 %v83
    %v1900 = vunpack.c.h.b16 %v83
    %v1901 = vunpack.c.l.b16 %v84
    %v1902 = vunpack.c.h.b16 %v84
    %v1903 = vunpack.c.l.b16 %v85
    %v1904 = vunpack.c.h.b16 %v85
    %v1905 = vunpack.c.l.b16 %v86
    %v1906 = vunpack.c.h.b16 %v86
    %v1907 = vunpack.c.l.b16 %v87
    %v1908 = vunpack.c.h.b16 %v87
    %v1909 = vunpack.c.l.b16 %v88
    %v1910 = vunpack.c.h.b16 %v88
    %v1911 = vunpack.c.l.b16 %v89
    %v1912 = vunpack.c.h.b16 %v89
    %v1913 = vunpack.c.l.b16 %v90
    %v1914 = vunpack.c.h.b16 %v90
    %v1915 = vunpack.c.l.b16 %v91
    %v1916 = vunpack.c.h.b16 %v91
    %v1917 = vunpack.c.l.b16 %v92
    %v1918 = vunpack.c.h.b16 %v92
    %v1919 = vunpack.c.l.b16 %v93
    %v1920 = vunpack.c.h.b16 %v93
    %v1921 = vunpack.c.l.b16 %v94
    %v1922 = vunpack.c.h.b16 %v94
    %v1923 = vunpack.c.l.b16 %v95
    %v1924 = vunpack.c.h.b16 %v95
    %v1925 = vunpack.c.l.b16 %v96
    %v1926 = vunpack.c.h.b16 %v96
    %v1927 = vunpack.c.l.b16 %v97
    %v1928 = vunpack.c.h.b16 %v97
    %v1929 = vunpack.c.l.b16 %v98
    %v1930 = vunpack.c.h.b16 %v98
    %v1931 = vunpack.c.l.b16 %v99
    %v1932 = vunpack.c.h.b16 %v99
    %v1933 = vunpack.c.l.b16 %v100
    %v1934 = vunpack.c.h.b16 %v100
    %v1935 = vunpack.c.l.b16 %v101
    %v1936 = vunpack.c.h.b16 %v101
    %v1937 = vunpack.c.l.b16 %v102
    %v1938 = vunpack.c.h.b16 %v102
    %v1939 = vunpack.c.l.b16 %v103
    %v1940 = vunpack.c.h.b16 %v103
    %v1941 = vunpack.c.l.b16 %v104
    %v1942 = vunpack.c.h.b16 %v104
    %v1943 = vunpack.c.l.b16 %v105
    %v1944 = vunpack.c.h.b16 %v105
    %v1945 = vunpack.c.l.b16 %v106
    %v1946 = vunpack.c.h.b16 %v106
    %v1947 = vunpack.c.l.b16 %v107
    %v1948 = vunpack.c.h.b16 %v107
    %v1949 = vunpack.c.l.b16 %v108
    %v1950 = vunpack.c.h.b16 %v108
    %v1951 = vunpack.c.l.b16 %v109
    %v1952 = vunpack.c.h.b16 %v109
    %v1953 = vunpack.c.l.b16 %v110
    %v1954 = vunpack.c.h.b16 %v110
    %v1955 = vunpack.c.l.b16 %v111
    %v1956 = vunpack.c.h.b16 %v111
    %v1957 = vunpack.c.l.b16 %v112
    %v1958 = vunpack.c.h.b16 %v112
    %v1959 = vunpack.c.l.b16 %v113
    %v1960 = vunpack.c.h.b16 %v113
    %v1961 = vunpack.c.l.b16 %v114
    %v1962 = vunpack.c.h.b16 %v114
    %v1963 = vunpack.c.l.b16 %v115
    %v1964 = vunpack.c.h.b16 %v115
    %v1965 = vunpack.c.l.b16 %v116
    %v1966 = vunpack.c.h.b16 %v116
    %v1967 = vunpack.c.l.b16 %v117
    %v1968 = vunpack.c.h.b16 %v117
    %v1969 = vunpack.c.l.b16 %v118
    %v1970 = vunpack.c.h.b16 %v118
    %v1971 = vunpack.c.l.b16 %v119
    %v1972 = vunpack.c.h.b16 %v119
    %v1973 = vunpack.c.l.b16 %v120
    %v1974 = vunpack.c.h.b16 %v120
    %v1975 = vunpack.c.l.b16 %v121
    %v1976 = vunpack.c.h.b16 %v121
    %v1977 = vunpack.c.l.b16 %v122
    %v1978 = vunpack.c.h.b16 %v122
    %v1979 = vunpack.c.l.b16 %v123
    %v1980 = vunpack.c.h.b16 %v123
    %v1981 = vunpack.c.l.b16 %v124
    %v1982 = vunpack.c.h.b16 %v124
    %v1983 = vunpack.c.l.b16 %v125
    %v1984 = vunpack.c.h.b16 %v125
    %v1985 = vunpack.c.l.b16 %v126
    %v1986 = vunpack.c.h.b16 %v126
    %v1987 = vunpack.c.l.b16 %v127
    %v1988 = vunpack.c.h.b16 %v127
    %v1989 = vunpack.c.l.b16 %v128
    %v1990 = vunpack.c.h.b16 %v128
    %v1991 = vunpack.c.l.b16 %v129
    %v1992 = vunpack.c.h.b16 %v129
    %v1993 = vunpack.c.l.b16 %v130
    %v1994 = vunpack.c.h.b16 %v130
    %v1995 = vunpack.c.l.b16 %v131
    %v1996 = vunpack.c.h.b16 %v131
    %v1997 = vunpack.c.l.b16 %v132
    %v1998 = vunpack.c.h.b16 %v132
    %v1999 = vunpack.c.l.b16 %v133
    %v2000 = vunpack.c.h.b16 %v133
    %v2001 = vunpack.c.l.b16 %v134
    %v2002 = vunpack.c.h.b16 %v134
    %v2003 = vunpack.c.l.b16 %v135
    %v2004 = vunpack.c.h.b16 %v135
    %v2005 = vunpack.c.l.b16 %v136
    %v2006 = vunpack.c.h.b16 %v136
    %v2007 = vunpack.c.l.b16 %v137
    %v2008 = vunpack.c.h.b16 %v137
    %v2009 = vunpack.c.l.b16 %v138
    %v2010 = vunpack.c.h.b16 %v138
    %v2011 = vunpack.c.l.b16 %v139
    %v2012 = vunpack.c.h.b16 %v139
    %v2013 = vunpack.c.l.b16 %v140
    %v2014 = vunpack.c.h.b16 %v140
    %v2015 = vunpack.c.l.b16 %v141
    %v2016 = vunpack.c.h.b16 %v141
    %v2017 = vunpack.c.l.b16 %v142
    %v2018 = vunpack.c.h.b16 %v142
    %v2019 = vunpack.c.l.b16 %v143
    %v2020 = vunpack.c.h.b16 %v143
    %v2021 = vunpack.c.l.b16 %v144
    %v2022 = vunpack.c.h.b16 %v144
    %v2023 = vunpack.c.l.b16 %v145
    %v2024 = vunpack.c.h.b16 %v145
    %v2025 = vunpack.c.l.b16 %v146
    %v2026 = vunpack.c.h.b16 %v146
    %v2027 = vunpack.c.l.b16 %v147
    %v2028 = vunpack.c.h.b16 %v147
    %v2029 = vunpack.c.l.b16 %v148
    %v2030 = vunpack.c.h.b16 %v148
    %v2031 = vunpack.c.l.b16 %v149
    %v2032 = vunpack.c.h.b16 %v149
    %v2033 = vunpack.c.l.b16 %v150
    %v2034 = vunpack.c.h.b16 %v150
    %v2035 = vunpack.c.l.b16 %v151
    %v2036 = vunpack.c.h.b16 %v151
    %v2037 = vunpack.c.l.b16 %v152
    %v2038 = vunpack.c.h.b16 %v152
    %v2039 = vunpack.c.l.b16 %v153
    %v2040 = vunpack.c.h.b16 %v153
    %v2041 = vunpack.c.l.b16 %v154
    %v2042 = vunpack.c.h.b16 %v154
    %v2043 = vunpack.c.l.b16 %v155
    %v2044 = vunpack.c.h.b16 %v155
    %v2045 = vunpack.c.l.b16 %v156
    %v2046 = vunpack.c.h.b16 %v156
    %v2047 = vunpack.c.l.b16 %v157
    %v2048 = vunpack.c.h.b16 %v157
    %v2049 = vunpack.c.l.b16 %v158
    %v2050 = vunpack.c.h.b16 %v158
    %v2051 = vunpack.c.l.b16 %v159
    %v2052 = vunpack.c.h.b16 %v159
    %v2053 = vunpack.c.l.b16 %v160
    %v2054 = vunpack.c.h.b16 %v160
    %v2055 = vunpack.c.l.b16 %v161
    %v2056 = vunpack.c.h.b16 %v161
    %v2057 = vunpack.c.l.b16 %v162
    %v2058 = vunpack.c.h.b16 %v162
    %v2059 = vunpack.c.l.b16 %v163
    %v2060 = vunpack.c.h.b16 %v163
    %v2061 = vunpack.c.l.b16 %v164
    %v2062 = vunpack.c.h.b16 %v164
    %v2063 = vunpack.c.l.b16 %v165
    %v2064 = vunpack.c.h.b16 %v165
    %v2065 = vunpack.c.l.b16 %v166
    %v2066 = vunpack.c.h.b16 %v166
    %v2067 = vunpack.c.l.b16 %v167
    %v2068 = vunpack.c.h.b16 %v167
    %v2069 = vunpack.c.l.b16 %v168
    %v2070 = vunpack.c.h.b16 %v168
    %v2071 = vunpack.c.l.b16 %v169
    %v2072 = vunpack.c.h.b16 %v169
    %v2073 = vunpack.c.l.b16 %v170
    %v2074 = vunpack.c.h.b16 %v170
    %v2075 = vunpack.c.l.b16 %v171
    %v2076 = vunpack.c.h.b16 %v171
    %v2077 = vunpack.c.l.b16 %v172
    %v2078 = vunpack.c.h.b16 %v172
    %v2079 = vunpack.c.l.b16 %v173
    %v2080 = vunpack.c.h.b16 %v173
    %v2081 = vunpack.c.l.b16 %v174
    %v2082 = vunpack.c.h.b16 %v174
    %v2083 = vunpack.c.l.b16 %v175
    %v2084 = vunpack.c.h.b16 %v175
    %v2085 = vunpack.c.l.b16 %v176
    %v2086 = vunpack.c.h.b16 %v176
    %v2087 = vunpack.c.l.b16 %v177
    %v2088 = vunpack.c.h.b16 %v177
    %v2089 = vunpack.c.l.b16 %v178
    %v2090 = vunpack.c.h.b16 %v178
    %v2091 = vunpack.c.l.b16 %v179
    %v2092 = vunpack.c.h.b16 %v179
    %v2093 = vunpack.c.l.b16 %v180
    %v2094 = vunpack.c.h.b16 %v180
    %v2095 = vunpack.c.l.b16 %v181
    %v2096 = vunpack.c.h.b16 %v181
    %v2097 = vunpack.c.l.b16 %v182
    %v2098 = vunpack.c.h.b16 %v182
    %v2099 = vunpack.c.l.b16 %v183
    %v2100 = vunpack.c.h.b16 %v183
    %v2101 = vunpack.c.l.b16 %v184
    %v2102 = vunpack.c.h.b16 %v184
    %v2103 = vunpack.c.l.b16 %v185
    %v2104 = vunpack.c.h.b16 %v185
    %v2105 = vunpack.c.l.b16 %v186
    %v2106 = vunpack.c.h.b16 %v186
    %v2107 = vunpack.c.l.b16 %v187
    %v2108 = vunpack.c.h.b16 %v187
    %v2109 = vunpack.c.l.b16 %v188
    %v2110 = vunpack.c.h.b16 %v188
    %v2111 = vunpack.c.l.b16 %v189
    %v2112 = vunpack.c.h.b16 %v189
    %v2113 = vunpack.c.l.b16 %v190
    %v2114 = vunpack.c.h.b16 %v190
    %v2115 = vunpack.c.l.b16 %v191
    %v2116 = vunpack.c.h.b16 %v191
    %v2117 = vunpack.c.l.b16 %v192
    %v2118 = vunpack.c.h.b16 %v192
    %v2119 = vunpack.c.l.b16 %v193
    %v2120 = vunpack.c.h.b16 %v193
    %v2121 = vunpack.c.l.b16 %v194
    %v2122 = vunpack.c.h.b16 %v194
    %v2123 = vunpack.c.l.b16 %v195
    %v2124 = vunpack.c.h.b16 %v195
    %v2125 = vunpack.c.l.b16 %v196
    %v2126 = vunpack.c.h.b16 %v196
    %v2127 = vunpack.c.l.b16 %v197
    %v2128 = vunpack.c.h.b16 %v197
    %v2129 = vunpack.c.l.b16 %v198
    %v2130 = vunpack.c.h.b16 %v198
    %v2131 = vunpack.c.l.b16 %v199
    %v2132 = vunpack.c.h.b16 %v199
    %v2133 = vpack.c.b16 %v1881, %v1877
    %v2134 = vpack.c.b16 %v1882, %v1878
    %v2135 = vpack.c.b16 %v1883, %v1879
    %v2136 = vpack.c.b16 %v1884, %v1880
    %v2137 = vpack.c.b16 %v1889, %v1885
    %v2138 = vpack.c.b16 %v1890, %v1886
    %v2139 = vpack.c.b16 %v1891, %v1887
    %v2140 = vpack.c.b16 %v1892, %v1888
    %v2141 = vpack.c.b16 %v1897, %v1893
    %v2142 = vpack.c.b16 %v1898, %v1894
    %v2143 = vpack.c.b16 %v1899, %v1895
    %v2144 = vpack.c.b16 %v1900, %v1896
    %v2145 = vpack.c.b16 %v1905, %v1901
    %v2146 = vpack.c.b16 %v1906, %v1902
    %v2147 = vpack.c.b16 %v1907, %v1903
    %v2148 = vpack.c.b16 %v1908, %v1904
    %v2149 = vpack.c.b16 %v1913, %v1909
    %v2150 = vpack.c.b16 %v1914, %v1910
    %v2151 = vpack.c.b16 %v1915, %v1911
    %v2152 = vpack.c.b16 %v1916, %v1912
    %v2153 = vpack.c.b16 %v1921, %v1917
    %v2154 = vpack.c.b16 %v1922, %v1918
    %v2155 = vpack.c.b16 %v1923, %v1919
    %v2156 = vpack.c.b16 %v1924, %v1920
    %v2157 = vpack.c.b16 %v1929, %v1925
    %v2158 = vpack.c.b16 %v1930, %v1926
    %v2159 = vpack.c.b16 %v1931, %v1927
    %v2160 = vpack.c.b16 %v1932, %v1928
    %v2161 = vpack.c.b16 %v1937, %v1933
    %v2162 = vpack.c.b16 %v1938, %v1934
    %v2163 = vpack.c.b16 %v1939, %v1935
    %v2164 = vpack.c.b16 %v1940, %v1936
    %v2165 = vpack.c.b16 %v1945, %v1941
    %v2166 = vpack.c.b16 %v1946, %v1942
    %v2167 = vpack.c.b16 %v1947, %v1943
    %v2168 = vpack.c.b16 %v1948, %v1944
    %v2169 = vpack.c.b16 %v1953, %v1949
    %v2170 = vpack.c.b16 %v1954, %v1950
    %v2171 = vpack.c.b16 %v1955, %v1951
    %v2172 = vpack.c.b16 %v1956, %v1952
    %v2173 = vpack.c.b16 %v1961, %v1957
    %v2174 = vpack.c.b16 %v1962, %v1958
    %v2175 = vpack.c.b16 %v1963, %v1959
    %v2176 = vpack.c.b16 %v1964, %v1960
    %v2177 = vpack.c.b16 %v1969, %v1965
    %v2178 = vpack.c.b16 %v1970, %v1966
    %v2179 = vpack.c.b16 %v1971, %v1967
    %v2180 = vpack.c.b16 %v1972, %v1968
    %v2181 = vpack.c.b16 %v1977, %v1973
    %v2182 = vpack.c.b16 %v1978, %v1974
    %v2183 = vpack.c.b16 %v1979, %v1975
    %v2184 = vpack.c.b16 %v1980, %v1976
    %v2185 = vpack.c.b16 %v1985, %v1981
    %v2186 = vpack.c.b16 %v1986, %v1982
    %v2187 = vpack.c.b16 %v1987, %v1983
    %v2188 = vpack.c.b16 %v1988, %v1984
    %v2189 = vpack.c.b16 %v1993, %v1989
    %v2190 = vpack.c.b16 %v1994, %v1990
    %v2191 = vpack.c.b16 %v1995, %v1991
    %v2192 = vpack.c.b16 %v1996, %v1992
    %v2193 = vpack.c.b16 %v2001, %v1997
    %v2194 = vpack.c.b16 %v2002, %v1998
    %v2195 = vpack.c.b16 %v2003, %v1999
    %v2196 = vpack.c.b16 %v2004, %v2000
    %v2197 = vpack.c.b16 %v2009, %v2005
    %v2198 = vpack.c.b16 %v2010, %v2006
    %v2199 = vpack.c.b16 %v2011, %v2007
    %v2200 = vpack.c.b16 %v2012, %v2008
    %v2201 = vpack.c.b16 %v2017, %v2013
    %v2202 = vpack.c.b16 %v2018, %v2014
    %v2203 = vpack.c.b16 %v2019, %v2015
    %v2204 = vpack.c.b16 %v2020, %v2016
    %v2205 = vpack.c.b16 %v2025, %v2021
    %v2206 = vpack.c.b16 %v2026, %v2022
    %v2207 = vpack.c.b16 %v2027, %v2023
    %v2208 = vpack.c.b16 %v2028, %v2024
    %v2209 = vpack.c.b16 %v2033, %v2029
    %v2210 = vpack.c.b16 %v2034, %v2030
    %v2211 = vpack.c.b16 %v2035, %v2031
    %v2212 = vpack.c.b16 %v2036, %v2032
    %v2213 = vpack.c.b16 %v2041, %v2037
    %v2214 = vpack.c.b16 %v2042, %v2038
    %v2215 = vpack.c.b16 %v2043, %v2039
    %v2216 = vpack.c.b16 %v2044, %v2040
    %v2217 = vpack.c.b16 %v2049, %v2045
    %v2218 = vpack.c.b16 %v2050, %v2046
    %v2219 = vpack.c.b16 %v2051, %v2047
    %v2220 = vpack.c.b16 %v2052, %v2048
    %v2221 = vpack.c.b16 %v2057, %v2053
    %v2222 = vpack.c.b16 %v2058, %v2054
    %v2223 = vpack.c.b16 %v2059, %v2055
    %v2224 = vpack.c.b16 %v2060, %v2056
    %v2225 = vpack.c.b16 %v2065, %v2061
    %v2226 = vpack.c.b16 %v2066, %v2062
    %v2227 = vpack.c.b16 %v2067, %v2063
    %v2228 = vpack.c.b16 %v2068, %v2064
    %v2229 = vpack.c.b16 %v2073, %v2069
    %v2230 = vpack.c.b16 %v2074, %v2070
    %v2231 = vpack.c.b16 %v2075, %v2071
    %v2232 = vpack.c.b16 %v2076, %v2072
    %v2233 = vpack.c.b16 %v2081, %v2077
    %v2234 = vpack.c.b16 %v2082, %v2078
    %v2235 = vpack.c.b16 %v2083, %v2079
    %v2236 = vpack.c.b16 %v2084, %v2080
    %v2237 = vpack.c.b16 %v2089, %v2085
    %v2238 = vpack.c.b16 %v2090, %v2086
    %v2239 = vpack.c.b16 %v2091, %v2087
    %v2240 = vpack.c.b16 %v2092, %v2088
    %v2241 = vpack.c.b16 %v2097, %v2093
    %v2242 = vpack.c.b16 %v2098, %v2094
    %v2243 = vpack.c.b16 %v2099, %v2095
    %v2244 = vpack.c.b16 %v2100, %v2096
    %v2245 = vpack.c.b16 %v2105, %v2101
    %v2246 = vpack.c.b16 %v2106, %v2102
    %v2247 = vpack.c.b16 %v2107, %v2103
    %v2248 = vpack.c.b16 %v2108, %v2104
    %v2249 = vpack.c.b16 %v2113, %v2109
    %v2250 = vpack.c.b16 %v2114, %v2110
    %v2251 = vpack.c.b16 %v2115, %v2111
    %v2252 = vpack.c.b16 %v2116, %v2112
    %v2253 = vpack.c.b16 %v2121, %v2117
    %v2254 = vpack.c.b16 %v2122, %v2118
    %v2255 = vpack.c.b16 %v2123, %v2119
    %v2256 = vpack.c.b16 %v2124, %v2120
    %v2257 = vpack.c.b16 %v2129, %v2125
    %v2258 = vpack.c.b16 %v2130, %v2126
    %v2259 = vpack.c.b16 %v2131, %v2127
    %v2260 = vpack.c.b16 %v2132, %v2128
    %2389 = vmatpush.bf16.msra.mxu0 %v2161
    %2390 = vmatpush.bf16.msra.mxu0 %v2157
    %2391 = vmatpush.bf16.msra.mxu0 %v2153
    %2392 = vmatpush.bf16.msra.mxu0 %v2149
    %2393 = vmatpush.bf16.msra.mxu0 %v2145
    %2394 = vmatpush.bf16.msra.mxu0 %v2141
    %2395 = vmatpush.bf16.msra.mxu0 %v2137
    %2396 = vmatpush.bf16.msra.mxu0 %v2133
    %2397 = vmatmul.bf16.gmra.mxu0 %v1717
    %v2398 = vpop.f32.mrf.mxu0
    %v2399 = vadd.f32 %v1321, %v2398
    %v2400 = vpop.f32.mrf.mxu0
    %v2401 = vadd.f32 %v1323, %v2400
    %2402 = vmatmul.bf16.gmra.mxu0 %v1721
    %v2403 = vpop.f32.mrf.mxu0
    %v2404 = vadd.f32 %v1326, %v2403
    %v2405 = vpop.f32.mrf.mxu0
    %v2406 = vadd.f32 %v1328, %v2405
    %2407 = vmatmul.bf16.gmra.mxu0 %v1725
    %v2408 = vpop.f32.mrf.mxu0
    %v2409 = vadd.f32 %v1331, %v2408
    %v2410 = vpop.f32.mrf.mxu0
    %v2411 = vadd.f32 %v1333, %v2410
    %2412 = vmatmul.bf16.gmra.mxu0 %v1729
    %v2413 = vpop.f32.mrf.mxu0
    %v2414 = vadd.f32 %v1336, %v2413
    %v2415 = vpop.f32.mrf.mxu0
    %2416 = vdwg.mxu0
    %2417 = vmatpush.bf16.msra.mxu0 %v2193
    %2418 = vmatpush.bf16.msra.mxu0 %v2189
    %2419 = vmatpush.bf16.msra.mxu0 %v2185
    %2420 = vmatpush.bf16.msra.mxu0 %v2181
    %2421 = vmatpush.bf16.msra.mxu0 %v2177
    %2422 = vmatpush.bf16.msra.mxu0 %v2173
    %2423 = vmatpush.bf16.msra.mxu0 %v2169
    %2424 = vmatpush.bf16.msra.mxu0 %v2165
    %2425 = vmatmul.bf16.gmra.mxu0 %v1718
    %v2426 = vpop.f32.mrf.mxu0
    %v2427 = vadd.f32 %v2399, %v2426
    %v2428 = vpop.f32.mrf.mxu0
    %v2429 = vadd.f32 %v2401, %v2428
    %2430 = vmatmul.bf16.gmra.mxu0 %v1722
    %v2431 = vpop.f32.mrf.mxu0
    %v2432 = vadd.f32 %v2404, %v2431
    %v2433 = vpop.f32.mrf.mxu0
    %v2434 = vadd.f32 %v2406, %v2433
    %2435 = vmatmul.bf16.gmra.mxu0 %v1726
    %v2436 = vpop.f32.mrf.mxu0
    %v2437 = vadd.f32 %v2409, %v2436
    %v2438 = vpop.f32.mrf.mxu0
    %v2439 = vadd.f32 %v2411, %v2438
    %2440 = vmatmul.bf16.gmra.mxu0 %v1730
    %v2441 = vpop.f32.mrf.mxu0
    %v2442 = vadd.f32 %v2414, %v2441
    %v2443 = vpop.f32.mrf.mxu0
    %2444 = vdwg.mxu0
    %2445 = vmatpush.bf16.msra.mxu0 %v2225
    %2446 = vmatpush.bf16.msra.mxu0 %v2221
    %2447 = vmatpush.bf16.msra.mxu0 %v2217
    %2448 = vmatpush.bf16.msra.mxu0 %v2213
    %2449 = vmatpush.bf16.msra.mxu0 %v2209
    %2450 = vmatpush.bf16.msra.mxu0 %v2205
    %2451 = vmatpush.bf16.msra.mxu0 %v2201
    %2452 = vmatpush.bf16.msra.mxu0 %v2197
    %2453 = vmatmul.bf16.gmra.mxu0 %v1719
    %v2454 = vpop.f32.mrf.mxu0
    %v2455 = vadd.f32 %v2427, %v2454
    %v2456 = vpop.f32.mrf.mxu0
    %v2457 = vadd.f32 %v2429, %v2456
    %2458 = vmatmul.bf16.gmra.mxu0 %v1723
    %v2459 = vpop.f32.mrf.mxu0
    %v2460 = vadd.f32 %v2432, %v2459
    %v2461 = vpop.f32.mrf.mxu0
    %v2462 = vadd.f32 %v2434, %v2461
    %2463 = vmatmul.bf16.gmra.mxu0 %v1727
    %v2464 = vpop.f32.mrf.mxu0
    %v2465 = vadd.f32 %v2437, %v2464
    %v2466 = vpop.f32.mrf.mxu0
    %v2467 = vadd.f32 %v2439, %v2466
    %2468 = vmatmul.bf16.gmra.mxu0 %v1731
    %v2469 = vpop.f32.mrf.mxu0
    %v2470 = vadd.f32 %v2442, %v2469
    %v2471 = vpop.f32.mrf.mxu0
    %2472 = vdwg.mxu0
    %2473 = vmatpush.bf16.msra.mxu0 %v2257
    %2474 = vmatpush.bf16.msra.mxu0 %v2253
    %2475 = vmatpush.bf16.msra.mxu0 %v2249
    %2476 = vmatpush.bf16.msra.mxu0 %v2245
    %2477 = vmatpush.bf16.msra.mxu0 %v2241
    %2478 = vmatpush.bf16.msra.mxu0 %v2237
    %2479 = vmatpush.bf16.msra.mxu0 %v2233
    %2480 = vmatpush.bf16.msra.mxu0 %v2229
    %2481 = vmatmul.bf16.gmra.mxu0 %v1720
    %v2482 = vpop.f32.mrf.mxu0
    %v2483 = vadd.f32 %v2455, %v2482
    %v2484 = vpop.f32.mrf.mxu0
    %v2485 = vadd.f32 %v2457, %v2484
    %2486 = vmatmul.bf16.gmra.mxu0 %v1724
    %v2487 = vpop.f32.mrf.mxu0
    %v2488 = vadd.f32 %v2460, %v2487
    %v2489 = vpop.f32.mrf.mxu0
    %v2490 = vadd.f32 %v2462, %v2489
    %2491 = vmatmul.bf16.gmra.mxu0 %v1728
    %v2492 = vpop.f32.mrf.mxu0
    %v2493 = vadd.f32 %v2465, %v2492
    %v2494 = vpop.f32.mrf.mxu0
    %v2495 = vadd.f32 %v2467, %v2494
    %2496 = vmatmul.bf16.gmra.mxu0 %v1732
    %v2497 = vpop.f32.mrf.mxu0
    %v2498 = vadd.f32 %v2470, %v2497
    %v2499 = vpop.f32.mrf.mxu0
    %2500 = vdwg.mxu0
    %2501 = vmatpush.bf16.msra.mxu0 %v2162
    %2502 = vmatpush.bf16.msra.mxu0 %v2158
    %2503 = vmatpush.bf16.msra.mxu0 %v2154
    %2504 = vmatpush.bf16.msra.mxu0 %v2150
    %2505 = vmatpush.bf16.msra.mxu0 %v2146
    %2506 = vmatpush.bf16.msra.mxu0 %v2142
    %2507 = vmatpush.bf16.msra.mxu0 %v2138
    %2508 = vmatpush.bf16.msra.mxu0 %v2134
    %2509 = vmatmul.bf16.gmra.mxu0 %v1717
    %v2510 = vpop.f32.mrf.mxu0
    %v2511 = vadd.f32 %v1433, %v2510
    %v2512 = vpop.f32.mrf.mxu0
    %v2513 = vadd.f32 %v1435, %v2512
    %2514 = vmatmul.bf16.gmra.mxu0 %v1721
    %v2515 = vpop.f32.mrf.mxu0
    %v2516 = vadd.f32 %v1438, %v2515
    %v2517 = vpop.f32.mrf.mxu0
    %v2518 = vadd.f32 %v1440, %v2517
    %2519 = vmatmul.bf16.gmra.mxu0 %v1725
    %v2520 = vpop.f32.mrf.mxu0
    %v2521 = vadd.f32 %v1443, %v2520
    %v2522 = vpop.f32.mrf.mxu0
    %v2523 = vadd.f32 %v1445, %v2522
    %2524 = vmatmul.bf16.gmra.mxu0 %v1729
    %v2525 = vpop.f32.mrf.mxu0
    %v2526 = vadd.f32 %v1448, %v2525
    %v2527 = vpop.f32.mrf.mxu0
    %2528 = vdwg.mxu0
    %2529 = vmatpush.bf16.msra.mxu0 %v2194
    %2530 = vmatpush.bf16.msra.mxu0 %v2190
    %2531 = vmatpush.bf16.msra.mxu0 %v2186
    %2532 = vmatpush.bf16.msra.mxu0 %v2182
    %2533 = vmatpush.bf16.msra.mxu0 %v2178
    %2534 = vmatpush.bf16.msra.mxu0 %v2174
    %2535 = vmatpush.bf16.msra.mxu0 %v2170
    %2536 = vmatpush.bf16.msra.mxu0 %v2166
    %2537 = vmatmul.bf16.gmra.mxu0 %v1718
    %v2538 = vpop.f32.mrf.mxu0
    %v2539 = vadd.f32 %v2511, %v2538
    %v2540 = vpop.f32.mrf.mxu0
    %v2541 = vadd.f32 %v2513, %v2540
    %2542 = vmatmul.bf16.gmra.mxu0 %v1722
    %v2543 = vpop.f32.mrf.mxu0
    %v2544 = vadd.f32 %v2516, %v2543
    %v2545 = vpop.f32.mrf.mxu0
    %v2546 = vadd.f32 %v2518, %v2545
    %2547 = vmatmul.bf16.gmra.mxu0 %v1726
    %v2548 = vpop.f32.mrf.mxu0
    %v2549 = vadd.f32 %v2521, %v2548
    %v2550 = vpop.f32.mrf.mxu0
    %v2551 = vadd.f32 %v2523, %v2550
    %2552 = vmatmul.bf16.gmra.mxu0 %v1730
    %v2553 = vpop.f32.mrf.mxu0
    %v2554 = vadd.f32 %v2526, %v2553
    %v2555 = vpop.f32.mrf.mxu0
    %2556 = vdwg.mxu0
    %2557 = vmatpush.bf16.msra.mxu0 %v2226
    %2558 = vmatpush.bf16.msra.mxu0 %v2222
    %2559 = vmatpush.bf16.msra.mxu0 %v2218
    %2560 = vmatpush.bf16.msra.mxu0 %v2214
    %2561 = vmatpush.bf16.msra.mxu0 %v2210
    %2562 = vmatpush.bf16.msra.mxu0 %v2206
    %2563 = vmatpush.bf16.msra.mxu0 %v2202
    %2564 = vmatpush.bf16.msra.mxu0 %v2198
    %2565 = vmatmul.bf16.gmra.mxu0 %v1719
    %v2566 = vpop.f32.mrf.mxu0
    %v2567 = vadd.f32 %v2539, %v2566
    %v2568 = vpop.f32.mrf.mxu0
    %v2569 = vadd.f32 %v2541, %v2568
    %2570 = vmatmul.bf16.gmra.mxu0 %v1723
    %v2571 = vpop.f32.mrf.mxu0
    %v2572 = vadd.f32 %v2544, %v2571
    %v2573 = vpop.f32.mrf.mxu0
    %v2574 = vadd.f32 %v2546, %v2573
    %2575 = vmatmul.bf16.gmra.mxu0 %v1727
    %v2576 = vpop.f32.mrf.mxu0
    %v2577 = vadd.f32 %v2549, %v2576
    %v2578 = vpop.f32.mrf.mxu0
    %v2579 = vadd.f32 %v2551, %v2578
    %2580 = vmatmul.bf16.gmra.mxu0 %v1731
    %v2581 = vpop.f32.mrf.mxu0
    %v2582 = vadd.f32 %v2554, %v2581
    %v2583 = vpop.f32.mrf.mxu0
    %2584 = vdwg.mxu0
    %2585 = vmatpush.bf16.msra.mxu0 %v2258
    %2586 = vmatpush.bf16.msra.mxu0 %v2254
    %2587 = vmatpush.bf16.msra.mxu0 %v2250
    %2588 = vmatpush.bf16.msra.mxu0 %v2246
    %2589 = vmatpush.bf16.msra.mxu0 %v2242
    %2590 = vmatpush.bf16.msra.mxu0 %v2238
    %2591 = vmatpush.bf16.msra.mxu0 %v2234
    %2592 = vmatpush.bf16.msra.mxu0 %v2230
    %2593 = vmatmul.bf16.gmra.mxu0 %v1720
    %v2594 = vpop.f32.mrf.mxu0
    %v2595 = vadd.f32 %v2567, %v2594
    %v2596 = vpop.f32.mrf.mxu0
    %v2597 = vadd.f32 %v2569, %v2596
    %2598 = vmatmul.bf16.gmra.mxu0 %v1724
    %v2599 = vpop.f32.mrf.mxu0
    %v2600 = vadd.f32 %v2572, %v2599
    %v2601 = vpop.f32.mrf.mxu0
    %v2602 = vadd.f32 %v2574, %v2601
    %2603 = vmatmul.bf16.gmra.mxu0 %v1728
    %v2604 = vpop.f32.mrf.mxu0
    %v2605 = vadd.f32 %v2577, %v2604
    %v2606 = vpop.f32.mrf.mxu0
    %v2607 = vadd.f32 %v2579, %v2606
    %2608 = vmatmul.bf16.gmra.mxu0 %v1732
    %v2609 = vpop.f32.mrf.mxu0
    %v2610 = vadd.f32 %v2582, %v2609
    %v2611 = vpop.f32.mrf.mxu0
    %2612 = vdwg.mxu0
    %2613 = vmatpush.bf16.msra.mxu0 %v2163
    %2614 = vmatpush.bf16.msra.mxu0 %v2159
    %2615 = vmatpush.bf16.msra.mxu0 %v2155
    %2616 = vmatpush.bf16.msra.mxu0 %v2151
    %2617 = vmatpush.bf16.msra.mxu0 %v2147
    %2618 = vmatpush.bf16.msra.mxu0 %v2143
    %2619 = vmatpush.bf16.msra.mxu0 %v2139
    %2620 = vmatpush.bf16.msra.mxu0 %v2135
    %2621 = vmatmul.bf16.gmra.mxu0 %v1717
    %v2622 = vpop.f32.mrf.mxu0
    %v2623 = vadd.f32 %v1545, %v2622
    %v2624 = vpop.f32.mrf.mxu0
    %v2625 = vadd.f32 %v1547, %v2624
    %2626 = vmatmul.bf16.gmra.mxu0 %v1721
    %v2627 = vpop.f32.mrf.mxu0
    %v2628 = vadd.f32 %v1550, %v2627
    %v2629 = vpop.f32.mrf.mxu0
    %v2630 = vadd.f32 %v1552, %v2629
    %2631 = vmatmul.bf16.gmra.mxu0 %v1725
    %v2632 = vpop.f32.mrf.mxu0
    %v2633 = vadd.f32 %v1555, %v2632
    %v2634 = vpop.f32.mrf.mxu0
    %v2635 = vadd.f32 %v1557, %v2634
    %2636 = vmatmul.bf16.gmra.mxu0 %v1729
    %v2637 = vpop.f32.mrf.mxu0
    %v2638 = vadd.f32 %v1560, %v2637
    %v2639 = vpop.f32.mrf.mxu0
    %2640 = vdwg.mxu0
    %2641 = vmatpush.bf16.msra.mxu0 %v2195
    %2642 = vmatpush.bf16.msra.mxu0 %v2191
    %2643 = vmatpush.bf16.msra.mxu0 %v2187
    %2644 = vmatpush.bf16.msra.mxu0 %v2183
    %2645 = vmatpush.bf16.msra.mxu0 %v2179
    %2646 = vmatpush.bf16.msra.mxu0 %v2175
    %2647 = vmatpush.bf16.msra.mxu0 %v2171
    %2648 = vmatpush.bf16.msra.mxu0 %v2167
    %2649 = vmatmul.bf16.gmra.mxu0 %v1718
    %v2650 = vpop.f32.mrf.mxu0
    %v2651 = vadd.f32 %v2623, %v2650
    %v2652 = vpop.f32.mrf.mxu0
    %v2653 = vadd.f32 %v2625, %v2652
    %2654 = vmatmul.bf16.gmra.mxu0 %v1722
    %v2655 = vpop.f32.mrf.mxu0
    %v2656 = vadd.f32 %v2628, %v2655
    %v2657 = vpop.f32.mrf.mxu0
    %v2658 = vadd.f32 %v2630, %v2657
    %2659 = vmatmul.bf16.gmra.mxu0 %v1726
    %v2660 = vpop.f32.mrf.mxu0
    %v2661 = vadd.f32 %v2633, %v2660
    %v2662 = vpop.f32.mrf.mxu0
    %v2663 = vadd.f32 %v2635, %v2662
    %2664 = vmatmul.bf16.gmra.mxu0 %v1730
    %v2665 = vpop.f32.mrf.mxu0
    %v2666 = vadd.f32 %v2638, %v2665
    %v2667 = vpop.f32.mrf.mxu0
    %2668 = vdwg.mxu0
    %2669 = vmatpush.bf16.msra.mxu0 %v2227
    %2670 = vmatpush.bf16.msra.mxu0 %v2223
    %2671 = vmatpush.bf16.msra.mxu0 %v2219
    %2672 = vmatpush.bf16.msra.mxu0 %v2215
    %2673 = vmatpush.bf16.msra.mxu0 %v2211
    %2674 = vmatpush.bf16.msra.mxu0 %v2207
    %2675 = vmatpush.bf16.msra.mxu0 %v2203
    %2676 = vmatpush.bf16.msra.mxu0 %v2199
    %2677 = vmatmul.bf16.gmra.mxu0 %v1719
    %v2678 = vpop.f32.mrf.mxu0
    %v2679 = vadd.f32 %v2651, %v2678
    %v2680 = vpop.f32.mrf.mxu0
    %v2681 = vadd.f32 %v2653, %v2680
    %2682 = vmatmul.bf16.gmra.mxu0 %v1723
    %v2683 = vpop.f32.mrf.mxu0
    %v2684 = vadd.f32 %v2656, %v2683
    %v2685 = vpop.f32.mrf.mxu0
    %v2686 = vadd.f32 %v2658, %v2685
    %2687 = vmatmul.bf16.gmra.mxu0 %v1727
    %v2688 = vpop.f32.mrf.mxu0
    %v2689 = vadd.f32 %v2661, %v2688
    %v2690 = vpop.f32.mrf.mxu0
    %v2691 = vadd.f32 %v2663, %v2690
    %2692 = vmatmul.bf16.gmra.mxu0 %v1731
    %v2693 = vpop.f32.mrf.mxu0
    %v2694 = vadd.f32 %v2666, %v2693
    %v2695 = vpop.f32.mrf.mxu0
    %2696 = vdwg.mxu0
    %2697 = vmatpush.bf16.msra.mxu0 %v2259
    %2698 = vmatpush.bf16.msra.mxu0 %v2255
    %2699 = vmatpush.bf16.msra.mxu0 %v2251
    %2700 = vmatpush.bf16.msra.mxu0 %v2247
    %2701 = vmatpush.bf16.msra.mxu0 %v2243
    %2702 = vmatpush.bf16.msra.mxu0 %v2239
    %2703 = vmatpush.bf16.msra.mxu0 %v2235
    %2704 = vmatpush.bf16.msra.mxu0 %v2231
    %2705 = vmatmul.bf16.gmra.mxu0 %v1720
    %v2706 = vpop.f32.mrf.mxu0
    %v2707 = vadd.f32 %v2679, %v2706
    %v2708 = vpop.f32.mrf.mxu0
    %v2709 = vadd.f32 %v2681, %v2708
    %2710 = vmatmul.bf16.gmra.mxu0 %v1724
    %v2711 = vpop.f32.mrf.mxu0
    %v2712 = vadd.f32 %v2684, %v2711
    %v2713 = vpop.f32.mrf.mxu0
    %v2714 = vadd.f32 %v2686, %v2713
    %2715 = vmatmul.bf16.gmra.mxu0 %v1728
    %v2716 = vpop.f32.mrf.mxu0
    %v2717 = vadd.f32 %v2689, %v2716
    %v2718 = vpop.f32.mrf.mxu0
    %v2719 = vadd.f32 %v2691, %v2718
    %2720 = vmatmul.bf16.gmra.mxu0 %v1732
    %v2721 = vpop.f32.mrf.mxu0
    %v2722 = vadd.f32 %v2694, %v2721
    %v2723 = vpop.f32.mrf.mxu0
    %2724 = vdwg.mxu0
    %2725 = vmatpush.bf16.msra.mxu0 %v2164
    %2726 = vmatpush.bf16.msra.mxu0 %v2160
    %2727 = vmatpush.bf16.msra.mxu0 %v2156
    %2728 = vmatpush.bf16.msra.mxu0 %v2152
    %2729 = vmatpush.bf16.msra.mxu0 %v2148
    %2730 = vmatpush.bf16.msra.mxu0 %v2144
    %2731 = vmatpush.bf16.msra.mxu0 %v2140
    %2732 = vmatpush.bf16.msra.mxu0 %v2136
    %2733 = vmatmul.bf16.gmra.mxu0 %v1717
    %v2734 = vpop.f32.mrf.mxu0
    %v2735 = vadd.f32 %v1657, %v2734
    %v2736 = vpop.f32.mrf.mxu0
    %v2737 = vadd.f32 %v1659, %v2736
    %2738 = vmatmul.bf16.gmra.mxu0 %v1721
    %v2739 = vpop.f32.mrf.mxu0
    %v2740 = vadd.f32 %v1662, %v2739
    %v2741 = vpop.f32.mrf.mxu0
    %v2742 = vadd.f32 %v1664, %v2741
    %2743 = vmatmul.bf16.gmra.mxu0 %v1725
    %v2744 = vpop.f32.mrf.mxu0
    %v2745 = vadd.f32 %v1667, %v2744
    %v2746 = vpop.f32.mrf.mxu0
    %v2747 = vadd.f32 %v1669, %v2746
    %2748 = vmatmul.bf16.gmra.mxu0 %v1729
    %v2749 = vpop.f32.mrf.mxu0
    %v2750 = vadd.f32 %v1672, %v2749
    %v2751 = vpop.f32.mrf.mxu0
    %2752 = vdwg.mxu0
    %2753 = vmatpush.bf16.msra.mxu0 %v2196
    %2754 = vmatpush.bf16.msra.mxu0 %v2192
    %2755 = vmatpush.bf16.msra.mxu0 %v2188
    %2756 = vmatpush.bf16.msra.mxu0 %v2184
    %2757 = vmatpush.bf16.msra.mxu0 %v2180
    %2758 = vmatpush.bf16.msra.mxu0 %v2176
    %2759 = vmatpush.bf16.msra.mxu0 %v2172
    %2760 = vmatpush.bf16.msra.mxu0 %v2168
    %2761 = vmatmul.bf16.gmra.mxu0 %v1718
    %v2762 = vpop.f32.mrf.mxu0
    %v2763 = vadd.f32 %v2735, %v2762
    %v2764 = vpop.f32.mrf.mxu0
    %v2765 = vadd.f32 %v2737, %v2764
    %2766 = vmatmul.bf16.gmra.mxu0 %v1722
    %v2767 = vpop.f32.mrf.mxu0
    %v2768 = vadd.f32 %v2740, %v2767
    %v2769 = vpop.f32.mrf.mxu0
    %v2770 = vadd.f32 %v2742, %v2769
    %2771 = vmatmul.bf16.gmra.mxu0 %v1726
    %v2772 = vpop.f32.mrf.mxu0
    %v2773 = vadd.f32 %v2745, %v2772
    %v2774 = vpop.f32.mrf.mxu0
    %v2775 = vadd.f32 %v2747, %v2774
    %2776 = vmatmul.bf16.gmra.mxu0 %v1730
    %v2777 = vpop.f32.mrf.mxu0
    %v2778 = vadd.f32 %v2750, %v2777
    %v2779 = vpop.f32.mrf.mxu0
    %2780 = vdwg.mxu0
    %2781 = vmatpush.bf16.msra.mxu0 %v2228
    %2782 = vmatpush.bf16.msra.mxu0 %v2224
    %2783 = vmatpush.bf16.msra.mxu0 %v2220
    %2784 = vmatpush.bf16.msra.mxu0 %v2216
    %2785 = vmatpush.bf16.msra.mxu0 %v2212
    %2786 = vmatpush.bf16.msra.mxu0 %v2208
    %2787 = vmatpush.bf16.msra.mxu0 %v2204
    %2788 = vmatpush.bf16.msra.mxu0 %v2200
    %2789 = vmatmul.bf16.gmra.mxu0 %v1719
    %v2790 = vpop.f32.mrf.mxu0
    %v2791 = vadd.f32 %v2763, %v2790
    %v2792 = vpop.f32.mrf.mxu0
    %v2793 = vadd.f32 %v2765, %v2792
    %2794 = vmatmul.bf16.gmra.mxu0 %v1723
    %v2795 = vpop.f32.mrf.mxu0
    %v2796 = vadd.f32 %v2768, %v2795
    %v2797 = vpop.f32.mrf.mxu0
    %v2798 = vadd.f32 %v2770, %v2797
    %2799 = vmatmul.bf16.gmra.mxu0 %v1727
    %v2800 = vpop.f32.mrf.mxu0
    %v2801 = vadd.f32 %v2773, %v2800
    %v2802 = vpop.f32.mrf.mxu0
    %v2803 = vadd.f32 %v2775, %v2802
    %2804 = vmatmul.bf16.gmra.mxu0 %v1731
    %v2805 = vpop.f32.mrf.mxu0
    %v2806 = vadd.f32 %v2778, %v2805
    %v2807 = vpop.f32.mrf.mxu0
    %2808 = vdwg.mxu0
    %2809 = vmatpush.bf16.msra.mxu0 %v2260
    %2810 = vmatpush.bf16.msra.mxu0 %v2256
    %2811 = vmatpush.bf16.msra.mxu0 %v2252
    %2812 = vmatpush.bf16.msra.mxu0 %v2248
    %2813 = vmatpush.bf16.msra.mxu0 %v2244
    %2814 = vmatpush.bf16.msra.mxu0 %v2240
    %2815 = vmatpush.bf16.msra.mxu0 %v2236
    %2816 = vmatpush.bf16.msra.mxu0 %v2232
    %2817 = vmatmul.bf16.gmra.mxu0 %v1720
    %v2818 = vpop.f32.mrf.mxu0
    %v2819 = vadd.f32 %v2791, %v2818
    %v2820 = vpop.f32.mrf.mxu0
    %v2821 = vadd.f32 %v2793, %v2820
    %2822 = vmatmul.bf16.gmra.mxu0 %v1724
    %v2823 = vpop.f32.mrf.mxu0
    %v2824 = vadd.f32 %v2796, %v2823
    %v2825 = vpop.f32.mrf.mxu0
    %v2826 = vadd.f32 %v2798, %v2825
    %2827 = vmatmul.bf16.gmra.mxu0 %v1728
    %v2828 = vpop.f32.mrf.mxu0
    %v2829 = vadd.f32 %v2801, %v2828
    %v2830 = vpop.f32.mrf.mxu0
    %v2831 = vadd.f32 %v2803, %v2830
    %2832 = vmatmul.bf16.gmra.mxu0 %v1732
    %v2833 = vpop.f32.mrf.mxu0
    %v2834 = vadd.f32 %v2806, %v2833
    %v2835 = vpop.f32.mrf.mxu0
    %2836 = vdwg.mxu0
    %vm2851 = vcmask 1042432
    %vm2852 = vcmask 1046532
    %vm2853 = vmor %vm2851, %vm2852
    %v2854 = vrot.slane %v44, 5
    %v2855 = vrot.slane %v2854, 4
    %v2856 = vrot.slane %v46, 5
    %v2857 = vsel %vm2853, %v2855, %v2856
    %v2858 = vrot.slane %v45, 5
    %v2859 = vrot.slane %v2858, 4
    %v2860 = vrot.slane %v47, 5
    %v2861 = vsel %vm2853, %v2859, %v2860
    %v2862 = vrot.slane %v48, 5
    %v2863 = vrot.slane %v2862, 4
    %v2864 = vrot.slane %v50, 5
    %v2865 = vsel %vm2853, %v2863, %v2864
    %v2866 = vrot.slane %v49, 5
    %v2867 = vrot.slane %v2866, 4
    %v2868 = vrot.slane %v51, 5
    %v2869 = vsel %vm2853, %v2867, %v2868
    %v2870 = vrot.slane %v52, 5
    %v2871 = vrot.slane %v2870, 4
    %v2872 = vrot.slane %v54, 5
    %v2873 = vsel %vm2853, %v2871, %v2872
    %v2874 = vrot.slane %v53, 5
    %v2875 = vrot.slane %v2874, 4
    %v2876 = vrot.slane %v55, 5
    %v2877 = vsel %vm2853, %v2875, %v2876
    %v2878 = vrot.slane %v56, 5
    %v2879 = vrot.slane %v2878, 4
    %v2880 = vrot.slane %v58, 5
    %v2881 = vsel %vm2853, %v2879, %v2880
    %v2882 = vrot.slane %v57, 5
    %v2883 = vrot.slane %v2882, 4
    %v2884 = vrot.slane %v59, 5
    %v2885 = vsel %vm2853, %v2883, %v2884
    %v2886 = vrot.slane %v60, 5
    %v2887 = vrot.slane %v2886, 4
    %v2888 = vrot.slane %v62, 5
    %v2889 = vsel %vm2853, %v2887, %v2888
    %v2890 = vrot.slane %v61, 5
    %v2891 = vrot.slane %v2890, 4
    %v2892 = vrot.slane %v63, 5
    %v2893 = vsel %vm2853, %v2891, %v2892
    %v2894 = vrot.slane %v64, 5
    %v2895 = vrot.slane %v2894, 4
    %v2896 = vrot.slane %v66, 5
    %v2897 = vsel %vm2853, %v2895, %v2896
    %v2898 = vrot.slane %v65, 5
    %v2899 = vrot.slane %v2898, 4
    %v2900 = vrot.slane %v67, 5
    %v2901 = vsel %vm2853, %v2899, %v2900
    %v2902 = vrot.slane %v68, 5
    %v2903 = vrot.slane %v2902, 4
    %v2904 = vrot.slane %v70, 5
    %v2905 = vsel %vm2853, %v2903, %v2904
    %v2906 = vrot.slane %v69, 5
    %v2907 = vrot.slane %v2906, 4
    %v2908 = vrot.slane %v71, 5
    %v2909 = vsel %vm2853, %v2907, %v2908
    %v2910 = vld [vmem:[#allocation2 + $0x800] sm:$0xff]
    %v2911 = vld [vmem:[#allocation2 + $0x808] sm:$0xff]
    %v2912 = vld [vmem:[#allocation2 + $0x810] sm:$0xff]
    %v2913 = vld [vmem:[#allocation2 + $0x818] sm:$0xff]
    %v2914 = vld [vmem:[#allocation2 + $0x820] sm:$0xff]
    %v2915 = vld [vmem:[#allocation2 + $0x828] sm:$0xff]
    %v2916 = vld [vmem:[#allocation2 + $0x830] sm:$0xff]
    %v2917 = vld [vmem:[#allocation2 + $0x838] sm:$0xff]
    %v2918 = vld [vmem:[#allocation2 + $0x840] sm:$0xff]
    %v2919 = vld [vmem:[#allocation2 + $0x848] sm:$0xff]
    %v2920 = vld [vmem:[#allocation2 + $0x850] sm:$0xff]
    %v2921 = vld [vmem:[#allocation2 + $0x858] sm:$0xff]
    %v2922 = vld [vmem:[#allocation2 + $0x860] sm:$0xff]
    %v2923 = vld [vmem:[#allocation2 + $0x868] sm:$0xff]
    %v2924 = vld [vmem:[#allocation2 + $0x870] sm:$0xff]
    %v2925 = vld [vmem:[#allocation2 + $0x878] sm:$0xff]
    %v2926 = vld [vmem:[#allocation2 + $0x880] sm:$0xff]
    %v2927 = vld [vmem:[#allocation2 + $0x888] sm:$0xff]
    %v2928 = vld [vmem:[#allocation2 + $0x890] sm:$0xff]
    %v2929 = vld [vmem:[#allocation2 + $0x898] sm:$0xff]
    %v2930 = vld [vmem:[#allocation2 + $0x8a0] sm:$0xff]
    %v2931 = vld [vmem:[#allocation2 + $0x8a8] sm:$0xff]
    %v2932 = vld [vmem:[#allocation2 + $0x8b0] sm:$0xff]
    %v2933 = vld [vmem:[#allocation2 + $0x8b8] sm:$0xff]
    %v2934 = vld [vmem:[#allocation2 + $0x8c0] sm:$0xff]
    %v2935 = vld [vmem:[#allocation2 + $0x8c8] sm:$0xff]
    %v2936 = vld [vmem:[#allocation2 + $0x8d0] sm:$0xff]
    %v2937 = vld [vmem:[#allocation2 + $0x8d8] sm:$0xff]
    %v2938 = vld [vmem:[#allocation2 + $0x8e0] sm:$0xff]
    %v2939 = vld [vmem:[#allocation2 + $0x8e8] sm:$0xff]
    %v2940 = vld [vmem:[#allocation2 + $0x8f0] sm:$0xff]
    %v2941 = vld [vmem:[#allocation2 + $0x8f8] sm:$0xff]
    %v2942 = vld [vmem:[#allocation2 + $0x900] sm:$0xff]
    %v2943 = vld [vmem:[#allocation2 + $0x908] sm:$0xff]
    %v2944 = vld [vmem:[#allocation2 + $0x910] sm:$0xff]
    %v2945 = vld [vmem:[#allocation2 + $0x918] sm:$0xff]
    %v2946 = vld [vmem:[#allocation2 + $0x920] sm:$0xff]
    %v2947 = vld [vmem:[#allocation2 + $0x928] sm:$0xff]
    %v2948 = vld [vmem:[#allocation2 + $0x930] sm:$0xff]
    %v2949 = vld [vmem:[#allocation2 + $0x938] sm:$0xff]
    %v2950 = vld [vmem:[#allocation2 + $0x940] sm:$0xff]
    %v2951 = vld [vmem:[#allocation2 + $0x948] sm:$0xff]
    %v2952 = vld [vmem:[#allocation2 + $0x950] sm:$0xff]
    %v2953 = vld [vmem:[#allocation2 + $0x958] sm:$0xff]
    %v2954 = vld [vmem:[#allocation2 + $0x960] sm:$0xff]
    %v2955 = vld [vmem:[#allocation2 + $0x968] sm:$0xff]
    %v2956 = vld [vmem:[#allocation2 + $0x970] sm:$0xff]
    %v2957 = vld [vmem:[#allocation2 + $0x978] sm:$0xff]
    %v2958 = vld [vmem:[#allocation2 + $0x980] sm:$0xff]
    %v2959 = vld [vmem:[#allocation2 + $0x988] sm:$0xff]
    %v2960 = vld [vmem:[#allocation2 + $0x990] sm:$0xff]
    %v2961 = vld [vmem:[#allocation2 + $0x998] sm:$0xff]
    %v2962 = vld [vmem:[#allocation2 + $0x9a0] sm:$0xff]
    %v2963 = vld [vmem:[#allocation2 + $0x9a8] sm:$0xff]
    %v2964 = vld [vmem:[#allocation2 + $0x9b0] sm:$0xff]
    %v2965 = vld [vmem:[#allocation2 + $0x9b8] sm:$0xff]
    %v2966 = vld [vmem:[#allocation2 + $0x9c0] sm:$0xff]
    %v2967 = vld [vmem:[#allocation2 + $0x9c8] sm:$0xff]
    %v2968 = vld [vmem:[#allocation2 + $0x9d0] sm:$0xff]
    %v2969 = vld [vmem:[#allocation2 + $0x9d8] sm:$0xff]
    %v2970 = vld [vmem:[#allocation2 + $0x9e0] sm:$0xff]
    %v2971 = vld [vmem:[#allocation2 + $0x9e8] sm:$0xff]
    %v2972 = vld [vmem:[#allocation2 + $0x9f0] sm:$0xff]
    %v2973 = vld [vmem:[#allocation2 + $0x9f8] sm:$0xff]
    %v2974 = vld [vmem:[#allocation2 + $0xa00] sm:$0xff]
    %v2975 = vld [vmem:[#allocation2 + $0xa08] sm:$0xff]
    %v2976 = vld [vmem:[#allocation2 + $0xa10] sm:$0xff]
    %v2977 = vld [vmem:[#allocation2 + $0xa18] sm:$0xff]
    %v2978 = vld [vmem:[#allocation2 + $0xa20] sm:$0xff]
    %v2979 = vld [vmem:[#allocation2 + $0xa28] sm:$0xff]
    %v2980 = vld [vmem:[#allocation2 + $0xa30] sm:$0xff]
    %v2981 = vld [vmem:[#allocation2 + $0xa38] sm:$0xff]
    %v2982 = vld [vmem:[#allocation2 + $0xa40] sm:$0xff]
    %v2983 = vld [vmem:[#allocation2 + $0xa48] sm:$0xff]
    %v2984 = vld [vmem:[#allocation2 + $0xa50] sm:$0xff]
    %v2985 = vld [vmem:[#allocation2 + $0xa58] sm:$0xff]
    %v2986 = vld [vmem:[#allocation2 + $0xa60] sm:$0xff]
    %v2987 = vld [vmem:[#allocation2 + $0xa68] sm:$0xff]
    %v2988 = vld [vmem:[#allocation2 + $0xa70] sm:$0xff]
    %v2989 = vld [vmem:[#allocation2 + $0xa78] sm:$0xff]
    %v2990 = vld [vmem:[#allocation2 + $0xa80] sm:$0xff]
    %v2991 = vld [vmem:[#allocation2 + $0xa88] sm:$0xff]
    %v2992 = vld [vmem:[#allocation2 + $0xa90] sm:$0xff]
    %v2993 = vld [vmem:[#allocation2 + $0xa98] sm:$0xff]
    %v2994 = vld [vmem:[#allocation2 + $0xaa0] sm:$0xff]
    %v2995 = vld [vmem:[#allocation2 + $0xaa8] sm:$0xff]
    %v2996 = vld [vmem:[#allocation2 + $0xab0] sm:$0xff]
    %v2997 = vld [vmem:[#allocation2 + $0xab8] sm:$0xff]
    %v2998 = vld [vmem:[#allocation2 + $0xac0] sm:$0xff]
    %v2999 = vld [vmem:[#allocation2 + $0xac8] sm:$0xff]
    %v3000 = vld [vmem:[#allocation2 + $0xad0] sm:$0xff]
    %v3001 = vld [vmem:[#allocation2 + $0xad8] sm:$0xff]
    %v3002 = vld [vmem:[#allocation2 + $0xae0] sm:$0xff]
    %v3003 = vld [vmem:[#allocation2 + $0xae8] sm:$0xff]
    %v3004 = vld [vmem:[#allocation2 + $0xaf0] sm:$0xff]
    %v3005 = vld [vmem:[#allocation2 + $0xaf8] sm:$0xff]
    %v3006 = vld [vmem:[#allocation2 + $0xb00] sm:$0xff]
    %v3007 = vld [vmem:[#allocation2 + $0xb08] sm:$0xff]
    %v3008 = vld [vmem:[#allocation2 + $0xb10] sm:$0xff]
    %v3009 = vld [vmem:[#allocation2 + $0xb18] sm:$0xff]
    %v3010 = vld [vmem:[#allocation2 + $0xb20] sm:$0xff]
    %v3011 = vld [vmem:[#allocation2 + $0xb28] sm:$0xff]
    %v3012 = vld [vmem:[#allocation2 + $0xb30] sm:$0xff]
    %v3013 = vld [vmem:[#allocation2 + $0xb38] sm:$0xff]
    %v3014 = vld [vmem:[#allocation2 + $0xb40] sm:$0xff]
    %v3015 = vld [vmem:[#allocation2 + $0xb48] sm:$0xff]
    %v3016 = vld [vmem:[#allocation2 + $0xb50] sm:$0xff]
    %v3017 = vld [vmem:[#allocation2 + $0xb58] sm:$0xff]
    %v3018 = vld [vmem:[#allocation2 + $0xb60] sm:$0xff]
    %v3019 = vld [vmem:[#allocation2 + $0xb68] sm:$0xff]
    %v3020 = vld [vmem:[#allocation2 + $0xb70] sm:$0xff]
    %v3021 = vld [vmem:[#allocation2 + $0xb78] sm:$0xff]
    %v3022 = vld [vmem:[#allocation2 + $0xb80] sm:$0xff]
    %v3023 = vld [vmem:[#allocation2 + $0xb88] sm:$0xff]
    %v3024 = vld [vmem:[#allocation2 + $0xb90] sm:$0xff]
    %v3025 = vld [vmem:[#allocation2 + $0xb98] sm:$0xff]
    %v3026 = vld [vmem:[#allocation2 + $0xba0] sm:$0xff]
    %v3027 = vld [vmem:[#allocation2 + $0xba8] sm:$0xff]
    %v3028 = vld [vmem:[#allocation2 + $0xbb0] sm:$0xff]
    %v3029 = vld [vmem:[#allocation2 + $0xbb8] sm:$0xff]
    %v3030 = vld [vmem:[#allocation2 + $0xbc0] sm:$0xff]
    %v3031 = vld [vmem:[#allocation2 + $0xbc8] sm:$0xff]
    %v3032 = vld [vmem:[#allocation2 + $0xbd0] sm:$0xff]
    %v3033 = vld [vmem:[#allocation2 + $0xbd8] sm:$0xff]
    %v3034 = vld [vmem:[#allocation2 + $0xbe0] sm:$0xff]
    %v3035 = vld [vmem:[#allocation2 + $0xbe8] sm:$0xff]
    %v3036 = vld [vmem:[#allocation2 + $0xbf0] sm:$0xff]
    %v3037 = vld [vmem:[#allocation2 + $0xbf8] sm:$0xff]
    %v3038 = vunpack.c.l.b16 %v2857
    %v3039 = vunpack.c.h.b16 %v2857
    %v3040 = vunpack.c.l.b16 %v2861
    %v3041 = vunpack.c.h.b16 %v2861
    %v3042 = vunpack.c.l.b16 %v2865
    %v3043 = vunpack.c.h.b16 %v2865
    %v3044 = vunpack.c.l.b16 %v2869
    %v3045 = vunpack.c.h.b16 %v2869
    %v3046 = vunpack.c.l.b16 %v2873
    %v3047 = vunpack.c.h.b16 %v2873
    %v3048 = vunpack.c.l.b16 %v2877
    %v3049 = vunpack.c.h.b16 %v2877
    %v3050 = vunpack.c.l.b16 %v2881
    %v3051 = vunpack.c.h.b16 %v2881
    %v3052 = vunpack.c.l.b16 %v2885
    %v3053 = vunpack.c.h.b16 %v2885
    %v3054 = vunpack.c.l.b16 %v2889
    %v3055 = vunpack.c.h.b16 %v2889
    %v3056 = vunpack.c.l.b16 %v2893
    %v3057 = vunpack.c.h.b16 %v2893
    %v3058 = vunpack.c.l.b16 %v2897
    %v3059 = vunpack.c.h.b16 %v2897
    %v3060 = vunpack.c.l.b16 %v2901
    %v3061 = vunpack.c.h.b16 %v2901
    %v3062 = vunpack.c.l.b16 %v2905
    %v3063 = vunpack.c.h.b16 %v2905
    %v3064 = vunpack.c.l.b16 %v2909
    %v3065 = vunpack.c.h.b16 %v2909
    %v3066 = vpack.c.b16 %v3042, %v3038
    %v3067 = vpack.c.b16 %v3043, %v3039
    %v3068 = vpack.c.b16 %v3044, %v3040
    %v3069 = vpack.c.b16 %v3045, %v3041
    %v3070 = vpack.c.b16 %v3050, %v3046
    %v3071 = vpack.c.b16 %v3051, %v3047
    %v3072 = vpack.c.b16 %v3052, %v3048
    %v3073 = vpack.c.b16 %v3053, %v3049
    %v3074 = vpack.c.b16 %v3058, %v3054
    %v3075 = vpack.c.b16 %v3059, %v3055
    %v3076 = vpack.c.b16 %v3060, %v3056
    %v3077 = vpack.c.b16 %v3061, %v3057
    %v3078 = vpack.c.b16 %v3062, %v3062
    %v3079 = vpack.c.b16 %v3063, %v3063
    %v3080 = vpack.c.b16 %v3064, %v3064
    %v3081 = vpack.c.b16 %v3065, %v3065
    %v3226 = vunpack.c.l.b16 %v2910
    %v3227 = vunpack.c.h.b16 %v2910
    %v3228 = vunpack.c.l.b16 %v2911
    %v3229 = vunpack.c.h.b16 %v2911
    %v3230 = vunpack.c.l.b16 %v2912
    %v3231 = vunpack.c.h.b16 %v2912
    %v3232 = vunpack.c.l.b16 %v2913
    %v3233 = vunpack.c.h.b16 %v2913
    %v3234 = vunpack.c.l.b16 %v2914
    %v3235 = vunpack.c.h.b16 %v2914
    %v3236 = vunpack.c.l.b16 %v2915
    %v3237 = vunpack.c.h.b16 %v2915
    %v3238 = vunpack.c.l.b16 %v2916
    %v3239 = vunpack.c.h.b16 %v2916
    %v3240 = vunpack.c.l.b16 %v2917
    %v3241 = vunpack.c.h.b16 %v2917
    %v3242 = vunpack.c.l.b16 %v2918
    %v3243 = vunpack.c.h.b16 %v2918
    %v3244 = vunpack.c.l.b16 %v2919
    %v3245 = vunpack.c.h.b16 %v2919
    %v3246 = vunpack.c.l.b16 %v2920
    %v3247 = vunpack.c.h.b16 %v2920
    %v3248 = vunpack.c.l.b16 %v2921
    %v3249 = vunpack.c.h.b16 %v2921
    %v3250 = vunpack.c.l.b16 %v2922
    %v3251 = vunpack.c.h.b16 %v2922
    %v3252 = vunpack.c.l.b16 %v2923
    %v3253 = vunpack.c.h.b16 %v2923
    %v3254 = vunpack.c.l.b16 %v2924
    %v3255 = vunpack.c.h.b16 %v2924
    %v3256 = vunpack.c.l.b16 %v2925
    %v3257 = vunpack.c.h.b16 %v2925
    %v3258 = vunpack.c.l.b16 %v2926
    %v3259 = vunpack.c.h.b16 %v2926
    %v3260 = vunpack.c.l.b16 %v2927
    %v3261 = vunpack.c.h.b16 %v2927
    %v3262 = vunpack.c.l.b16 %v2928
    %v3263 = vunpack.c.h.b16 %v2928
    %v3264 = vunpack.c.l.b16 %v2929
    %v3265 = vunpack.c.h.b16 %v2929
    %v3266 = vunpack.c.l.b16 %v2930
    %v3267 = vunpack.c.h.b16 %v2930
    %v3268 = vunpack.c.l.b16 %v2931
    %v3269 = vunpack.c.h.b16 %v2931
    %v3270 = vunpack.c.l.b16 %v2932
    %v3271 = vunpack.c.h.b16 %v2932
    %v3272 = vunpack.c.l.b16 %v2933
    %v3273 = vunpack.c.h.b16 %v2933
    %v3274 = vunpack.c.l.b16 %v2934
    %v3275 = vunpack.c.h.b16 %v2934
    %v3276 = vunpack.c.l.b16 %v2935
    %v3277 = vunpack.c.h.b16 %v2935
    %v3278 = vunpack.c.l.b16 %v2936
    %v3279 = vunpack.c.h.b16 %v2936
    %v3280 = vunpack.c.l.b16 %v2937
    %v3281 = vunpack.c.h.b16 %v2937
    %v3282 = vunpack.c.l.b16 %v2938
    %v3283 = vunpack.c.h.b16 %v2938
    %v3284 = vunpack.c.l.b16 %v2939
    %v3285 = vunpack.c.h.b16 %v2939
    %v3286 = vunpack.c.l.b16 %v2940
    %v3287 = vunpack.c.h.b16 %v2940
    %v3288 = vunpack.c.l.b16 %v2941
    %v3289 = vunpack.c.h.b16 %v2941
    %v3290 = vunpack.c.l.b16 %v2942
    %v3291 = vunpack.c.h.b16 %v2942
    %v3292 = vunpack.c.l.b16 %v2943
    %v3293 = vunpack.c.h.b16 %v2943
    %v3294 = vunpack.c.l.b16 %v2944
    %v3295 = vunpack.c.h.b16 %v2944
    %v3296 = vunpack.c.l.b16 %v2945
    %v3297 = vunpack.c.h.b16 %v2945
    %v3298 = vunpack.c.l.b16 %v2946
    %v3299 = vunpack.c.h.b16 %v2946
    %v3300 = vunpack.c.l.b16 %v2947
    %v3301 = vunpack.c.h.b16 %v2947
    %v3302 = vunpack.c.l.b16 %v2948
    %v3303 = vunpack.c.h.b16 %v2948
    %v3304 = vunpack.c.l.b16 %v2949
    %v3305 = vunpack.c.h.b16 %v2949
    %v3306 = vunpack.c.l.b16 %v2950
    %v3307 = vunpack.c.h.b16 %v2950
    %v3308 = vunpack.c.l.b16 %v2951
    %v3309 = vunpack.c.h.b16 %v2951
    %v3310 = vunpack.c.l.b16 %v2952
    %v3311 = vunpack.c.h.b16 %v2952
    %v3312 = vunpack.c.l.b16 %v2953
    %v3313 = vunpack.c.h.b16 %v2953
    %v3314 = vunpack.c.l.b16 %v2954
    %v3315 = vunpack.c.h.b16 %v2954
    %v3316 = vunpack.c.l.b16 %v2955
    %v3317 = vunpack.c.h.b16 %v2955
    %v3318 = vunpack.c.l.b16 %v2956
    %v3319 = vunpack.c.h.b16 %v2956
    %v3320 = vunpack.c.l.b16 %v2957
    %v3321 = vunpack.c.h.b16 %v2957
    %v3322 = vunpack.c.l.b16 %v2958
    %v3323 = vunpack.c.h.b16 %v2958
    %v3324 = vunpack.c.l.b16 %v2959
    %v3325 = vunpack.c.h.b16 %v2959
    %v3326 = vunpack.c.l.b16 %v2960
    %v3327 = vunpack.c.h.b16 %v2960
    %v3328 = vunpack.c.l.b16 %v2961
    %v3329 = vunpack.c.h.b16 %v2961
    %v3330 = vunpack.c.l.b16 %v2962
    %v3331 = vunpack.c.h.b16 %v2962
    %v3332 = vunpack.c.l.b16 %v2963
    %v3333 = vunpack.c.h.b16 %v2963
    %v3334 = vunpack.c.l.b16 %v2964
    %v3335 = vunpack.c.h.b16 %v2964
    %v3336 = vunpack.c.l.b16 %v2965
    %v3337 = vunpack.c.h.b16 %v2965
    %v3338 = vunpack.c.l.b16 %v2966
    %v3339 = vunpack.c.h.b16 %v2966
    %v3340 = vunpack.c.l.b16 %v2967
    %v3341 = vunpack.c.h.b16 %v2967
    %v3342 = vunpack.c.l.b16 %v2968
    %v3343 = vunpack.c.h.b16 %v2968
    %v3344 = vunpack.c.l.b16 %v2969
    %v3345 = vunpack.c.h.b16 %v2969
    %v3346 = vunpack.c.l.b16 %v2970
    %v3347 = vunpack.c.h.b16 %v2970
    %v3348 = vunpack.c.l.b16 %v2971
    %v3349 = vunpack.c.h.b16 %v2971
    %v3350 = vunpack.c.l.b16 %v2972
    %v3351 = vunpack.c.h.b16 %v2972
    %v3352 = vunpack.c.l.b16 %v2973
    %v3353 = vunpack.c.h.b16 %v2973
    %v3354 = vunpack.c.l.b16 %v2974
    %v3355 = vunpack.c.h.b16 %v2974
    %v3356 = vunpack.c.l.b16 %v2975
    %v3357 = vunpack.c.h.b16 %v2975
    %v3358 = vunpack.c.l.b16 %v2976
    %v3359 = vunpack.c.h.b16 %v2976
    %v3360 = vunpack.c.l.b16 %v2977
    %v3361 = vunpack.c.h.b16 %v2977
    %v3362 = vunpack.c.l.b16 %v2978
    %v3363 = vunpack.c.h.b16 %v2978
    %v3364 = vunpack.c.l.b16 %v2979
    %v3365 = vunpack.c.h.b16 %v2979
    %v3366 = vunpack.c.l.b16 %v2980
    %v3367 = vunpack.c.h.b16 %v2980
    %v3368 = vunpack.c.l.b16 %v2981
    %v3369 = vunpack.c.h.b16 %v2981
    %v3370 = vunpack.c.l.b16 %v2982
    %v3371 = vunpack.c.h.b16 %v2982
    %v3372 = vunpack.c.l.b16 %v2983
    %v3373 = vunpack.c.h.b16 %v2983
    %v3374 = vunpack.c.l.b16 %v2984
    %v3375 = vunpack.c.h.b16 %v2984
    %v3376 = vunpack.c.l.b16 %v2985
    %v3377 = vunpack.c.h.b16 %v2985
    %v3378 = vunpack.c.l.b16 %v2986
    %v3379 = vunpack.c.h.b16 %v2986
    %v3380 = vunpack.c.l.b16 %v2987
    %v3381 = vunpack.c.h.b16 %v2987
    %v3382 = vunpack.c.l.b16 %v2988
    %v3383 = vunpack.c.h.b16 %v2988
    %v3384 = vunpack.c.l.b16 %v2989
    %v3385 = vunpack.c.h.b16 %v2989
    %v3386 = vunpack.c.l.b16 %v2990
    %v3387 = vunpack.c.h.b16 %v2990
    %v3388 = vunpack.c.l.b16 %v2991
    %v3389 = vunpack.c.h.b16 %v2991
    %v3390 = vunpack.c.l.b16 %v2992
    %v3391 = vunpack.c.h.b16 %v2992
    %v3392 = vunpack.c.l.b16 %v2993
    %v3393 = vunpack.c.h.b16 %v2993
    %v3394 = vunpack.c.l.b16 %v2994
    %v3395 = vunpack.c.h.b16 %v2994
    %v3396 = vunpack.c.l.b16 %v2995
    %v3397 = vunpack.c.h.b16 %v2995
    %v3398 = vunpack.c.l.b16 %v2996
    %v3399 = vunpack.c.h.b16 %v2996
    %v3400 = vunpack.c.l.b16 %v2997
    %v3401 = vunpack.c.h.b16 %v2997
    %v3402 = vunpack.c.l.b16 %v2998
    %v3403 = vunpack.c.h.b16 %v2998
    %v3404 = vunpack.c.l.b16 %v2999
    %v3405 = vunpack.c.h.b16 %v2999
    %v3406 = vunpack.c.l.b16 %v3000
    %v3407 = vunpack.c.h.b16 %v3000
    %v3408 = vunpack.c.l.b16 %v3001
    %v3409 = vunpack.c.h.b16 %v3001
    %v3410 = vunpack.c.l.b16 %v3002
    %v3411 = vunpack.c.h.b16 %v3002
    %v3412 = vunpack.c.l.b16 %v3003
    %v3413 = vunpack.c.h.b16 %v3003
    %v3414 = vunpack.c.l.b16 %v3004
    %v3415 = vunpack.c.h.b16 %v3004
    %v3416 = vunpack.c.l.b16 %v3005
    %v3417 = vunpack.c.h.b16 %v3005
    %v3418 = vunpack.c.l.b16 %v3006
    %v3419 = vunpack.c.h.b16 %v3006
    %v3420 = vunpack.c.l.b16 %v3007
    %v3421 = vunpack.c.h.b16 %v3007
    %v3422 = vunpack.c.l.b16 %v3008
    %v3423 = vunpack.c.h.b16 %v3008
    %v3424 = vunpack.c.l.b16 %v3009
    %v3425 = vunpack.c.h.b16 %v3009
    %v3426 = vunpack.c.l.b16 %v3010
    %v3427 = vunpack.c.h.b16 %v3010
    %v3428 = vunpack.c.l.b16 %v3011
    %v3429 = vunpack.c.h.b16 %v3011
    %v3430 = vunpack.c.l.b16 %v3012
    %v3431 = vunpack.c.h.b16 %v3012
    %v3432 = vunpack.c.l.b16 %v3013
    %v3433 = vunpack.c.h.b16 %v3013
    %v3434 = vunpack.c.l.b16 %v3014
    %v3435 = vunpack.c.h.b16 %v3014
    %v3436 = vunpack.c.l.b16 %v3015
    %v3437 = vunpack.c.h.b16 %v3015
    %v3438 = vunpack.c.l.b16 %v3016
    %v3439 = vunpack.c.h.b16 %v3016
    %v3440 = vunpack.c.l.b16 %v3017
    %v3441 = vunpack.c.h.b16 %v3017
    %v3442 = vunpack.c.l.b16 %v3018
    %v3443 = vunpack.c.h.b16 %v3018
    %v3444 = vunpack.c.l.b16 %v3019
    %v3445 = vunpack.c.h.b16 %v3019
    %v3446 = vunpack.c.l.b16 %v3020
    %v3447 = vunpack.c.h.b16 %v3020
    %v3448 = vunpack.c.l.b16 %v3021
    %v3449 = vunpack.c.h.b16 %v3021
    %v3450 = vunpack.c.l.b16 %v3022
    %v3451 = vunpack.c.h.b16 %v3022
    %v3452 = vunpack.c.l.b16 %v3023
    %v3453 = vunpack.c.h.b16 %v3023
    %v3454 = vunpack.c.l.b16 %v3024
    %v3455 = vunpack.c.h.b16 %v3024
    %v3456 = vunpack.c.l.b16 %v3025
    %v3457 = vunpack.c.h.b16 %v3025
    %v3458 = vunpack.c.l.b16 %v3026
    %v3459 = vunpack.c.h.b16 %v3026
    %v3460 = vunpack.c.l.b16 %v3027
    %v3461 = vunpack.c.h.b16 %v3027
    %v3462 = vunpack.c.l.b16 %v3028
    %v3463 = vunpack.c.h.b16 %v3028
    %v3464 = vunpack.c.l.b16 %v3029
    %v3465 = vunpack.c.h.b16 %v3029
    %v3466 = vunpack.c.l.b16 %v3030
    %v3467 = vunpack.c.h.b16 %v3030
    %v3468 = vunpack.c.l.b16 %v3031
    %v3469 = vunpack.c.h.b16 %v3031
    %v3470 = vunpack.c.l.b16 %v3032
    %v3471 = vunpack.c.h.b16 %v3032
    %v3472 = vunpack.c.l.b16 %v3033
    %v3473 = vunpack.c.h.b16 %v3033
    %v3474 = vunpack.c.l.b16 %v3034
    %v3475 = vunpack.c.h.b16 %v3034
    %v3476 = vunpack.c.l.b16 %v3035
    %v3477 = vunpack.c.h.b16 %v3035
    %v3478 = vunpack.c.l.b16 %v3036
    %v3479 = vunpack.c.h.b16 %v3036
    %v3480 = vunpack.c.l.b16 %v3037
    %v3481 = vunpack.c.h.b16 %v3037
    %v3482 = vpack.c.b16 %v3230, %v3226
    %v3483 = vpack.c.b16 %v3231, %v3227
    %v3484 = vpack.c.b16 %v3232, %v3228
    %v3485 = vpack.c.b16 %v3233, %v3229
    %v3486 = vpack.c.b16 %v3238, %v3234
    %v3487 = vpack.c.b16 %v3239, %v3235
    %v3488 = vpack.c.b16 %v3240, %v3236
    %v3489 = vpack.c.b16 %v3241, %v3237
    %v3490 = vpack.c.b16 %v3246, %v3242
    %v3491 = vpack.c.b16 %v3247, %v3243
    %v3492 = vpack.c.b16 %v3248, %v3244
    %v3493 = vpack.c.b16 %v3249, %v3245
    %v3494 = vpack.c.b16 %v3254, %v3250
    %v3495 = vpack.c.b16 %v3255, %v3251
    %v3496 = vpack.c.b16 %v3256, %v3252
    %v3497 = vpack.c.b16 %v3257, %v3253
    %v3498 = vpack.c.b16 %v3262, %v3258
    %v3499 = vpack.c.b16 %v3263, %v3259
    %v3500 = vpack.c.b16 %v3264, %v3260
    %v3501 = vpack.c.b16 %v3265, %v3261
    %v3502 = vpack.c.b16 %v3270, %v3266
    %v3503 = vpack.c.b16 %v3271, %v3267
    %v3504 = vpack.c.b16 %v3272, %v3268
    %v3505 = vpack.c.b16 %v3273, %v3269
    %v3506 = vpack.c.b16 %v3278, %v3274
    %v3507 = vpack.c.b16 %v3279, %v3275
    %v3508 = vpack.c.b16 %v3280, %v3276
    %v3509 = vpack.c.b16 %v3281, %v3277
    %v3510 = vpack.c.b16 %v3286, %v3282
    %v3511 = vpack.c.b16 %v3287, %v3283
    %v3512 = vpack.c.b16 %v3288, %v3284
    %v3513 = vpack.c.b16 %v3289, %v3285
    %v3514 = vpack.c.b16 %v3294, %v3290
    %v3515 = vpack.c.b16 %v3295, %v3291
    %v3516 = vpack.c.b16 %v3296, %v3292
    %v3517 = vpack.c.b16 %v3297, %v3293
    %v3518 = vpack.c.b16 %v3302, %v3298
    %v3519 = vpack.c.b16 %v3303, %v3299
    %v3520 = vpack.c.b16 %v3304, %v3300
    %v3521 = vpack.c.b16 %v3305, %v3301
    %v3522 = vpack.c.b16 %v3310, %v3306
    %v3523 = vpack.c.b16 %v3311, %v3307
    %v3524 = vpack.c.b16 %v3312, %v3308
    %v3525 = vpack.c.b16 %v3313, %v3309
    %v3526 = vpack.c.b16 %v3318, %v3314
    %v3527 = vpack.c.b16 %v3319, %v3315
    %v3528 = vpack.c.b16 %v3320, %v3316
    %v3529 = vpack.c.b16 %v3321, %v3317
    %v3530 = vpack.c.b16 %v3326, %v3322
    %v3531 = vpack.c.b16 %v3327, %v3323
    %v3532 = vpack.c.b16 %v3328, %v3324
    %v3533 = vpack.c.b16 %v3329, %v3325
    %v3534 = vpack.c.b16 %v3334, %v3330
    %v3535 = vpack.c.b16 %v3335, %v3331
    %v3536 = vpack.c.b16 %v3336, %v3332
    %v3537 = vpack.c.b16 %v3337, %v3333
    %v3538 = vpack.c.b16 %v3342, %v3338
    %v3539 = vpack.c.b16 %v3343, %v3339
    %v3540 = vpack.c.b16 %v3344, %v3340
    %v3541 = vpack.c.b16 %v3345, %v3341
    %v3542 = vpack.c.b16 %v3350, %v3346
    %v3543 = vpack.c.b16 %v3351, %v3347
    %v3544 = vpack.c.b16 %v3352, %v3348
    %v3545 = vpack.c.b16 %v3353, %v3349
    %v3546 = vpack.c.b16 %v3358, %v3354
    %v3547 = vpack.c.b16 %v3359, %v3355
    %v3548 = vpack.c.b16 %v3360, %v3356
    %v3549 = vpack.c.b16 %v3361, %v3357
    %v3550 = vpack.c.b16 %v3366, %v3362
    %v3551 = vpack.c.b16 %v3367, %v3363
    %v3552 = vpack.c.b16 %v3368, %v3364
    %v3553 = vpack.c.b16 %v3369, %v3365
    %v3554 = vpack.c.b16 %v3374, %v3370
    %v3555 = vpack.c.b16 %v3375, %v3371
    %v3556 = vpack.c.b16 %v3376, %v3372
    %v3557 = vpack.c.b16 %v3377, %v3373
    %v3558 = vpack.c.b16 %v3382, %v3378
    %v3559 = vpack.c.b16 %v3383, %v3379
    %v3560 = vpack.c.b16 %v3384, %v3380
    %v3561 = vpack.c.b16 %v3385, %v3381
    %v3562 = vpack.c.b16 %v3390, %v3386
    %v3563 = vpack.c.b16 %v3391, %v3387
    %v3564 = vpack.c.b16 %v3392, %v3388
    %v3565 = vpack.c.b16 %v3393, %v3389
    %v3566 = vpack.c.b16 %v3398, %v3394
    %v3567 = vpack.c.b16 %v3399, %v3395
    %v3568 = vpack.c.b16 %v3400, %v3396
    %v3569 = vpack.c.b16 %v3401, %v3397
    %v3570 = vpack.c.b16 %v3406, %v3402
    %v3571 = vpack.c.b16 %v3407, %v3403
    %v3572 = vpack.c.b16 %v3408, %v3404
    %v3573 = vpack.c.b16 %v3409, %v3405
    %v3574 = vpack.c.b16 %v3414, %v3410
    %v3575 = vpack.c.b16 %v3415, %v3411
    %v3576 = vpack.c.b16 %v3416, %v3412
    %v3577 = vpack.c.b16 %v3417, %v3413
    %v3578 = vpack.c.b16 %v3422, %v3418
    %v3579 = vpack.c.b16 %v3423, %v3419
    %v3580 = vpack.c.b16 %v3424, %v3420
    %v3581 = vpack.c.b16 %v3425, %v3421
    %v3582 = vpack.c.b16 %v3430, %v3426
    %v3583 = vpack.c.b16 %v3431, %v3427
    %v3584 = vpack.c.b16 %v3432, %v3428
    %v3585 = vpack.c.b16 %v3433, %v3429
    %v3586 = vpack.c.b16 %v3438, %v3434
    %v3587 = vpack.c.b16 %v3439, %v3435
    %v3588 = vpack.c.b16 %v3440, %v3436
    %v3589 = vpack.c.b16 %v3441, %v3437
    %v3590 = vpack.c.b16 %v3446, %v3442
    %v3591 = vpack.c.b16 %v3447, %v3443
    %v3592 = vpack.c.b16 %v3448, %v3444
    %v3593 = vpack.c.b16 %v3449, %v3445
    %v3594 = vpack.c.b16 %v3454, %v3450
    %v3595 = vpack.c.b16 %v3455, %v3451
    %v3596 = vpack.c.b16 %v3456, %v3452
    %v3597 = vpack.c.b16 %v3457, %v3453
    %v3598 = vpack.c.b16 %v3462, %v3458
    %v3599 = vpack.c.b16 %v3463, %v3459
    %v3600 = vpack.c.b16 %v3464, %v3460
    %v3601 = vpack.c.b16 %v3465, %v3461
    %v3602 = vpack.c.b16 %v3470, %v3466
    %v3603 = vpack.c.b16 %v3471, %v3467
    %v3604 = vpack.c.b16 %v3472, %v3468
    %v3605 = vpack.c.b16 %v3473, %v3469
    %v3606 = vpack.c.b16 %v3478, %v3474
    %v3607 = vpack.c.b16 %v3479, %v3475
    %v3608 = vpack.c.b16 %v3480, %v3476
    %v3609 = vpack.c.b16 %v3481, %v3477
    %3738 = vmatpush.bf16.msra.mxu0 %v3510
    %3739 = vmatpush.bf16.msra.mxu0 %v3506
    %3740 = vmatpush.bf16.msra.mxu0 %v3502
    %3741 = vmatpush.bf16.msra.mxu0 %v3498
    %3742 = vmatpush.bf16.msra.mxu0 %v3494
    %3743 = vmatpush.bf16.msra.mxu0 %v3490
    %3744 = vmatpush.bf16.msra.mxu0 %v3486
    %3745 = vmatpush.bf16.msra.mxu0 %v3482
    %3746 = vmatmul.bf16.gmra.mxu0 %v3066
    %v3747 = vpop.f32.mrf.mxu0
    %v3748 = vadd.f32 0.0, %v3747
    %v3749 = vpop.f32.mrf.mxu0
    %v3750 = vadd.f32 0.0, %v3749
    %3751 = vmatmul.bf16.gmra.mxu0 %v3070
    %v3752 = vpop.f32.mrf.mxu0
    %v3753 = vadd.f32 0.0, %v3752
    %v3754 = vpop.f32.mrf.mxu0
    %v3755 = vadd.f32 0.0, %v3754
    %3756 = vmatmul.bf16.gmra.mxu0 %v3074
    %v3757 = vpop.f32.mrf.mxu0
    %v3758 = vadd.f32 0.0, %v3757
    %v3759 = vpop.f32.mrf.mxu0
    %v3760 = vadd.f32 0.0, %v3759
    %3761 = vmatmul.bf16.gmra.mxu0 %v3078
    %v3762 = vpop.f32.mrf.mxu0
    %v3763 = vadd.f32 0.0, %v3762
    %v3764 = vpop.f32.mrf.mxu0
    %3765 = vdwg.mxu0
    %3766 = vmatpush.bf16.msra.mxu0 %v3542
    %3767 = vmatpush.bf16.msra.mxu0 %v3538
    %3768 = vmatpush.bf16.msra.mxu0 %v3534
    %3769 = vmatpush.bf16.msra.mxu0 %v3530
    %3770 = vmatpush.bf16.msra.mxu0 %v3526
    %3771 = vmatpush.bf16.msra.mxu0 %v3522
    %3772 = vmatpush.bf16.msra.mxu0 %v3518
    %3773 = vmatpush.bf16.msra.mxu0 %v3514
    %3774 = vmatmul.bf16.gmra.mxu0 %v3067
    %v3775 = vpop.f32.mrf.mxu0
    %v3776 = vadd.f32 %v3748, %v3775
    %v3777 = vpop.f32.mrf.mxu0
    %v3778 = vadd.f32 %v3750, %v3777
    %3779 = vmatmul.bf16.gmra.mxu0 %v3071
    %v3780 = vpop.f32.mrf.mxu0
    %v3781 = vadd.f32 %v3753, %v3780
    %v3782 = vpop.f32.mrf.mxu0
    %v3783 = vadd.f32 %v3755, %v3782
    %3784 = vmatmul.bf16.gmra.mxu0 %v3075
    %v3785 = vpop.f32.mrf.mxu0
    %v3786 = vadd.f32 %v3758, %v3785
    %v3787 = vpop.f32.mrf.mxu0
    %v3788 = vadd.f32 %v3760, %v3787
    %3789 = vmatmul.bf16.gmra.mxu0 %v3079
    %v3790 = vpop.f32.mrf.mxu0
    %v3791 = vadd.f32 %v3763, %v3790
    %v3792 = vpop.f32.mrf.mxu0
    %3793 = vdwg.mxu0
    %3794 = vmatpush.bf16.msra.mxu0 %v3574
    %3795 = vmatpush.bf16.msra.mxu0 %v3570
    %3796 = vmatpush.bf16.msra.mxu0 %v3566
    %3797 = vmatpush.bf16.msra.mxu0 %v3562
    %3798 = vmatpush.bf16.msra.mxu0 %v3558
    %3799 = vmatpush.bf16.msra.mxu0 %v3554
    %3800 = vmatpush.bf16.msra.mxu0 %v3550
    %3801 = vmatpush.bf16.msra.mxu0 %v3546
    %3802 = vmatmul.bf16.gmra.mxu0 %v3068
    %v3803 = vpop.f32.mrf.mxu0
    %v3804 = vadd.f32 %v3776, %v3803
    %v3805 = vpop.f32.mrf.mxu0
    %v3806 = vadd.f32 %v3778, %v3805
    %3807 = vmatmul.bf16.gmra.mxu0 %v3072
    %v3808 = vpop.f32.mrf.mxu0
    %v3809 = vadd.f32 %v3781, %v3808
    %v3810 = vpop.f32.mrf.mxu0
    %v3811 = vadd.f32 %v3783, %v3810
    %3812 = vmatmul.bf16.gmra.mxu0 %v3076
    %v3813 = vpop.f32.mrf.mxu0
    %v3814 = vadd.f32 %v3786, %v3813
    %v3815 = vpop.f32.mrf.mxu0
    %v3816 = vadd.f32 %v3788, %v3815
    %3817 = vmatmul.bf16.gmra.mxu0 %v3080
    %v3818 = vpop.f32.mrf.mxu0
    %v3819 = vadd.f32 %v3791, %v3818
    %v3820 = vpop.f32.mrf.mxu0
    %3821 = vdwg.mxu0
    %3822 = vmatpush.bf16.msra.mxu0 %v3606
    %3823 = vmatpush.bf16.msra.mxu0 %v3602
    %3824 = vmatpush.bf16.msra.mxu0 %v3598
    %3825 = vmatpush.bf16.msra.mxu0 %v3594
    %3826 = vmatpush.bf16.msra.mxu0 %v3590
    %3827 = vmatpush.bf16.msra.mxu0 %v3586
    %3828 = vmatpush.bf16.msra.mxu0 %v3582
    %3829 = vmatpush.bf16.msra.mxu0 %v3578
    %3830 = vmatmul.bf16.gmra.mxu0 %v3069
    %v3831 = vpop.f32.mrf.mxu0
    %v3832 = vadd.f32 %v3804, %v3831
    %v3833 = vpop.f32.mrf.mxu0
    %v3834 = vadd.f32 %v3806, %v3833
    %3835 = vmatmul.bf16.gmra.mxu0 %v3073
    %v3836 = vpop.f32.mrf.mxu0
    %v3837 = vadd.f32 %v3809, %v3836
    %v3838 = vpop.f32.mrf.mxu0
    %v3839 = vadd.f32 %v3811, %v3838
    %3840 = vmatmul.bf16.gmra.mxu0 %v3077
    %v3841 = vpop.f32.mrf.mxu0
    %v3842 = vadd.f32 %v3814, %v3841
    %v3843 = vpop.f32.mrf.mxu0
    %v3844 = vadd.f32 %v3816, %v3843
    %3845 = vmatmul.bf16.gmra.mxu0 %v3081
    %v3846 = vpop.f32.mrf.mxu0
    %v3847 = vadd.f32 %v3819, %v3846
    %v3848 = vpop.f32.mrf.mxu0
    %3849 = vdwg.mxu0
    %3850 = vmatpush.bf16.msra.mxu0 %v3511
    %3851 = vmatpush.bf16.msra.mxu0 %v3507
    %3852 = vmatpush.bf16.msra.mxu0 %v3503
    %3853 = vmatpush.bf16.msra.mxu0 %v3499
    %3854 = vmatpush.bf16.msra.mxu0 %v3495
    %3855 = vmatpush.bf16.msra.mxu0 %v3491
    %3856 = vmatpush.bf16.msra.mxu0 %v3487
    %3857 = vmatpush.bf16.msra.mxu0 %v3483
    %3858 = vmatmul.bf16.gmra.mxu0 %v3066
    %v3859 = vpop.f32.mrf.mxu0
    %v3860 = vadd.f32 0.0, %v3859
    %v3861 = vpop.f32.mrf.mxu0
    %v3862 = vadd.f32 0.0, %v3861
    %3863 = vmatmul.bf16.gmra.mxu0 %v3070
    %v3864 = vpop.f32.mrf.mxu0
    %v3865 = vadd.f32 0.0, %v3864
    %v3866 = vpop.f32.mrf.mxu0
    %v3867 = vadd.f32 0.0, %v3866
    %3868 = vmatmul.bf16.gmra.mxu0 %v3074
    %v3869 = vpop.f32.mrf.mxu0
    %v3870 = vadd.f32 0.0, %v3869
    %v3871 = vpop.f32.mrf.mxu0
    %v3872 = vadd.f32 0.0, %v3871
    %3873 = vmatmul.bf16.gmra.mxu0 %v3078
    %v3874 = vpop.f32.mrf.mxu0
    %v3875 = vadd.f32 0.0, %v3874
    %v3876 = vpop.f32.mrf.mxu0
    %3877 = vdwg.mxu0
    %3878 = vmatpush.bf16.msra.mxu0 %v3543
    %3879 = vmatpush.bf16.msra.mxu0 %v3539
    %3880 = vmatpush.bf16.msra.mxu0 %v3535
    %3881 = vmatpush.bf16.msra.mxu0 %v3531
    %3882 = vmatpush.bf16.msra.mxu0 %v3527
    %3883 = vmatpush.bf16.msra.mxu0 %v3523
    %3884 = vmatpush.bf16.msra.mxu0 %v3519
    %3885 = vmatpush.bf16.msra.mxu0 %v3515
    %3886 = vmatmul.bf16.gmra.mxu0 %v3067
    %v3887 = vpop.f32.mrf.mxu0
    %v3888 = vadd.f32 %v3860, %v3887
    %v3889 = vpop.f32.mrf.mxu0
    %v3890 = vadd.f32 %v3862, %v3889
    %3891 = vmatmul.bf16.gmra.mxu0 %v3071
    %v3892 = vpop.f32.mrf.mxu0
    %v3893 = vadd.f32 %v3865, %v3892
    %v3894 = vpop.f32.mrf.mxu0
    %v3895 = vadd.f32 %v3867, %v3894
    %3896 = vmatmul.bf16.gmra.mxu0 %v3075
    %v3897 = vpop.f32.mrf.mxu0
    %v3898 = vadd.f32 %v3870, %v3897
    %v3899 = vpop.f32.mrf.mxu0
    %v3900 = vadd.f32 %v3872, %v3899
    %3901 = vmatmul.bf16.gmra.mxu0 %v3079
    %v3902 = vpop.f32.mrf.mxu0
    %v3903 = vadd.f32 %v3875, %v3902
    %v3904 = vpop.f32.mrf.mxu0
    %3905 = vdwg.mxu0
    %3906 = vmatpush.bf16.msra.mxu0 %v3575
    %3907 = vmatpush.bf16.msra.mxu0 %v3571
    %3908 = vmatpush.bf16.msra.mxu0 %v3567
    %3909 = vmatpush.bf16.msra.mxu0 %v3563
    %3910 = vmatpush.bf16.msra.mxu0 %v3559
    %3911 = vmatpush.bf16.msra.mxu0 %v3555
    %3912 = vmatpush.bf16.msra.mxu0 %v3551
    %3913 = vmatpush.bf16.msra.mxu0 %v3547
    %3914 = vmatmul.bf16.gmra.mxu0 %v3068
    %v3915 = vpop.f32.mrf.mxu0
    %v3916 = vadd.f32 %v3888, %v3915
    %v3917 = vpop.f32.mrf.mxu0
    %v3918 = vadd.f32 %v3890, %v3917
    %3919 = vmatmul.bf16.gmra.mxu0 %v3072
    %v3920 = vpop.f32.mrf.mxu0
    %v3921 = vadd.f32 %v3893, %v3920
    %v3922 = vpop.f32.mrf.mxu0
    %v3923 = vadd.f32 %v3895, %v3922
    %3924 = vmatmul.bf16.gmra.mxu0 %v3076
    %v3925 = vpop.f32.mrf.mxu0
    %v3926 = vadd.f32 %v3898, %v3925
    %v3927 = vpop.f32.mrf.mxu0
    %v3928 = vadd.f32 %v3900, %v3927
    %3929 = vmatmul.bf16.gmra.mxu0 %v3080
    %v3930 = vpop.f32.mrf.mxu0
    %v3931 = vadd.f32 %v3903, %v3930
    %v3932 = vpop.f32.mrf.mxu0
    %3933 = vdwg.mxu0
    %3934 = vmatpush.bf16.msra.mxu0 %v3607
    %3935 = vmatpush.bf16.msra.mxu0 %v3603
    %3936 = vmatpush.bf16.msra.mxu0 %v3599
    %3937 = vmatpush.bf16.msra.mxu0 %v3595
    %3938 = vmatpush.bf16.msra.mxu0 %v3591
    %3939 = vmatpush.bf16.msra.mxu0 %v3587
    %3940 = vmatpush.bf16.msra.mxu0 %v3583
    %3941 = vmatpush.bf16.msra.mxu0 %v3579
    %3942 = vmatmul.bf16.gmra.mxu0 %v3069
    %v3943 = vpop.f32.mrf.mxu0
    %v3944 = vadd.f32 %v3916, %v3943
    %v3945 = vpop.f32.mrf.mxu0
    %v3946 = vadd.f32 %v3918, %v3945
    %3947 = vmatmul.bf16.gmra.mxu0 %v3073
    %v3948 = vpop.f32.mrf.mxu0
    %v3949 = vadd.f32 %v3921, %v3948
    %v3950 = vpop.f32.mrf.mxu0
    %v3951 = vadd.f32 %v3923, %v3950
    %3952 = vmatmul.bf16.gmra.mxu0 %v3077
    %v3953 = vpop.f32.mrf.mxu0
    %v3954 = vadd.f32 %v3926, %v3953
    %v3955 = vpop.f32.mrf.mxu0
    %v3956 = vadd.f32 %v3928, %v3955
    %3957 = vmatmul.bf16.gmra.mxu0 %v3081
    %v3958 = vpop.f32.mrf.mxu0
    %v3959 = vadd.f32 %v3931, %v3958
    %v3960 = vpop.f32.mrf.mxu0
    %3961 = vdwg.mxu0
    %3962 = vmatpush.bf16.msra.mxu0 %v3512
    %3963 = vmatpush.bf16.msra.mxu0 %v3508
    %3964 = vmatpush.bf16.msra.mxu0 %v3504
    %3965 = vmatpush.bf16.msra.mxu0 %v3500
    %3966 = vmatpush.bf16.msra.mxu0 %v3496
    %3967 = vmatpush.bf16.msra.mxu0 %v3492
    %3968 = vmatpush.bf16.msra.mxu0 %v3488
    %3969 = vmatpush.bf16.msra.mxu0 %v3484
    %3970 = vmatmul.bf16.gmra.mxu0 %v3066
    %v3971 = vpop.f32.mrf.mxu0
    %v3972 = vadd.f32 0.0, %v3971
    %v3973 = vpop.f32.mrf.mxu0
    %v3974 = vadd.f32 0.0, %v3973
    %3975 = vmatmul.bf16.gmra.mxu0 %v3070
    %v3976 = vpop.f32.mrf.mxu0
    %v3977 = vadd.f32 0.0, %v3976
    %v3978 = vpop.f32.mrf.mxu0
    %v3979 = vadd.f32 0.0, %v3978
    %3980 = vmatmul.bf16.gmra.mxu0 %v3074
    %v3981 = vpop.f32.mrf.mxu0
    %v3982 = vadd.f32 0.0, %v3981
    %v3983 = vpop.f32.mrf.mxu0
    %v3984 = vadd.f32 0.0, %v3983
    %3985 = vmatmul.bf16.gmra.mxu0 %v3078
    %v3986 = vpop.f32.mrf.mxu0
    %v3987 = vadd.f32 0.0, %v3986
    %v3988 = vpop.f32.mrf.mxu0
    %3989 = vdwg.mxu0
    %3990 = vmatpush.bf16.msra.mxu0 %v3544
    %3991 = vmatpush.bf16.msra.mxu0 %v3540
    %3992 = vmatpush.bf16.msra.mxu0 %v3536
    %3993 = vmatpush.bf16.msra.mxu0 %v3532
    %3994 = vmatpush.bf16.msra.mxu0 %v3528
    %3995 = vmatpush.bf16.msra.mxu0 %v3524
    %3996 = vmatpush.bf16.msra.mxu0 %v3520
    %3997 = vmatpush.bf16.msra.mxu0 %v3516
    %3998 = vmatmul.bf16.gmra.mxu0 %v3067
    %v3999 = vpop.f32.mrf.mxu0
    %v4000 = vadd.f32 %v3972, %v3999
    %v4001 = vpop.f32.mrf.mxu0
    %v4002 = vadd.f32 %v3974, %v4001
    %4003 = vmatmul.bf16.gmra.mxu0 %v3071
    %v4004 = vpop.f32.mrf.mxu0
    %v4005 = vadd.f32 %v3977, %v4004
    %v4006 = vpop.f32.mrf.mxu0
    %v4007 = vadd.f32 %v3979, %v4006
    %4008 = vmatmul.bf16.gmra.mxu0 %v3075
    %v4009 = vpop.f32.mrf.mxu0
    %v4010 = vadd.f32 %v3982, %v4009
    %v4011 = vpop.f32.mrf.mxu0
    %v4012 = vadd.f32 %v3984, %v4011
    %4013 = vmatmul.bf16.gmra.mxu0 %v3079
    %v4014 = vpop.f32.mrf.mxu0
    %v4015 = vadd.f32 %v3987, %v4014
    %v4016 = vpop.f32.mrf.mxu0
    %4017 = vdwg.mxu0
    %4018 = vmatpush.bf16.msra.mxu0 %v3576
    %4019 = vmatpush.bf16.msra.mxu0 %v3572
    %4020 = vmatpush.bf16.msra.mxu0 %v3568
    %4021 = vmatpush.bf16.msra.mxu0 %v3564
    %4022 = vmatpush.bf16.msra.mxu0 %v3560
    %4023 = vmatpush.bf16.msra.mxu0 %v3556
    %4024 = vmatpush.bf16.msra.mxu0 %v3552
    %4025 = vmatpush.bf16.msra.mxu0 %v3548
    %4026 = vmatmul.bf16.gmra.mxu0 %v3068
    %v4027 = vpop.f32.mrf.mxu0
    %v4028 = vadd.f32 %v4000, %v4027
    %v4029 = vpop.f32.mrf.mxu0
    %v4030 = vadd.f32 %v4002, %v4029
    %4031 = vmatmul.bf16.gmra.mxu0 %v3072
    %v4032 = vpop.f32.mrf.mxu0
    %v4033 = vadd.f32 %v4005, %v4032
    %v4034 = vpop.f32.mrf.mxu0
    %v4035 = vadd.f32 %v4007, %v4034
    %4036 = vmatmul.bf16.gmra.mxu0 %v3076
    %v4037 = vpop.f32.mrf.mxu0
    %v4038 = vadd.f32 %v4010, %v4037
    %v4039 = vpop.f32.mrf.mxu0
    %v4040 = vadd.f32 %v4012, %v4039
    %4041 = vmatmul.bf16.gmra.mxu0 %v3080
    %v4042 = vpop.f32.mrf.mxu0
    %v4043 = vadd.f32 %v4015, %v4042
    %v4044 = vpop.f32.mrf.mxu0
    %4045 = vdwg.mxu0
    %4046 = vmatpush.bf16.msra.mxu0 %v3608
    %4047 = vmatpush.bf16.msra.mxu0 %v3604
    %4048 = vmatpush.bf16.msra.mxu0 %v3600
    %4049 = vmatpush.bf16.msra.mxu0 %v3596
    %4050 = vmatpush.bf16.msra.mxu0 %v3592
    %4051 = vmatpush.bf16.msra.mxu0 %v3588
    %4052 = vmatpush.bf16.msra.mxu0 %v3584
    %4053 = vmatpush.bf16.msra.mxu0 %v3580
    %4054 = vmatmul.bf16.gmra.mxu0 %v3069
    %v4055 = vpop.f32.mrf.mxu0
    %v4056 = vadd.f32 %v4028, %v4055
    %v4057 = vpop.f32.mrf.mxu0
    %v4058 = vadd.f32 %v4030, %v4057
    %4059 = vmatmul.bf16.gmra.mxu0 %v3073
    %v4060 = vpop.f32.mrf.mxu0
    %v4061 = vadd.f32 %v4033, %v4060
    %v4062 = vpop.f32.mrf.mxu0
    %v4063 = vadd.f32 %v4035, %v4062
    %4064 = vmatmul.bf16.gmra.mxu0 %v3077
    %v4065 = vpop.f32.mrf.mxu0
    %v4066 = vadd.f32 %v4038, %v4065
    %v4067 = vpop.f32.mrf.mxu0
    %v4068 = vadd.f32 %v4040, %v4067
    %4069 = vmatmul.bf16.gmra.mxu0 %v3081
    %v4070 = vpop.f32.mrf.mxu0
    %v4071 = vadd.f32 %v4043, %v4070
    %v4072 = vpop.f32.mrf.mxu0
    %4073 = vdwg.mxu0
    %4074 = vmatpush.bf16.msra.mxu0 %v3513
    %4075 = vmatpush.bf16.msra.mxu0 %v3509
    %4076 = vmatpush.bf16.msra.mxu0 %v3505
    %4077 = vmatpush.bf16.msra.mxu0 %v3501
    %4078 = vmatpush.bf16.msra.mxu0 %v3497
    %4079 = vmatpush.bf16.msra.mxu0 %v3493
    %4080 = vmatpush.bf16.msra.mxu0 %v3489
    %4081 = vmatpush.bf16.msra.mxu0 %v3485
    %4082 = vmatmul.bf16.gmra.mxu0 %v3066
    %v4083 = vpop.f32.mrf.mxu0
    %v4084 = vadd.f32 0.0, %v4083
    %v4085 = vpop.f32.mrf.mxu0
    %v4086 = vadd.f32 0.0, %v4085
    %4087 = vmatmul.bf16.gmra.mxu0 %v3070
    %v4088 = vpop.f32.mrf.mxu0
    %v4089 = vadd.f32 0.0, %v4088
    %v4090 = vpop.f32.mrf.mxu0
    %v4091 = vadd.f32 0.0, %v4090
    %4092 = vmatmul.bf16.gmra.mxu0 %v3074
    %v4093 = vpop.f32.mrf.mxu0
    %v4094 = vadd.f32 0.0, %v4093
    %v4095 = vpop.f32.mrf.mxu0
    %v4096 = vadd.f32 0.0, %v4095
    %4097 = vmatmul.bf16.gmra.mxu0 %v3078
    %v4098 = vpop.f32.mrf.mxu0
    %v4099 = vadd.f32 0.0, %v4098
    %v4100 = vpop.f32.mrf.mxu0
    %4101 = vdwg.mxu0
    %4102 = vmatpush.bf16.msra.mxu0 %v3545
    %4103 = vmatpush.bf16.msra.mxu0 %v3541
    %4104 = vmatpush.bf16.msra.mxu0 %v3537
    %4105 = vmatpush.bf16.msra.mxu0 %v3533
    %4106 = vmatpush.bf16.msra.mxu0 %v3529
    %4107 = vmatpush.bf16.msra.mxu0 %v3525
    %4108 = vmatpush.bf16.msra.mxu0 %v3521
    %4109 = vmatpush.bf16.msra.mxu0 %v3517
    %4110 = vmatmul.bf16.gmra.mxu0 %v3067
    %v4111 = vpop.f32.mrf.mxu0
    %v4112 = vadd.f32 %v4084, %v4111
    %v4113 = vpop.f32.mrf.mxu0
    %v4114 = vadd.f32 %v4086, %v4113
    %4115 = vmatmul.bf16.gmra.mxu0 %v3071
    %v4116 = vpop.f32.mrf.mxu0
    %v4117 = vadd.f32 %v4089, %v4116
    %v4118 = vpop.f32.mrf.mxu0
    %v4119 = vadd.f32 %v4091, %v4118
    %4120 = vmatmul.bf16.gmra.mxu0 %v3075
    %v4121 = vpop.f32.mrf.mxu0
    %v4122 = vadd.f32 %v4094, %v4121
    %v4123 = vpop.f32.mrf.mxu0
    %v4124 = vadd.f32 %v4096, %v4123
    %4125 = vmatmul.bf16.gmra.mxu0 %v3079
    %v4126 = vpop.f32.mrf.mxu0
    %v4127 = vadd.f32 %v4099, %v4126
    %v4128 = vpop.f32.mrf.mxu0
    %4129 = vdwg.mxu0
    %4130 = vmatpush.bf16.msra.mxu0 %v3577
    %4131 = vmatpush.bf16.msra.mxu0 %v3573
    %4132 = vmatpush.bf16.msra.mxu0 %v3569
    %4133 = vmatpush.bf16.msra.mxu0 %v3565
    %4134 = vmatpush.bf16.msra.mxu0 %v3561
    %4135 = vmatpush.bf16.msra.mxu0 %v3557
    %4136 = vmatpush.bf16.msra.mxu0 %v3553
    %4137 = vmatpush.bf16.msra.mxu0 %v3549
    %4138 = vmatmul.bf16.gmra.mxu0 %v3068
    %v4139 = vpop.f32.mrf.mxu0
    %v4140 = vadd.f32 %v4112, %v4139
    %v4141 = vpop.f32.mrf.mxu0
    %v4142 = vadd.f32 %v4114, %v4141
    %4143 = vmatmul.bf16.gmra.mxu0 %v3072
    %v4144 = vpop.f32.mrf.mxu0
    %v4145 = vadd.f32 %v4117, %v4144
    %v4146 = vpop.f32.mrf.mxu0
    %v4147 = vadd.f32 %v4119, %v4146
    %4148 = vmatmul.bf16.gmra.mxu0 %v3076
    %v4149 = vpop.f32.mrf.mxu0
    %v4150 = vadd.f32 %v4122, %v4149
    %v4151 = vpop.f32.mrf.mxu0
    %v4152 = vadd.f32 %v4124, %v4151
    %4153 = vmatmul.bf16.gmra.mxu0 %v3080
    %v4154 = vpop.f32.mrf.mxu0
    %v4155 = vadd.f32 %v4127, %v4154
    %v4156 = vpop.f32.mrf.mxu0
    %4157 = vdwg.mxu0
    %4158 = vmatpush.bf16.msra.mxu0 %v3609
    %4159 = vmatpush.bf16.msra.mxu0 %v3605
    %4160 = vmatpush.bf16.msra.mxu0 %v3601
    %4161 = vmatpush.bf16.msra.mxu0 %v3597
    %4162 = vmatpush.bf16.msra.mxu0 %v3593
    %4163 = vmatpush.bf16.msra.mxu0 %v3589
    %4164 = vmatpush.bf16.msra.mxu0 %v3585
    %4165 = vmatpush.bf16.msra.mxu0 %v3581
    %4166 = vmatmul.bf16.gmra.mxu0 %v3069
    %v4167 = vpop.f32.mrf.mxu0
    %v4168 = vadd.f32 %v4140, %v4167
    %v4169 = vpop.f32.mrf.mxu0
    %v4170 = vadd.f32 %v4142, %v4169
    %4171 = vmatmul.bf16.gmra.mxu0 %v3073
    %v4172 = vpop.f32.mrf.mxu0
    %v4173 = vadd.f32 %v4145, %v4172
    %v4174 = vpop.f32.mrf.mxu0
    %v4175 = vadd.f32 %v4147, %v4174
    %4176 = vmatmul.bf16.gmra.mxu0 %v3077
    %v4177 = vpop.f32.mrf.mxu0
    %v4178 = vadd.f32 %v4150, %v4177
    %v4179 = vpop.f32.mrf.mxu0
    %v4180 = vadd.f32 %v4152, %v4179
    %4181 = vmatmul.bf16.gmra.mxu0 %v3081
    %v4182 = vpop.f32.mrf.mxu0
    %v4183 = vadd.f32 %v4155, %v4182
    %v4184 = vpop.f32.mrf.mxu0
    %4185 = vdwg.mxu0
    %v4186 = vadd.f32 %v2483, %v3832
    %v4187 = vadd.f32 %v2595, %v3944
    %v4188 = vadd.f32 %v2707, %v4056
    %v4189 = vadd.f32 %v2819, %v4168
    %v4190 = vadd.f32 %v2485, %v3834
    %v4191 = vadd.f32 %v2597, %v3946
    %v4192 = vadd.f32 %v2709, %v4058
    %v4193 = vadd.f32 %v2821, %v4170
    %v4194 = vadd.f32 %v2488, %v3837
    %v4195 = vadd.f32 %v2600, %v3949
    %v4196 = vadd.f32 %v2712, %v4061
    %v4197 = vadd.f32 %v2824, %v4173
    %v4198 = vadd.f32 %v2490, %v3839
    %v4199 = vadd.f32 %v2602, %v3951
    %v4200 = vadd.f32 %v2714, %v4063
    %v4201 = vadd.f32 %v2826, %v4175
    %v4202 = vadd.f32 %v2493, %v3842
    %v4203 = vadd.f32 %v2605, %v3954
    %v4204 = vadd.f32 %v2717, %v4066
    %v4205 = vadd.f32 %v2829, %v4178
    %v4206 = vadd.f32 %v2495, %v3844
    %v4207 = vadd.f32 %v2607, %v3956
    %v4208 = vadd.f32 %v2719, %v4068
    %v4209 = vadd.f32 %v2831, %v4180
    %v4210 = vadd.f32 %v2498, %v3847
    %v4211 = vadd.f32 %v2610, %v3959
    %v4212 = vadd.f32 %v2722, %v4071
    %v4213 = vadd.f32 %v2834, %v4183
    %v4214 = vld [vmem:[#allocation4] ss:$2 sm:$0xf]
    %s4215 = scalar_lea.vmem [#allocation4], 1
    %v4216 = vld [vmem:[%s4215] ss:$2 sm:$0xf]
    %v4218 = vperm.slane %v4214, 0
    %v4219 = vperm.slane %v4214, 1
    %v4220 = vperm.slane %v4214, 2
    %v4221 = vperm.slane %v4214, 3
    %v4226 = vmul.f32 %v4210, %v4218
    %v4227 = vmul.f32 %v4211, %v4219
    %v4228 = vmul.f32 %v4212, %v4220
    %v4229 = vmul.f32 %v4213, %v4221
    %v4231 = vperm.slane %v4216, 0
    %v4232 = vperm.slane %v4216, 1
    %v4233 = vperm.slane %v4216, 2
    %v4234 = vperm.slane %v4216, 3
    %v4239 = vmul.f32 %v4206, %v4231
    %v4240 = vmul.f32 %v4207, %v4232
    %v4241 = vmul.f32 %v4208, %v4233
    %v4242 = vmul.f32 %v4209, %v4234
    %v4243 = vadd.f32 %v4226, %v4239
    %v4244 = vadd.f32 %v4227, %v4240
    %v4245 = vadd.f32 %v4228, %v4241
    %v4246 = vadd.f32 %v4229, %v4242
    %v4247 = vpack.c.bf16 %v4244, %v4243
    %v4248 = vpack.c.bf16 %v4246, %v4245
    %4249 = vst [vmem:[%s3] sm:$0xff] %v4247
    %4250 = vst [vmem:[%s3 + $0x8] sm:$0xff] %v4248
    %v4251 = vmul.f32 %v4186, %v4218
    %v4252 = vmul.f32 %v4187, %v4219
    %v4253 = vmul.f32 %v4188, %v4220
    %v4254 = vmul.f32 %v4189, %v4221
    %v4255 = vmul.f32 %v4210, %v4231
    %v4256 = vmul.f32 %v4211, %v4232
    %v4257 = vmul.f32 %v4212, %v4233
    %v4258 = vmul.f32 %v4213, %v4234
    %v4259 = vadd.f32 %v4251, %v4255
    %v4260 = vadd.f32 %v4252, %v4256
    %v4261 = vadd.f32 %v4253, %v4257
    %v4262 = vadd.f32 %v4254, %v4258
    %v4263 = vpack.c.bf16 %v4260, %v4259
    %v4264 = vpack.c.bf16 %v4262, %v4261
    %4265 = vst [vmem:[%s3 + $0x10] sm:$0xff] %v4263
    %4266 = vst [vmem:[%s3 + $0x18] sm:$0xff] %v4264
    %v4267 = vmul.f32 %v4190, %v4218
    %v4268 = vmul.f32 %v4191, %v4219
    %v4269 = vmul.f32 %v4192, %v4220
    %v4270 = vmul.f32 %v4193, %v4221
    %v4271 = vmul.f32 %v4186, %v4231
    %v4272 = vmul.f32 %v4187, %v4232
    %v4273 = vmul.f32 %v4188, %v4233
    %v4274 = vmul.f32 %v4189, %v4234
    %v4275 = vadd.f32 %v4267, %v4271
    %v4276 = vadd.f32 %v4268, %v4272
    %v4277 = vadd.f32 %v4269, %v4273
    %v4278 = vadd.f32 %v4270, %v4274
    %v4279 = vpack.c.bf16 %v4276, %v4275
    %v4280 = vpack.c.bf16 %v4278, %v4277
    %4281 = vst [vmem:[%s3 + $0x20] sm:$0xff] %v4279
    %4282 = vst [vmem:[%s3 + $0x28] sm:$0xff] %v4280
    %v4283 = vmul.f32 %v4194, %v4218
    %v4284 = vmul.f32 %v4195, %v4219
    %v4285 = vmul.f32 %v4196, %v4220
    %v4286 = vmul.f32 %v4197, %v4221
    %v4287 = vmul.f32 %v4190, %v4231
    %v4288 = vmul.f32 %v4191, %v4232
    %v4289 = vmul.f32 %v4192, %v4233
    %v4290 = vmul.f32 %v4193, %v4234
    %v4291 = vadd.f32 %v4283, %v4287
    %v4292 = vadd.f32 %v4284, %v4288
    %v4293 = vadd.f32 %v4285, %v4289
    %v4294 = vadd.f32 %v4286, %v4290
    %v4295 = vpack.c.bf16 %v4292, %v4291
    %v4296 = vpack.c.bf16 %v4294, %v4293
    %4297 = vst [vmem:[%s3 + $0x30] sm:$0xff] %v4295
    %4298 = vst [vmem:[%s3 + $0x38] sm:$0xff] %v4296
    %v4299 = vmul.f32 %v4198, %v4218
    %v4300 = vmul.f32 %v4199, %v4219
    %v4301 = vmul.f32 %v4200, %v4220
    %v4302 = vmul.f32 %v4201, %v4221
    %v4303 = vmul.f32 %v4194, %v4231
    %v4304 = vmul.f32 %v4195, %v4232
    %v4305 = vmul.f32 %v4196, %v4233
    %v4306 = vmul.f32 %v4197, %v4234
    %v4307 = vadd.f32 %v4299, %v4303
    %v4308 = vadd.f32 %v4300, %v4304
    %v4309 = vadd.f32 %v4301, %v4305
    %v4310 = vadd.f32 %v4302, %v4306
    %v4311 = vpack.c.bf16 %v4308, %v4307
    %v4312 = vpack.c.bf16 %v4310, %v4309
    %4313 = vst [vmem:[%s3 + $0x40] sm:$0xff] %v4311
    %4314 = vst [vmem:[%s3 + $0x48] sm:$0xff] %v4312
    %v4315 = vmul.f32 %v4202, %v4218
    %v4316 = vmul.f32 %v4203, %v4219
    %v4317 = vmul.f32 %v4204, %v4220
    %v4318 = vmul.f32 %v4205, %v4221
    %v4319 = vmul.f32 %v4198, %v4231
    %v4320 = vmul.f32 %v4199, %v4232
    %v4321 = vmul.f32 %v4200, %v4233
    %v4322 = vmul.f32 %v4201, %v4234
    %v4323 = vadd.f32 %v4315, %v4319
    %v4324 = vadd.f32 %v4316, %v4320
    %v4325 = vadd.f32 %v4317, %v4321
    %v4326 = vadd.f32 %v4318, %v4322
    %v4327 = vpack.c.bf16 %v4324, %v4323
    %v4328 = vpack.c.bf16 %v4326, %v4325
    %4329 = vst [vmem:[%s3 + $0x50] sm:$0xff] %v4327
    %4330 = vst [vmem:[%s3 + $0x58] sm:$0xff] %v4328
    %v4331 = vmul.f32 %v4206, %v4218
    %v4332 = vmul.f32 %v4207, %v4219
    %v4333 = vmul.f32 %v4208, %v4220
    %v4334 = vmul.f32 %v4209, %v4221
    %v4335 = vmul.f32 %v4202, %v4231
    %v4336 = vmul.f32 %v4203, %v4232
    %v4337 = vmul.f32 %v4204, %v4233
    %v4338 = vmul.f32 %v4205, %v4234
    %v4339 = vadd.f32 %v4331, %v4335
    %v4340 = vadd.f32 %v4332, %v4336
    %v4341 = vadd.f32 %v4333, %v4337
    %v4342 = vadd.f32 %v4334, %v4338
    %v4343 = vpack.c.bf16 %v4340, %v4339
    %v4344 = vpack.c.bf16 %v4342, %v4341
    %4345 = vst [vmem:[%s3 + $0x60] sm:$0xff] %v4343
    %4346 = vst [vmem:[%s3 + $0x68] sm:$0xff] %v4344
    // Predicated region
    $region22: #{forward.1} parent=1 // pred_check
      _
    $region23: #{forward.1} parent=1 // pred_check_branch
      %4348 = sbr.rel (0) target = $region25
    $region24: #{forward.1} parent=1 // pred_region
      _
    $region25: #{forward.1} parent=1 // pred_fallthru
      _
    // Predicated region
    $region26: #{forward.1} parent=1 // pred_check
      _
    $region27: #{forward.1} parent=1 // pred_check_branch
      %4350 = sbr.rel (0) target = $region29
    $region28: #{forward.1} parent=1 // pred_region
      _
    $region29: #{forward.1} parent=1 // pred_fallthru
      _
    %4351 = vsyncpa [#allocation3], 1
    %4352 = vsyncpa [#allocation5], 1

</llo_original>
